<compile_context>
chip_gen: v7x
topology: tpu7x:2x2x1
jax: 0.10.0
libtpu: 0.0.40
codegen_flags: <defaults>
</compile_context>

<pallas_src>
import math
from functools import partial

import jax
import jax.numpy as jnp
from jax.experimental import pallas as pl
from jax.experimental.pallas import tpu as pltpu

_VMEM = pl.BlockSpec(memory_space=pltpu.MemorySpace.VMEM)


# ------------------------------ fused kernel --------------------------------

def _convlstm_kernel(patches_ref, stem_w_ref, stem_b_ref, bng_ref, bnb_ref,
                     w11_ref, w12_ref, w21_ref, w22_ref,
                     wfold_ref, gbias_ref, whh_ref, fw_ref, fb_ref, o_ref,
                     *, eps, hidden, time_steps, batch, conv_len, hidden_ch):
    f32 = jnp.float32
    H, T, B, Lc, HC = hidden, time_steps, batch, conv_len, hidden_ch
    NS = T * B                      # rows per conv-position block (samples)
    count = float(Lc * NS)          # BN sample count (= N*L in torch terms)

    # ---------------- SubConvNet on per-position blocks (NS, HC) ------------
    def bn_relu(blocks, gamma, beta):
        # Training-mode BatchNorm1d: per-channel stats over all N*L samples.
        mean = sum(jnp.sum(b, axis=0, keepdims=True) for b in blocks) / count
        cent = [b - mean for b in blocks]
        var = sum(jnp.sum(c * c, axis=0, keepdims=True) for c in cent) / count
        scale = jax.lax.rsqrt(var + eps) * gamma
        return [jnp.maximum(c * scale + beta, 0.0) for c in cent]

    def conv3(blocks, w_ref):
        # Conv1d(k=3, pad=1) along the position axis.  Neighbouring positions
        # are whole blocks, so each output block is a lane-concat of up to 3
        # input blocks matmul'd against the matching rows of the (3*HC, HC)
        # weight (K=192 interior, K=128 at the zero-padded edges).
        out = []
        for l in range(Lc):
            lo, hi = max(0, l - 1), min(Lc - 1, l + 1)
            xcat = jnp.concatenate(blocks[lo:hi + 1], axis=1)
            k0, k1 = lo - (l - 1), hi - (l - 1) + 1          # taps [k0, k1)
            w = w_ref[k0 * HC:k1 * HC, :]
            out.append(jnp.dot(xcat, w, preferred_element_type=f32))
        return out

    def resblock(blocks, g1, b1, wa_ref, g2, b2, wb_ref):
        y = conv3(bn_relu(blocks, g1, b1), wa_ref)
        y = conv3(bn_relu(y, g2, b2), wb_ref)
        return [a + r for a, r in zip(y, blocks)]               # residual add

    bng = bng_ref[...]
    bnb = bnb_ref[...]
    stem_w = stem_w_ref[...]
    stem_b = stem_b_ref[...]

    # Stem Conv1d(k=4, stride=2) as per-block im2col matmul.
    blocks = [jnp.dot(patches_ref[l], stem_w, preferred_element_type=f32)
              + stem_b for l in range(Lc)]
    blocks = resblock(blocks, bng[0:1], bnb[0:1], w11_ref,
                      bng[1:2], bnb[1:2], w12_ref)
    blocks = resblock(blocks, bng[2:3], bnb[2:3], w21_ref,
                      bng[3:4], bnb[3:4], w22_ref)

    # conb (1x1 conv) + channel-major flatten + LSTM input projection are all
    # folded into one lane-dense matmul; conb/LSTM biases folded into gbias.
    feat = jnp.concatenate(blocks, axis=1)                       # (NS, Lc*HC)
    zx = jnp.dot(feat, wfold_ref[...], preferred_element_type=f32) + gbias_ref[...]

    # ---------------- LSTM recurrence (x @ W_ih already hoisted) ------------
    whh = whh_ref[...]
    lane = jax.lax.broadcasted_iota(jnp.int32, (1, 4 * H), 1)
    g_sel = (lane >= 2 * H) & (lane < 3 * H)                     # tanh-gate lanes

    h = jnp.zeros((B, H), f32)
    c = jnp.zeros((B, H), f32)
    for t in range(T):   # static T=10 -> unrolled.
        # TODO(synk): switch to lax.fori_loop(..., unroll=k) once T grows >~16.
        z = zx[t * B:(t + 1) * B, :] + jnp.dot(h, whh, preferred_element_type=f32)
        # Full-width activations on the (B, 4H)=(B,128) vreg; sigmoid via the
        # overflow-safe tanh identity (EUP path).
        act = jnp.where(g_sel, jnp.tanh(z), 0.5 * (jnp.tanh(0.5 * z) + 1.0))
        i_g = act[:, 0 * H:1 * H]
        f_g = act[:, 1 * H:2 * H]
        g_g = act[:, 2 * H:3 * H]
        o_g = act[:, 3 * H:4 * H]
        c = f_g * c + i_g * g_g
        h = o_g * jnp.tanh(c)

    # ---------------- fn Linear + softmax ------------------------------------
    logits = jnp.dot(h, fw_ref[...], preferred_element_type=f32) + fb_ref[...]
    e = jnp.exp(logits - jnp.max(logits, axis=-1, keepdims=True))
    o_ref[...] = e * pl.reciprocal(jnp.sum(e, axis=-1, keepdims=True), approx=True)


# ------------------------------ kernel wrapper -------------------------------

def conv_lstm_forward(params, x, cfg):
    B, Cin, L = x.shape
    T = cfg["time_lens"]
    W = L // T
    H = cfg["hidden_size"]
    HC = cfg["hidden_channel"]
    O = cfg["output_size"]
    Lc = (W - 4) // 2 + 1           # stem conv output length (k=4, stride=2)
    NS = T * B

    # torch: chunk(T, dim=2) -> stack(dim=1) -> view(B*T, Cin, W); here laid
    # out channels-last, samples ordered (t, b), conv positions as leading
    # blocks so every in-kernel operand is a clean 2D slab.
    xw = x.reshape(B, Cin, T, W).transpose(2, 0, 3, 1)            # (T, B, W, Cin)
    cols = [xw[:, :, j:j + 2 * (Lc - 1) + 1:2, :] for j in range(4)]
    patches = jnp.stack(cols, axis=-2)                            # (T, B, Lc, 4, Cin)
    patches = patches.transpose(2, 0, 1, 3, 4).reshape(Lc, NS, 4 * Cin)

    p = params
    kernel = partial(_convlstm_kernel, eps=1e-5, hidden=H, time_steps=T,
                     batch=B, conv_len=Lc, hidden_ch=HC)
    return pl.pallas_call(
        kernel,
        out_shape=jax.ShapeDtypeStruct((B, O), jnp.float32),
        in_specs=[_VMEM] * 14,
        out_specs=_VMEM,
    )(patches, p["conv1_m"], p["conv1_b"], p["bn_g"], p["bn_b"],
      p["b1_w1"], p["b1_w2"], p["b2_w1"], p["b2_w2"],
      p["w_fold"], p["gate_bias"], p["whh"], p["fn_w"], p["fn_b"])


# ----------------------------- parameter creation ----------------------------

def _uniform(key, shape, bound):
    return jax.random.uniform(key, shape, jnp.float32, -bound, bound)


def init_params(key, cfg):
    Cin = cfg["in_channel"]
    HC = cfg["hidden_channel"]
    W = cfg["sequence_lens"] // cfg["time_lens"]
    Lc = (W - 4) // 2 + 1
    I = 4 * Lc                     # SubConvNet flattened feature size
    H = cfg["hidden_size"]
    O = cfg["output_size"]

    keys = iter(jax.random.split(key, 16))

    # Stem conv: Conv1d(Cin, HC, kernel=4, stride=2), with bias.
    b0 = 1.0 / math.sqrt(Cin * 4)
    w_stem = _uniform(next(keys), (HC, Cin, 4), b0)
    b_stem = _uniform(next(keys), (HC,), b0)
    conv1_m = jnp.transpose(w_stem, (2, 1, 0)).reshape(4 * Cin, HC)  # [j*Cin+cin, h]
    conv1_b = b_stem.reshape(1, HC)

    # Residual-block convs: Conv1d(HC, HC, 3, padding=1, bias=False).
    br = 1.0 / math.sqrt(HC * 3)

    def res_w(k):
        w = _uniform(k, (HC, HC, 3), br)
        return jnp.transpose(w, (2, 1, 0)).reshape(3 * HC, HC)       # [tap*HC+cin, cout]

    b1_w1, b1_w2 = res_w(next(keys)), res_w(next(keys))
    b2_w1, b2_w2 = res_w(next(keys)), res_w(next(keys))

    bn_g = jnp.ones((4, HC), jnp.float32)      # [b1.bn1, b1.bn2, b2.bn1, b2.bn2]
    bn_b = jnp.zeros((4, HC), jnp.float32)

    # conb: Conv1d(HC, 4, kernel=1), with bias.
    bc = 1.0 / math.sqrt(HC)
    conb_w = _uniform(next(keys), (4, HC), bc)            # [c, h]
    conb_b = _uniform(next(keys), (4,), bc)

    # LSTM (PyTorch layout: weight_ih (4H, I), gate rows [i; f; g; o]).
    bl = 1.0 / math.sqrt(H)
    wih = _uniform(next(keys), (4 * H, I), bl)
    whh = _uniform(next(keys), (4 * H, H), bl)
    bih = _uniform(next(keys), (4 * H,), bl)
    bhh = _uniform(next(keys), (4 * H,), bl)

    # Fold conb + the channel-major .view(batch,-1) flatten (feature index
    # c*Lc + l) + the LSTM input projection into one (Lc*HC, 4H) matrix and
    # a folded gate bias: W_fold[l*HC+h, g] = sum_c conb_w[c,h] * wih[g, c*Lc+l].
    wih_clg = wih.reshape(4 * H, 4, Lc).transpose(1, 2, 0)           # (c, l, 4H)
    w_fold = jnp.einsum("ch,clg->lhg", conb_w, wih_clg).reshape(Lc * HC, 4 * H)
    gate_bias = (bih + bhh + jnp.einsum("c,clg->g", conb_b, wih_clg)).reshape(1, 4 * H)

    # fn: Linear(H, O).
    bf = 1.0 / math.sqrt(H)
    fn_w = _uniform(next(keys), (O, H), bf).T
    fn_b = _uniform(next(keys), (O,), bf).reshape(1, O)

    return {
        "conv1_m": conv1_m, "conv1_b": conv1_b,
        "bn_g": bn_g, "bn_b": bn_b,
        "b1_w1": b1_w1, "b1_w2": b1_w2, "b2_w1": b2_w1, "b2_w2": b2_w2,
        "w_fold": w_fold, "gate_bias": gate_bias, "whh": whh.T,
        "fn_w": fn_w, "fn_b": fn_b,
    }


if __name__ == "__main__":
    cfg = dict(
        batch=2, in_channel=3,
        sequence_lens=80, time_lens=10,      # window = 8 -> stem-conv out len 3
        hidden_channel=64,                   # SubConvNet default hidden_channel
        hidden_size=32,                      # small LSTM hidden -> 4H = 128 lanes
        output_size=2,
    )
    key = jax.random.PRNGKey(0)
    pkey, xkey = jax.random.split(key)
    params = init_params(pkey, cfg)
    x = jax.random.normal(
        xkey, (cfg["batch"], cfg["in_channel"], cfg["sequence_lens"]), jnp.float32)

    fwd = jax.jit(partial(conv_lstm_forward, cfg=cfg))
    probs = fwd(params, x)
    jax.block_until_ready(probs)

    assert probs.shape == (cfg["batch"], cfg["output_size"])
    assert bool(jnp.all(jnp.isfinite(probs)))
    # approx reciprocal in the softmax denom trades a few e-4 of relative
    # accuracy for the EUP fast path -> loose tolerance on the sum check.
    assert bool(jnp.all(jnp.abs(jnp.sum(probs, axis=-1) - 1.0) < 5e-3))
    print("KERNEL_OK")
</pallas_src>

<mosaic_0001>
module attributes {stable_mosaic.version = 11 : i64} {
  func.func @_convlstm_kernel(%arg0: memref<3x20x12xf32, #tpu.memory_space<vmem>>, %arg1: memref<12x64xf32, #tpu.memory_space<vmem>>, %arg2: memref<1x64xf32, #tpu.memory_space<vmem>>, %arg3: memref<4x64xf32, #tpu.memory_space<vmem>>, %arg4: memref<4x64xf32, #tpu.memory_space<vmem>>, %arg5: memref<192x64xf32, #tpu.memory_space<vmem>>, %arg6: memref<192x64xf32, #tpu.memory_space<vmem>>, %arg7: memref<192x64xf32, #tpu.memory_space<vmem>>, %arg8: memref<192x64xf32, #tpu.memory_space<vmem>>, %arg9: memref<192x128xf32, #tpu.memory_space<vmem>>, %arg10: memref<1x128xf32, #tpu.memory_space<vmem>>, %arg11: memref<32x128xf32, #tpu.memory_space<vmem>>, %arg12: memref<32x2xf32, #tpu.memory_space<vmem>>, %arg13: memref<1x2xf32, #tpu.memory_space<vmem>>, %arg14: memref<2x2xf32, #tpu.memory_space<vmem>>) attributes {dimension_semantics = [], scalar_prefetch = 0 : i64, scratch_operands = 0 : i64, tpu.core_type = #tpu.core_type<tc>} {
    %c0 = arith.constant 0 : index
    %c0_0 = arith.constant 0 : index
    %0 = vector.load %arg3[%c0, %c0_0] : memref<4x64xf32, #tpu.memory_space<vmem>>, vector<4x64xf32>
    %c0_1 = arith.constant 0 : index
    %c0_2 = arith.constant 0 : index
    %1 = vector.load %arg4[%c0_1, %c0_2] : memref<4x64xf32, #tpu.memory_space<vmem>>, vector<4x64xf32>
    %c0_3 = arith.constant 0 : index
    %c0_4 = arith.constant 0 : index
    %2 = vector.load %arg1[%c0_3, %c0_4] : memref<12x64xf32, #tpu.memory_space<vmem>>, vector<12x64xf32>
    %c0_5 = arith.constant 0 : index
    %c0_6 = arith.constant 0 : index
    %3 = vector.load %arg2[%c0_5, %c0_6] : memref<1x64xf32, #tpu.memory_space<vmem>>, vector<1x64xf32>
    %c0_7 = arith.constant 0 : index
    %c0_8 = arith.constant 0 : index
    %c0_9 = arith.constant 0 : index
    %4 = vector.load %arg0[%c0_7, %c0_8, %c0_9] : memref<3x20x12xf32, #tpu.memory_space<vmem>>, vector<1x20x12xf32>
    %5 = vector.shape_cast %4 : vector<1x20x12xf32> to vector<20x12xf32>
    %cst = arith.constant dense<0.000000e+00> : vector<20x64xf32>
    %6 = tpu.matmul %5, %2, %cst {dimension_numbers = #tpu.dot_dimension_numbers<[1], [0], [0], [1], [0, 0, 1, 1], [], []>} : vector<20x12xf32>, vector<12x64xf32>, vector<20x64xf32> -> vector<20x64xf32>
    %7 = vector.broadcast %3 : vector<1x64xf32> to vector<20x64xf32>
    %8 = arith.addf %6, %7 : vector<20x64xf32>
    %c1 = arith.constant 1 : index
    %c0_10 = arith.constant 0 : index
    %c0_11 = arith.constant 0 : index
    %9 = vector.load %arg0[%c1, %c0_10, %c0_11] : memref<3x20x12xf32, #tpu.memory_space<vmem>>, vector<1x20x12xf32>
    %10 = vector.shape_cast %9 : vector<1x20x12xf32> to vector<20x12xf32>
    %cst_12 = arith.constant dense<0.000000e+00> : vector<20x64xf32>
    %11 = tpu.matmul %10, %2, %cst_12 {dimension_numbers = #tpu.dot_dimension_numbers<[1], [0], [0], [1], [0, 0, 1, 1], [], []>} : vector<20x12xf32>, vector<12x64xf32>, vector<20x64xf32> -> vector<20x64xf32>
    %12 = vector.broadcast %3 : vector<1x64xf32> to vector<20x64xf32>
    %13 = arith.addf %11, %12 : vector<20x64xf32>
    %c2 = arith.constant 2 : index
    %c0_13 = arith.constant 0 : index
    %c0_14 = arith.constant 0 : index
    %14 = vector.load %arg0[%c2, %c0_13, %c0_14] : memref<3x20x12xf32, #tpu.memory_space<vmem>>, vector<1x20x12xf32>
    %15 = vector.shape_cast %14 : vector<1x20x12xf32> to vector<20x12xf32>
    %cst_15 = arith.constant dense<0.000000e+00> : vector<20x64xf32>
    %16 = tpu.matmul %15, %2, %cst_15 {dimension_numbers = #tpu.dot_dimension_numbers<[1], [0], [0], [1], [0, 0, 1, 1], [], []>} : vector<20x12xf32>, vector<12x64xf32>, vector<20x64xf32> -> vector<20x64xf32>
    %17 = vector.broadcast %3 : vector<1x64xf32> to vector<20x64xf32>
    %18 = arith.addf %16, %17 : vector<20x64xf32>
    %19 = vector.extract_strided_slice %0 {offsets = [0, 0], sizes = [1, 64], strides = [1, 1]} : vector<4x64xf32> to vector<1x64xf32>
    %20 = vector.extract_strided_slice %1 {offsets = [0, 0], sizes = [1, 64], strides = [1, 1]} : vector<4x64xf32> to vector<1x64xf32>
    %21 = vector.extract_strided_slice %0 {offsets = [1, 0], sizes = [1, 64], strides = [1, 1]} : vector<4x64xf32> to vector<1x64xf32>
    %22 = vector.extract_strided_slice %1 {offsets = [1, 0], sizes = [1, 64], strides = [1, 1]} : vector<4x64xf32> to vector<1x64xf32>
    %cst_16 = arith.constant dense<0.000000e+00> : vector<64xf32>
    %23 = vector.multi_reduction <add>, %8, %cst_16 [0] : vector<20x64xf32> to vector<64xf32>
    %24 = vector.shape_cast %23 : vector<64xf32> to vector<1x64xf32>
    %cst_17 = arith.constant 0.000000e+00 : f32
    %25 = vector.broadcast %cst_17 : f32 to vector<1x64xf32>
    %26 = arith.addf %25, %24 : vector<1x64xf32>
    %cst_18 = arith.constant dense<0.000000e+00> : vector<64xf32>
    %27 = vector.multi_reduction <add>, %13, %cst_18 [0] : vector<20x64xf32> to vector<64xf32>
    %28 = vector.shape_cast %27 : vector<64xf32> to vector<1x64xf32>
    %29 = arith.addf %26, %28 : vector<1x64xf32>
    %cst_19 = arith.constant dense<0.000000e+00> : vector<64xf32>
    %30 = vector.multi_reduction <add>, %18, %cst_19 [0] : vector<20x64xf32> to vector<64xf32>
    %31 = vector.shape_cast %30 : vector<64xf32> to vector<1x64xf32>
    %32 = arith.addf %29, %31 : vector<1x64xf32>
    %cst_20 = arith.constant 6.000000e+01 : f32
    %33 = vector.broadcast %cst_20 : f32 to vector<1x64xf32>
    %34 = arith.divf %32, %33 : vector<1x64xf32>
    %35 = vector.broadcast %34 : vector<1x64xf32> to vector<20x64xf32>
    %36 = arith.subf %8, %35 : vector<20x64xf32>
    %37 = vector.broadcast %34 : vector<1x64xf32> to vector<20x64xf32>
    %38 = arith.subf %13, %37 : vector<20x64xf32>
    %39 = vector.broadcast %34 : vector<1x64xf32> to vector<20x64xf32>
    %40 = arith.subf %18, %39 : vector<20x64xf32>
    %41 = arith.mulf %36, %36 : vector<20x64xf32>
    %cst_21 = arith.constant dense<0.000000e+00> : vector<64xf32>
    %42 = vector.multi_reduction <add>, %41, %cst_21 [0] : vector<20x64xf32> to vector<64xf32>
    %43 = vector.shape_cast %42 : vector<64xf32> to vector<1x64xf32>
    %cst_22 = arith.constant 0.000000e+00 : f32
    %44 = vector.broadcast %cst_22 : f32 to vector<1x64xf32>
    %45 = arith.addf %44, %43 : vector<1x64xf32>
    %46 = arith.mulf %38, %38 : vector<20x64xf32>
    %cst_23 = arith.constant dense<0.000000e+00> : vector<64xf32>
    %47 = vector.multi_reduction <add>, %46, %cst_23 [0] : vector<20x64xf32> to vector<64xf32>
    %48 = vector.shape_cast %47 : vector<64xf32> to vector<1x64xf32>
    %49 = arith.addf %45, %48 : vector<1x64xf32>
    %50 = arith.mulf %40, %40 : vector<20x64xf32>
    %cst_24 = arith.constant dense<0.000000e+00> : vector<64xf32>
    %51 = vector.multi_reduction <add>, %50, %cst_24 [0] : vector<20x64xf32> to vector<64xf32>
    %52 = vector.shape_cast %51 : vector<64xf32> to vector<1x64xf32>
    %53 = arith.addf %49, %52 : vector<1x64xf32>
    %cst_25 = arith.constant 6.000000e+01 : f32
    %54 = vector.broadcast %cst_25 : f32 to vector<1x64xf32>
    %55 = arith.divf %53, %54 : vector<1x64xf32>
    %cst_26 = arith.constant 9.99999974E-6 : f32
    %56 = vector.broadcast %cst_26 : f32 to vector<1x64xf32>
    %57 = arith.addf %55, %56 : vector<1x64xf32>
    %58 = math.rsqrt %57 : vector<1x64xf32>
    %59 = arith.mulf %58, %19 : vector<1x64xf32>
    %60 = vector.broadcast %59 : vector<1x64xf32> to vector<20x64xf32>
    %61 = arith.mulf %36, %60 : vector<20x64xf32>
    %62 = vector.broadcast %20 : vector<1x64xf32> to vector<20x64xf32>
    %63 = arith.addf %61, %62 : vector<20x64xf32>
    %cst_27 = arith.constant 0.000000e+00 : f32
    %64 = vector.broadcast %cst_27 : f32 to vector<20x64xf32>
    %65 = arith.maximumf %63, %64 : vector<20x64xf32>
    %66 = vector.broadcast %59 : vector<1x64xf32> to vector<20x64xf32>
    %67 = arith.mulf %38, %66 : vector<20x64xf32>
    %68 = vector.broadcast %20 : vector<1x64xf32> to vector<20x64xf32>
    %69 = arith.addf %67, %68 : vector<20x64xf32>
    %cst_28 = arith.constant 0.000000e+00 : f32
    %70 = vector.broadcast %cst_28 : f32 to vector<20x64xf32>
    %71 = arith.maximumf %69, %70 : vector<20x64xf32>
    %72 = vector.broadcast %59 : vector<1x64xf32> to vector<20x64xf32>
    %73 = arith.mulf %40, %72 : vector<20x64xf32>
    %74 = vector.broadcast %20 : vector<1x64xf32> to vector<20x64xf32>
    %75 = arith.addf %73, %74 : vector<20x64xf32>
    %cst_29 = arith.constant 0.000000e+00 : f32
    %76 = vector.broadcast %cst_29 : f32 to vector<20x64xf32>
    %77 = arith.maximumf %75, %76 : vector<20x64xf32>
    %78 = tpu.concatenate %65, %71 in 1 : vector<20x64xf32>, vector<20x64xf32> -> vector<20x128xf32>
    %c64 = arith.constant 64 : index
    %c0_30 = arith.constant 0 : index
    %79 = vector.load %arg5[%c64, %c0_30] : memref<192x64xf32, #tpu.memory_space<vmem>>, vector<128x64xf32>
    %cst_31 = arith.constant dense<0.000000e+00> : vector<20x64xf32>
    %80 = tpu.matmul %78, %79, %cst_31 {dimension_numbers = #tpu.dot_dimension_numbers<[1], [0], [0], [1], [0, 0, 1, 1], [], []>} : vector<20x128xf32>, vector<128x64xf32>, vector<20x64xf32> -> vector<20x64xf32>
    %81 = tpu.concatenate %65, %71, %77 in 1 : vector<20x64xf32>, vector<20x64xf32>, vector<20x64xf32> -> vector<20x192xf32>
    %c0_32 = arith.constant 0 : index
    %c0_33 = arith.constant 0 : index
    %82 = vector.load %arg5[%c0_32, %c0_33] : memref<192x64xf32, #tpu.memory_space<vmem>>, vector<192x64xf32>
    %cst_34 = arith.constant dense<0.000000e+00> : vector<20x64xf32>
    %83 = tpu.matmul %81, %82, %cst_34 {dimension_numbers = #tpu.dot_dimension_numbers<[1], [0], [0], [1], [0, 0, 1, 1], [], []>} : vector<20x192xf32>, vector<192x64xf32>, vector<20x64xf32> -> vector<20x64xf32>
    %84 = tpu.concatenate %71, %77 in 1 : vector<20x64xf32>, vector<20x64xf32> -> vector<20x128xf32>
    %c0_35 = arith.constant 0 : index
    %c0_36 = arith.constant 0 : index
    %85 = vector.load %arg5[%c0_35, %c0_36] : memref<192x64xf32, #tpu.memory_space<vmem>>, vector<128x64xf32>
    %cst_37 = arith.constant dense<0.000000e+00> : vector<20x64xf32>
    %86 = tpu.matmul %84, %85, %cst_37 {dimension_numbers = #tpu.dot_dimension_numbers<[1], [0], [0], [1], [0, 0, 1, 1], [], []>} : vector<20x128xf32>, vector<128x64xf32>, vector<20x64xf32> -> vector<20x64xf32>
    %cst_38 = arith.constant dense<0.000000e+00> : vector<64xf32>
    %87 = vector.multi_reduction <add>, %80, %cst_38 [0] : vector<20x64xf32> to vector<64xf32>
    %88 = vector.shape_cast %87 : vector<64xf32> to vector<1x64xf32>
    %cst_39 = arith.constant 0.000000e+00 : f32
    %89 = vector.broadcast %cst_39 : f32 to vector<1x64xf32>
    %90 = arith.addf %89, %88 : vector<1x64xf32>
    %cst_40 = arith.constant dense<0.000000e+00> : vector<64xf32>
    %91 = vector.multi_reduction <add>, %83, %cst_40 [0] : vector<20x64xf32> to vector<64xf32>
    %92 = vector.shape_cast %91 : vector<64xf32> to vector<1x64xf32>
    %93 = arith.addf %90, %92 : vector<1x64xf32>
    %cst_41 = arith.constant dense<0.000000e+00> : vector<64xf32>
    %94 = vector.multi_reduction <add>, %86, %cst_41 [0] : vector<20x64xf32> to vector<64xf32>
    %95 = vector.shape_cast %94 : vector<64xf32> to vector<1x64xf32>
    %96 = arith.addf %93, %95 : vector<1x64xf32>
    %cst_42 = arith.constant 6.000000e+01 : f32
    %97 = vector.broadcast %cst_42 : f32 to vector<1x64xf32>
    %98 = arith.divf %96, %97 : vector<1x64xf32>
    %99 = vector.broadcast %98 : vector<1x64xf32> to vector<20x64xf32>
    %100 = arith.subf %80, %99 : vector<20x64xf32>
    %101 = vector.broadcast %98 : vector<1x64xf32> to vector<20x64xf32>
    %102 = arith.subf %83, %101 : vector<20x64xf32>
    %103 = vector.broadcast %98 : vector<1x64xf32> to vector<20x64xf32>
    %104 = arith.subf %86, %103 : vector<20x64xf32>
    %105 = arith.mulf %100, %100 : vector<20x64xf32>
    %cst_43 = arith.constant dense<0.000000e+00> : vector<64xf32>
    %106 = vector.multi_reduction <add>, %105, %cst_43 [0] : vector<20x64xf32> to vector<64xf32>
    %107 = vector.shape_cast %106 : vector<64xf32> to vector<1x64xf32>
    %cst_44 = arith.constant 0.000000e+00 : f32
    %108 = vector.broadcast %cst_44 : f32 to vector<1x64xf32>
    %109 = arith.addf %108, %107 : vector<1x64xf32>
    %110 = arith.mulf %102, %102 : vector<20x64xf32>
    %cst_45 = arith.constant dense<0.000000e+00> : vector<64xf32>
    %111 = vector.multi_reduction <add>, %110, %cst_45 [0] : vector<20x64xf32> to vector<64xf32>
    %112 = vector.shape_cast %111 : vector<64xf32> to vector<1x64xf32>
    %113 = arith.addf %109, %112 : vector<1x64xf32>
    %114 = arith.mulf %104, %104 : vector<20x64xf32>
    %cst_46 = arith.constant dense<0.000000e+00> : vector<64xf32>
    %115 = vector.multi_reduction <add>, %114, %cst_46 [0] : vector<20x64xf32> to vector<64xf32>
    %116 = vector.shape_cast %115 : vector<64xf32> to vector<1x64xf32>
    %117 = arith.addf %113, %116 : vector<1x64xf32>
    %cst_47 = arith.constant 6.000000e+01 : f32
    %118 = vector.broadcast %cst_47 : f32 to vector<1x64xf32>
    %119 = arith.divf %117, %118 : vector<1x64xf32>
    %cst_48 = arith.constant 9.99999974E-6 : f32
    %120 = vector.broadcast %cst_48 : f32 to vector<1x64xf32>
    %121 = arith.addf %119, %120 : vector<1x64xf32>
    %122 = math.rsqrt %121 : vector<1x64xf32>
    %123 = arith.mulf %122, %21 : vector<1x64xf32>
    %124 = vector.broadcast %123 : vector<1x64xf32> to vector<20x64xf32>
    %125 = arith.mulf %100, %124 : vector<20x64xf32>
    %126 = vector.broadcast %22 : vector<1x64xf32> to vector<20x64xf32>
    %127 = arith.addf %125, %126 : vector<20x64xf32>
    %cst_49 = arith.constant 0.000000e+00 : f32
    %128 = vector.broadcast %cst_49 : f32 to vector<20x64xf32>
    %129 = arith.maximumf %127, %128 : vector<20x64xf32>
    %130 = vector.broadcast %123 : vector<1x64xf32> to vector<20x64xf32>
    %131 = arith.mulf %102, %130 : vector<20x64xf32>
    %132 = vector.broadcast %22 : vector<1x64xf32> to vector<20x64xf32>
    %133 = arith.addf %131, %132 : vector<20x64xf32>
    %cst_50 = arith.constant 0.000000e+00 : f32
    %134 = vector.broadcast %cst_50 : f32 to vector<20x64xf32>
    %135 = arith.maximumf %133, %134 : vector<20x64xf32>
    %136 = vector.broadcast %123 : vector<1x64xf32> to vector<20x64xf32>
    %137 = arith.mulf %104, %136 : vector<20x64xf32>
    %138 = vector.broadcast %22 : vector<1x64xf32> to vector<20x64xf32>
    %139 = arith.addf %137, %138 : vector<20x64xf32>
    %cst_51 = arith.constant 0.000000e+00 : f32
    %140 = vector.broadcast %cst_51 : f32 to vector<20x64xf32>
    %141 = arith.maximumf %139, %140 : vector<20x64xf32>
    %142 = tpu.concatenate %129, %135 in 1 : vector<20x64xf32>, vector<20x64xf32> -> vector<20x128xf32>
    %c64_52 = arith.constant 64 : index
    %c0_53 = arith.constant 0 : index
    %143 = vector.load %arg6[%c64_52, %c0_53] : memref<192x64xf32, #tpu.memory_space<vmem>>, vector<128x64xf32>
    %cst_54 = arith.constant dense<0.000000e+00> : vector<20x64xf32>
    %144 = tpu.matmul %142, %143, %cst_54 {dimension_numbers = #tpu.dot_dimension_numbers<[1], [0], [0], [1], [0, 0, 1, 1], [], []>} : vector<20x128xf32>, vector<128x64xf32>, vector<20x64xf32> -> vector<20x64xf32>
    %145 = tpu.concatenate %129, %135, %141 in 1 : vector<20x64xf32>, vector<20x64xf32>, vector<20x64xf32> -> vector<20x192xf32>
    %c0_55 = arith.constant 0 : index
    %c0_56 = arith.constant 0 : index
    %146 = vector.load %arg6[%c0_55, %c0_56] : memref<192x64xf32, #tpu.memory_space<vmem>>, vector<192x64xf32>
    %cst_57 = arith.constant dense<0.000000e+00> : vector<20x64xf32>
    %147 = tpu.matmul %145, %146, %cst_57 {dimension_numbers = #tpu.dot_dimension_numbers<[1], [0], [0], [1], [0, 0, 1, 1], [], []>} : vector<20x192xf32>, vector<192x64xf32>, vector<20x64xf32> -> vector<20x64xf32>
    %148 = tpu.concatenate %135, %141 in 1 : vector<20x64xf32>, vector<20x64xf32> -> vector<20x128xf32>
    %c0_58 = arith.constant 0 : index
    %c0_59 = arith.constant 0 : index
    %149 = vector.load %arg6[%c0_58, %c0_59] : memref<192x64xf32, #tpu.memory_space<vmem>>, vector<128x64xf32>
    %cst_60 = arith.constant dense<0.000000e+00> : vector<20x64xf32>
    %150 = tpu.matmul %148, %149, %cst_60 {dimension_numbers = #tpu.dot_dimension_numbers<[1], [0], [0], [1], [0, 0, 1, 1], [], []>} : vector<20x128xf32>, vector<128x64xf32>, vector<20x64xf32> -> vector<20x64xf32>
    %151 = arith.addf %144, %8 : vector<20x64xf32>
    %152 = arith.addf %147, %13 : vector<20x64xf32>
    %153 = arith.addf %150, %18 : vector<20x64xf32>
    %154 = vector.extract_strided_slice %0 {offsets = [2, 0], sizes = [1, 64], strides = [1, 1]} : vector<4x64xf32> to vector<1x64xf32>
    %155 = vector.extract_strided_slice %1 {offsets = [2, 0], sizes = [1, 64], strides = [1, 1]} : vector<4x64xf32> to vector<1x64xf32>
    %156 = vector.extract_strided_slice %0 {offsets = [3, 0], sizes = [1, 64], strides = [1, 1]} : vector<4x64xf32> to vector<1x64xf32>
    %157 = vector.extract_strided_slice %1 {offsets = [3, 0], sizes = [1, 64], strides = [1, 1]} : vector<4x64xf32> to vector<1x64xf32>
    %cst_61 = arith.constant dense<0.000000e+00> : vector<64xf32>
    %158 = vector.multi_reduction <add>, %151, %cst_61 [0] : vector<20x64xf32> to vector<64xf32>
    %159 = vector.shape_cast %158 : vector<64xf32> to vector<1x64xf32>
    %cst_62 = arith.constant 0.000000e+00 : f32
    %160 = vector.broadcast %cst_62 : f32 to vector<1x64xf32>
    %161 = arith.addf %160, %159 : vector<1x64xf32>
    %cst_63 = arith.constant dense<0.000000e+00> : vector<64xf32>
    %162 = vector.multi_reduction <add>, %152, %cst_63 [0] : vector<20x64xf32> to vector<64xf32>
    %163 = vector.shape_cast %162 : vector<64xf32> to vector<1x64xf32>
    %164 = arith.addf %161, %163 : vector<1x64xf32>
    %cst_64 = arith.constant dense<0.000000e+00> : vector<64xf32>
    %165 = vector.multi_reduction <add>, %153, %cst_64 [0] : vector<20x64xf32> to vector<64xf32>
    %166 = vector.shape_cast %165 : vector<64xf32> to vector<1x64xf32>
    %167 = arith.addf %164, %166 : vector<1x64xf32>
    %cst_65 = arith.constant 6.000000e+01 : f32
    %168 = vector.broadcast %cst_65 : f32 to vector<1x64xf32>
    %169 = arith.divf %167, %168 : vector<1x64xf32>
    %170 = vector.broadcast %169 : vector<1x64xf32> to vector<20x64xf32>
    %171 = arith.subf %151, %170 : vector<20x64xf32>
    %172 = vector.broadcast %169 : vector<1x64xf32> to vector<20x64xf32>
    %173 = arith.subf %152, %172 : vector<20x64xf32>
    %174 = vector.broadcast %169 : vector<1x64xf32> to vector<20x64xf32>
    %175 = arith.subf %153, %174 : vector<20x64xf32>
    %176 = arith.mulf %171, %171 : vector<20x64xf32>
    %cst_66 = arith.constant dense<0.000000e+00> : vector<64xf32>
    %177 = vector.multi_reduction <add>, %176, %cst_66 [0] : vector<20x64xf32> to vector<64xf32>
    %178 = vector.shape_cast %177 : vector<64xf32> to vector<1x64xf32>
    %cst_67 = arith.constant 0.000000e+00 : f32
    %179 = vector.broadcast %cst_67 : f32 to vector<1x64xf32>
    %180 = arith.addf %179, %178 : vector<1x64xf32>
    %181 = arith.mulf %173, %173 : vector<20x64xf32>
    %cst_68 = arith.constant dense<0.000000e+00> : vector<64xf32>
    %182 = vector.multi_reduction <add>, %181, %cst_68 [0] : vector<20x64xf32> to vector<64xf32>
    %183 = vector.shape_cast %182 : vector<64xf32> to vector<1x64xf32>
    %184 = arith.addf %180, %183 : vector<1x64xf32>
    %185 = arith.mulf %175, %175 : vector<20x64xf32>
    %cst_69 = arith.constant dense<0.000000e+00> : vector<64xf32>
    %186 = vector.multi_reduction <add>, %185, %cst_69 [0] : vector<20x64xf32> to vector<64xf32>
    %187 = vector.shape_cast %186 : vector<64xf32> to vector<1x64xf32>
    %188 = arith.addf %184, %187 : vector<1x64xf32>
    %cst_70 = arith.constant 6.000000e+01 : f32
    %189 = vector.broadcast %cst_70 : f32 to vector<1x64xf32>
    %190 = arith.divf %188, %189 : vector<1x64xf32>
    %cst_71 = arith.constant 9.99999974E-6 : f32
    %191 = vector.broadcast %cst_71 : f32 to vector<1x64xf32>
    %192 = arith.addf %190, %191 : vector<1x64xf32>
    %193 = math.rsqrt %192 : vector<1x64xf32>
    %194 = arith.mulf %193, %154 : vector<1x64xf32>
    %195 = vector.broadcast %194 : vector<1x64xf32> to vector<20x64xf32>
    %196 = arith.mulf %171, %195 : vector<20x64xf32>
    %197 = vector.broadcast %155 : vector<1x64xf32> to vector<20x64xf32>
    %198 = arith.addf %196, %197 : vector<20x64xf32>
    %cst_72 = arith.constant 0.000000e+00 : f32
    %199 = vector.broadcast %cst_72 : f32 to vector<20x64xf32>
    %200 = arith.maximumf %198, %199 : vector<20x64xf32>
    %201 = vector.broadcast %194 : vector<1x64xf32> to vector<20x64xf32>
    %202 = arith.mulf %173, %201 : vector<20x64xf32>
    %203 = vector.broadcast %155 : vector<1x64xf32> to vector<20x64xf32>
    %204 = arith.addf %202, %203 : vector<20x64xf32>
    %cst_73 = arith.constant 0.000000e+00 : f32
    %205 = vector.broadcast %cst_73 : f32 to vector<20x64xf32>
    %206 = arith.maximumf %204, %205 : vector<20x64xf32>
    %207 = vector.broadcast %194 : vector<1x64xf32> to vector<20x64xf32>
    %208 = arith.mulf %175, %207 : vector<20x64xf32>
    %209 = vector.broadcast %155 : vector<1x64xf32> to vector<20x64xf32>
    %210 = arith.addf %208, %209 : vector<20x64xf32>
    %cst_74 = arith.constant 0.000000e+00 : f32
    %211 = vector.broadcast %cst_74 : f32 to vector<20x64xf32>
    %212 = arith.maximumf %210, %211 : vector<20x64xf32>
    %213 = tpu.concatenate %200, %206 in 1 : vector<20x64xf32>, vector<20x64xf32> -> vector<20x128xf32>
    %c64_75 = arith.constant 64 : index
    %c0_76 = arith.constant 0 : index
    %214 = vector.load %arg7[%c64_75, %c0_76] : memref<192x64xf32, #tpu.memory_space<vmem>>, vector<128x64xf32>
    %cst_77 = arith.constant dense<0.000000e+00> : vector<20x64xf32>
    %215 = tpu.matmul %213, %214, %cst_77 {dimension_numbers = #tpu.dot_dimension_numbers<[1], [0], [0], [1], [0, 0, 1, 1], [], []>} : vector<20x128xf32>, vector<128x64xf32>, vector<20x64xf32> -> vector<20x64xf32>
    %216 = tpu.concatenate %200, %206, %212 in 1 : vector<20x64xf32>, vector<20x64xf32>, vector<20x64xf32> -> vector<20x192xf32>
    %c0_78 = arith.constant 0 : index
    %c0_79 = arith.constant 0 : index
    %217 = vector.load %arg7[%c0_78, %c0_79] : memref<192x64xf32, #tpu.memory_space<vmem>>, vector<192x64xf32>
    %cst_80 = arith.constant dense<0.000000e+00> : vector<20x64xf32>
    %218 = tpu.matmul %216, %217, %cst_80 {dimension_numbers = #tpu.dot_dimension_numbers<[1], [0], [0], [1], [0, 0, 1, 1], [], []>} : vector<20x192xf32>, vector<192x64xf32>, vector<20x64xf32> -> vector<20x64xf32>
    %219 = tpu.concatenate %206, %212 in 1 : vector<20x64xf32>, vector<20x64xf32> -> vector<20x128xf32>
    %c0_81 = arith.constant 0 : index
    %c0_82 = arith.constant 0 : index
    %220 = vector.load %arg7[%c0_81, %c0_82] : memref<192x64xf32, #tpu.memory_space<vmem>>, vector<128x64xf32>
    %cst_83 = arith.constant dense<0.000000e+00> : vector<20x64xf32>
    %221 = tpu.matmul %219, %220, %cst_83 {dimension_numbers = #tpu.dot_dimension_numbers<[1], [0], [0], [1], [0, 0, 1, 1], [], []>} : vector<20x128xf32>, vector<128x64xf32>, vector<20x64xf32> -> vector<20x64xf32>
    %cst_84 = arith.constant dense<0.000000e+00> : vector<64xf32>
    %222 = vector.multi_reduction <add>, %215, %cst_84 [0] : vector<20x64xf32> to vector<64xf32>
    %223 = vector.shape_cast %222 : vector<64xf32> to vector<1x64xf32>
    %cst_85 = arith.constant 0.000000e+00 : f32
    %224 = vector.broadcast %cst_85 : f32 to vector<1x64xf32>
    %225 = arith.addf %224, %223 : vector<1x64xf32>
    %cst_86 = arith.constant dense<0.000000e+00> : vector<64xf32>
    %226 = vector.multi_reduction <add>, %218, %cst_86 [0] : vector<20x64xf32> to vector<64xf32>
    %227 = vector.shape_cast %226 : vector<64xf32> to vector<1x64xf32>
    %228 = arith.addf %225, %227 : vector<1x64xf32>
    %cst_87 = arith.constant dense<0.000000e+00> : vector<64xf32>
    %229 = vector.multi_reduction <add>, %221, %cst_87 [0] : vector<20x64xf32> to vector<64xf32>
    %230 = vector.shape_cast %229 : vector<64xf32> to vector<1x64xf32>
    %231 = arith.addf %228, %230 : vector<1x64xf32>
    %cst_88 = arith.constant 6.000000e+01 : f32
    %232 = vector.broadcast %cst_88 : f32 to vector<1x64xf32>
    %233 = arith.divf %231, %232 : vector<1x64xf32>
    %234 = vector.broadcast %233 : vector<1x64xf32> to vector<20x64xf32>
    %235 = arith.subf %215, %234 : vector<20x64xf32>
    %236 = vector.broadcast %233 : vector<1x64xf32> to vector<20x64xf32>
    %237 = arith.subf %218, %236 : vector<20x64xf32>
    %238 = vector.broadcast %233 : vector<1x64xf32> to vector<20x64xf32>
    %239 = arith.subf %221, %238 : vector<20x64xf32>
    %240 = arith.mulf %235, %235 : vector<20x64xf32>
    %cst_89 = arith.constant dense<0.000000e+00> : vector<64xf32>
    %241 = vector.multi_reduction <add>, %240, %cst_89 [0] : vector<20x64xf32> to vector<64xf32>
    %242 = vector.shape_cast %241 : vector<64xf32> to vector<1x64xf32>
    %cst_90 = arith.constant 0.000000e+00 : f32
    %243 = vector.broadcast %cst_90 : f32 to vector<1x64xf32>
    %244 = arith.addf %243, %242 : vector<1x64xf32>
    %245 = arith.mulf %237, %237 : vector<20x64xf32>
    %cst_91 = arith.constant dense<0.000000e+00> : vector<64xf32>
    %246 = vector.multi_reduction <add>, %245, %cst_91 [0] : vector<20x64xf32> to vector<64xf32>
    %247 = vector.shape_cast %246 : vector<64xf32> to vector<1x64xf32>
    %248 = arith.addf %244, %247 : vector<1x64xf32>
    %249 = arith.mulf %239, %239 : vector<20x64xf32>
    %cst_92 = arith.constant dense<0.000000e+00> : vector<64xf32>
    %250 = vector.multi_reduction <add>, %249, %cst_92 [0] : vector<20x64xf32> to vector<64xf32>
    %251 = vector.shape_cast %250 : vector<64xf32> to vector<1x64xf32>
    %252 = arith.addf %248, %251 : vector<1x64xf32>
    %cst_93 = arith.constant 6.000000e+01 : f32
    %253 = vector.broadcast %cst_93 : f32 to vector<1x64xf32>
    %254 = arith.divf %252, %253 : vector<1x64xf32>
    %cst_94 = arith.constant 9.99999974E-6 : f32
    %255 = vector.broadcast %cst_94 : f32 to vector<1x64xf32>
    %256 = arith.addf %254, %255 : vector<1x64xf32>
    %257 = math.rsqrt %256 : vector<1x64xf32>
    %258 = arith.mulf %257, %156 : vector<1x64xf32>
    %259 = vector.broadcast %258 : vector<1x64xf32> to vector<20x64xf32>
    %260 = arith.mulf %235, %259 : vector<20x64xf32>
    %261 = vector.broadcast %157 : vector<1x64xf32> to vector<20x64xf32>
    %262 = arith.addf %260, %261 : vector<20x64xf32>
    %cst_95 = arith.constant 0.000000e+00 : f32
    %263 = vector.broadcast %cst_95 : f32 to vector<20x64xf32>
    %264 = arith.maximumf %262, %263 : vector<20x64xf32>
    %265 = vector.broadcast %258 : vector<1x64xf32> to vector<20x64xf32>
    %266 = arith.mulf %237, %265 : vector<20x64xf32>
    %267 = vector.broadcast %157 : vector<1x64xf32> to vector<20x64xf32>
    %268 = arith.addf %266, %267 : vector<20x64xf32>
    %cst_96 = arith.constant 0.000000e+00 : f32
    %269 = vector.broadcast %cst_96 : f32 to vector<20x64xf32>
    %270 = arith.maximumf %268, %269 : vector<20x64xf32>
    %271 = vector.broadcast %258 : vector<1x64xf32> to vector<20x64xf32>
    %272 = arith.mulf %239, %271 : vector<20x64xf32>
    %273 = vector.broadcast %157 : vector<1x64xf32> to vector<20x64xf32>
    %274 = arith.addf %272, %273 : vector<20x64xf32>
    %cst_97 = arith.constant 0.000000e+00 : f32
    %275 = vector.broadcast %cst_97 : f32 to vector<20x64xf32>
    %276 = arith.maximumf %274, %275 : vector<20x64xf32>
    %277 = tpu.concatenate %264, %270 in 1 : vector<20x64xf32>, vector<20x64xf32> -> vector<20x128xf32>
    %c64_98 = arith.constant 64 : index
    %c0_99 = arith.constant 0 : index
    %278 = vector.load %arg8[%c64_98, %c0_99] : memref<192x64xf32, #tpu.memory_space<vmem>>, vector<128x64xf32>
    %cst_100 = arith.constant dense<0.000000e+00> : vector<20x64xf32>
    %279 = tpu.matmul %277, %278, %cst_100 {dimension_numbers = #tpu.dot_dimension_numbers<[1], [0], [0], [1], [0, 0, 1, 1], [], []>} : vector<20x128xf32>, vector<128x64xf32>, vector<20x64xf32> -> vector<20x64xf32>
    %280 = tpu.concatenate %264, %270, %276 in 1 : vector<20x64xf32>, vector<20x64xf32>, vector<20x64xf32> -> vector<20x192xf32>
    %c0_101 = arith.constant 0 : index
    %c0_102 = arith.constant 0 : index
    %281 = vector.load %arg8[%c0_101, %c0_102] : memref<192x64xf32, #tpu.memory_space<vmem>>, vector<192x64xf32>
    %cst_103 = arith.constant dense<0.000000e+00> : vector<20x64xf32>
    %282 = tpu.matmul %280, %281, %cst_103 {dimension_numbers = #tpu.dot_dimension_numbers<[1], [0], [0], [1], [0, 0, 1, 1], [], []>} : vector<20x192xf32>, vector<192x64xf32>, vector<20x64xf32> -> vector<20x64xf32>
    %283 = tpu.concatenate %270, %276 in 1 : vector<20x64xf32>, vector<20x64xf32> -> vector<20x128xf32>
    %c0_104 = arith.constant 0 : index
    %c0_105 = arith.constant 0 : index
    %284 = vector.load %arg8[%c0_104, %c0_105] : memref<192x64xf32, #tpu.memory_space<vmem>>, vector<128x64xf32>
    %cst_106 = arith.constant dense<0.000000e+00> : vector<20x64xf32>
    %285 = tpu.matmul %283, %284, %cst_106 {dimension_numbers = #tpu.dot_dimension_numbers<[1], [0], [0], [1], [0, 0, 1, 1], [], []>} : vector<20x128xf32>, vector<128x64xf32>, vector<20x64xf32> -> vector<20x64xf32>
    %286 = arith.addf %279, %151 : vector<20x64xf32>
    %287 = arith.addf %282, %152 : vector<20x64xf32>
    %288 = arith.addf %285, %153 : vector<20x64xf32>
    %289 = tpu.concatenate %286, %287, %288 in 1 : vector<20x64xf32>, vector<20x64xf32>, vector<20x64xf32> -> vector<20x192xf32>
    %c0_107 = arith.constant 0 : index
    %c0_108 = arith.constant 0 : index
    %290 = vector.load %arg9[%c0_107, %c0_108] : memref<192x128xf32, #tpu.memory_space<vmem>>, vector<192x128xf32>
    %cst_109 = arith.constant dense<0.000000e+00> : vector<20x128xf32>
    %291 = tpu.matmul %289, %290, %cst_109 {dimension_numbers = #tpu.dot_dimension_numbers<[1], [0], [0], [1], [0, 0, 1, 1], [], []>} : vector<20x192xf32>, vector<192x128xf32>, vector<20x128xf32> -> vector<20x128xf32>
    %c0_110 = arith.constant 0 : index
    %c0_111 = arith.constant 0 : index
    %292 = vector.load %arg10[%c0_110, %c0_111] : memref<1x128xf32, #tpu.memory_space<vmem>>, vector<1x128xf32>
    %293 = vector.broadcast %292 : vector<1x128xf32> to vector<20x128xf32>
    %294 = arith.addf %291, %293 : vector<20x128xf32>
    %c0_112 = arith.constant 0 : index
    %c0_113 = arith.constant 0 : index
    %295 = vector.load %arg11[%c0_112, %c0_113] : memref<32x128xf32, #tpu.memory_space<vmem>>, vector<32x128xf32>
    %296 = tpu.iota {dimensions = array<i32: 1>} : vector<1x128xi32>
    %c64_i32 = arith.constant 64 : i32
    %297 = vector.broadcast %c64_i32 : i32 to vector<1x128xi32>
    %298 = arith.cmpi sge, %296, %297 : vector<1x128xi32>
    %c96_i32 = arith.constant 96 : i32
    %299 = vector.broadcast %c96_i32 : i32 to vector<1x128xi32>
    %300 = arith.cmpi slt, %296, %299 : vector<1x128xi32>
    %301 = arith.andi %298, %300 : vector<1x128xi1>
    %cst_114 = arith.constant 0.000000e+00 : f32
    %302 = vector.broadcast %cst_114 : f32 to vector<2x32xf32>
    %cst_115 = arith.constant 0.000000e+00 : f32
    %303 = vector.broadcast %cst_115 : f32 to vector<2x32xf32>
    %304 = vector.extract_strided_slice %294 {offsets = [0, 0], sizes = [2, 128], strides = [1, 1]} : vector<20x128xf32> to vector<2x128xf32>
    %cst_116 = arith.constant dense<0.000000e+00> : vector<2x128xf32>
    %305 = tpu.matmul %302, %295, %cst_116 {dimension_numbers = #tpu.dot_dimension_numbers<[1], [0], [0], [1], [0, 0, 1, 1], [], []>} : vector<2x32xf32>, vector<32x128xf32>, vector<2x128xf32> -> vector<2x128xf32>
    %306 = arith.addf %304, %305 : vector<2x128xf32>
    %307 = math.tanh %306 : vector<2x128xf32>
    %cst_117 = arith.constant 5.000000e-01 : f32
    %308 = vector.broadcast %cst_117 : f32 to vector<2x128xf32>
    %309 = arith.mulf %308, %306 : vector<2x128xf32>
    %310 = math.tanh %309 : vector<2x128xf32>
    %cst_118 = arith.constant 1.000000e+00 : f32
    %311 = vector.broadcast %cst_118 : f32 to vector<2x128xf32>
    %312 = arith.addf %310, %311 : vector<2x128xf32>
    %cst_119 = arith.constant 5.000000e-01 : f32
    %313 = vector.broadcast %cst_119 : f32 to vector<2x128xf32>
    %314 = arith.mulf %313, %312 : vector<2x128xf32>
    %315 = vector.shape_cast %301 : vector<1x128xi1> to vector<1x128xi1>
    %316 = vector.broadcast %315 : vector<1x128xi1> to vector<2x128xi1>
    %317 = arith.select %316, %307, %314 : vector<2x128xi1>, vector<2x128xf32>
    %318 = vector.extract_strided_slice %317 {offsets = [0, 0], sizes = [2, 32], strides = [1, 1]} : vector<2x128xf32> to vector<2x32xf32>
    %319 = vector.extract_strided_slice %317 {offsets = [0, 32], sizes = [2, 32], strides = [1, 1]} : vector<2x128xf32> to vector<2x32xf32>
    %320 = vector.extract_strided_slice %317 {offsets = [0, 64], sizes = [2, 32], strides = [1, 1]} : vector<2x128xf32> to vector<2x32xf32>
    %321 = vector.extract_strided_slice %317 {offsets = [0, 96], sizes = [2, 32], strides = [1, 1]} : vector<2x128xf32> to vector<2x32xf32>
    %322 = arith.mulf %319, %303 : vector<2x32xf32>
    %323 = arith.mulf %318, %320 : vector<2x32xf32>
    %324 = arith.addf %322, %323 : vector<2x32xf32>
    %325 = math.tanh %324 : vector<2x32xf32>
    %326 = arith.mulf %321, %325 : vector<2x32xf32>
    %327 = vector.extract_strided_slice %294 {offsets = [2, 0], sizes = [2, 128], strides = [1, 1]} : vector<20x128xf32> to vector<2x128xf32>
    %cst_120 = arith.constant dense<0.000000e+00> : vector<2x128xf32>
    %328 = tpu.matmul %326, %295, %cst_120 {dimension_numbers = #tpu.dot_dimension_numbers<[1], [0], [0], [1], [0, 0, 1, 1], [], []>} : vector<2x32xf32>, vector<32x128xf32>, vector<2x128xf32> -> vector<2x128xf32>
    %329 = arith.addf %327, %328 : vector<2x128xf32>
    %330 = math.tanh %329 : vector<2x128xf32>
    %cst_121 = arith.constant 5.000000e-01 : f32
    %331 = vector.broadcast %cst_121 : f32 to vector<2x128xf32>
    %332 = arith.mulf %331, %329 : vector<2x128xf32>
    %333 = math.tanh %332 : vector<2x128xf32>
    %cst_122 = arith.constant 1.000000e+00 : f32
    %334 = vector.broadcast %cst_122 : f32 to vector<2x128xf32>
    %335 = arith.addf %333, %334 : vector<2x128xf32>
    %cst_123 = arith.constant 5.000000e-01 : f32
    %336 = vector.broadcast %cst_123 : f32 to vector<2x128xf32>
    %337 = arith.mulf %336, %335 : vector<2x128xf32>
    %338 = vector.shape_cast %301 : vector<1x128xi1> to vector<1x128xi1>
    %339 = vector.broadcast %338 : vector<1x128xi1> to vector<2x128xi1>
    %340 = arith.select %339, %330, %337 : vector<2x128xi1>, vector<2x128xf32>
    %341 = vector.extract_strided_slice %340 {offsets = [0, 0], sizes = [2, 32], strides = [1, 1]} : vector<2x128xf32> to vector<2x32xf32>
    %342 = vector.extract_strided_slice %340 {offsets = [0, 32], sizes = [2, 32], strides = [1, 1]} : vector<2x128xf32> to vector<2x32xf32>
    %343 = vector.extract_strided_slice %340 {offsets = [0, 64], sizes = [2, 32], strides = [1, 1]} : vector<2x128xf32> to vector<2x32xf32>
    %344 = vector.extract_strided_slice %340 {offsets = [0, 96], sizes = [2, 32], strides = [1, 1]} : vector<2x128xf32> to vector<2x32xf32>
    %345 = arith.mulf %342, %324 : vector<2x32xf32>
    %346 = arith.mulf %341, %343 : vector<2x32xf32>
    %347 = arith.addf %345, %346 : vector<2x32xf32>
    %348 = math.tanh %347 : vector<2x32xf32>
    %349 = arith.mulf %344, %348 : vector<2x32xf32>
    %350 = vector.extract_strided_slice %294 {offsets = [4, 0], sizes = [2, 128], strides = [1, 1]} : vector<20x128xf32> to vector<2x128xf32>
    %cst_124 = arith.constant dense<0.000000e+00> : vector<2x128xf32>
    %351 = tpu.matmul %349, %295, %cst_124 {dimension_numbers = #tpu.dot_dimension_numbers<[1], [0], [0], [1], [0, 0, 1, 1], [], []>} : vector<2x32xf32>, vector<32x128xf32>, vector<2x128xf32> -> vector<2x128xf32>
    %352 = arith.addf %350, %351 : vector<2x128xf32>
    %353 = math.tanh %352 : vector<2x128xf32>
    %cst_125 = arith.constant 5.000000e-01 : f32
    %354 = vector.broadcast %cst_125 : f32 to vector<2x128xf32>
    %355 = arith.mulf %354, %352 : vector<2x128xf32>
    %356 = math.tanh %355 : vector<2x128xf32>
    %cst_126 = arith.constant 1.000000e+00 : f32
    %357 = vector.broadcast %cst_126 : f32 to vector<2x128xf32>
    %358 = arith.addf %356, %357 : vector<2x128xf32>
    %cst_127 = arith.constant 5.000000e-01 : f32
    %359 = vector.broadcast %cst_127 : f32 to vector<2x128xf32>
    %360 = arith.mulf %359, %358 : vector<2x128xf32>
    %361 = vector.shape_cast %301 : vector<1x128xi1> to vector<1x128xi1>
    %362 = vector.broadcast %361 : vector<1x128xi1> to vector<2x128xi1>
    %363 = arith.select %362, %353, %360 : vector<2x128xi1>, vector<2x128xf32>
    %364 = vector.extract_strided_slice %363 {offsets = [0, 0], sizes = [2, 32], strides = [1, 1]} : vector<2x128xf32> to vector<2x32xf32>
    %365 = vector.extract_strided_slice %363 {offsets = [0, 32], sizes = [2, 32], strides = [1, 1]} : vector<2x128xf32> to vector<2x32xf32>
    %366 = vector.extract_strided_slice %363 {offsets = [0, 64], sizes = [2, 32], strides = [1, 1]} : vector<2x128xf32> to vector<2x32xf32>
    %367 = vector.extract_strided_slice %363 {offsets = [0, 96], sizes = [2, 32], strides = [1, 1]} : vector<2x128xf32> to vector<2x32xf32>
    %368 = arith.mulf %365, %347 : vector<2x32xf32>
    %369 = arith.mulf %364, %366 : vector<2x32xf32>
    %370 = arith.addf %368, %369 : vector<2x32xf32>
    %371 = math.tanh %370 : vector<2x32xf32>
    %372 = arith.mulf %367, %371 : vector<2x32xf32>
    %373 = vector.extract_strided_slice %294 {offsets = [6, 0], sizes = [2, 128], strides = [1, 1]} : vector<20x128xf32> to vector<2x128xf32>
    %cst_128 = arith.constant dense<0.000000e+00> : vector<2x128xf32>
    %374 = tpu.matmul %372, %295, %cst_128 {dimension_numbers = #tpu.dot_dimension_numbers<[1], [0], [0], [1], [0, 0, 1, 1], [], []>} : vector<2x32xf32>, vector<32x128xf32>, vector<2x128xf32> -> vector<2x128xf32>
    %375 = arith.addf %373, %374 : vector<2x128xf32>
    %376 = math.tanh %375 : vector<2x128xf32>
    %cst_129 = arith.constant 5.000000e-01 : f32
    %377 = vector.broadcast %cst_129 : f32 to vector<2x128xf32>
    %378 = arith.mulf %377, %375 : vector<2x128xf32>
    %379 = math.tanh %378 : vector<2x128xf32>
    %cst_130 = arith.constant 1.000000e+00 : f32
    %380 = vector.broadcast %cst_130 : f32 to vector<2x128xf32>
    %381 = arith.addf %379, %380 : vector<2x128xf32>
    %cst_131 = arith.constant 5.000000e-01 : f32
    %382 = vector.broadcast %cst_131 : f32 to vector<2x128xf32>
    %383 = arith.mulf %382, %381 : vector<2x128xf32>
    %384 = vector.shape_cast %301 : vector<1x128xi1> to vector<1x128xi1>
    %385 = vector.broadcast %384 : vector<1x128xi1> to vector<2x128xi1>
    %386 = arith.select %385, %376, %383 : vector<2x128xi1>, vector<2x128xf32>
    %387 = vector.extract_strided_slice %386 {offsets = [0, 0], sizes = [2, 32], strides = [1, 1]} : vector<2x128xf32> to vector<2x32xf32>
    %388 = vector.extract_strided_slice %386 {offsets = [0, 32], sizes = [2, 32], strides = [1, 1]} : vector<2x128xf32> to vector<2x32xf32>
    %389 = vector.extract_strided_slice %386 {offsets = [0, 64], sizes = [2, 32], strides = [1, 1]} : vector<2x128xf32> to vector<2x32xf32>
    %390 = vector.extract_strided_slice %386 {offsets = [0, 96], sizes = [2, 32], strides = [1, 1]} : vector<2x128xf32> to vector<2x32xf32>
    %391 = arith.mulf %388, %370 : vector<2x32xf32>
    %392 = arith.mulf %387, %389 : vector<2x32xf32>
    %393 = arith.addf %391, %392 : vector<2x32xf32>
    %394 = math.tanh %393 : vector<2x32xf32>
    %395 = arith.mulf %390, %394 : vector<2x32xf32>
    %396 = vector.extract_strided_slice %294 {offsets = [8, 0], sizes = [2, 128], strides = [1, 1]} : vector<20x128xf32> to vector<2x128xf32>
    %cst_132 = arith.constant dense<0.000000e+00> : vector<2x128xf32>
    %397 = tpu.matmul %395, %295, %cst_132 {dimension_numbers = #tpu.dot_dimension_numbers<[1], [0], [0], [1], [0, 0, 1, 1], [], []>} : vector<2x32xf32>, vector<32x128xf32>, vector<2x128xf32> -> vector<2x128xf32>
    %398 = arith.addf %396, %397 : vector<2x128xf32>
    %399 = math.tanh %398 : vector<2x128xf32>
    %cst_133 = arith.constant 5.000000e-01 : f32
    %400 = vector.broadcast %cst_133 : f32 to vector<2x128xf32>
    %401 = arith.mulf %400, %398 : vector<2x128xf32>
    %402 = math.tanh %401 : vector<2x128xf32>
    %cst_134 = arith.constant 1.000000e+00 : f32
    %403 = vector.broadcast %cst_134 : f32 to vector<2x128xf32>
    %404 = arith.addf %402, %403 : vector<2x128xf32>
    %cst_135 = arith.constant 5.000000e-01 : f32
    %405 = vector.broadcast %cst_135 : f32 to vector<2x128xf32>
    %406 = arith.mulf %405, %404 : vector<2x128xf32>
    %407 = vector.shape_cast %301 : vector<1x128xi1> to vector<1x128xi1>
    %408 = vector.broadcast %407 : vector<1x128xi1> to vector<2x128xi1>
    %409 = arith.select %408, %399, %406 : vector<2x128xi1>, vector<2x128xf32>
    %410 = vector.extract_strided_slice %409 {offsets = [0, 0], sizes = [2, 32], strides = [1, 1]} : vector<2x128xf32> to vector<2x32xf32>
    %411 = vector.extract_strided_slice %409 {offsets = [0, 32], sizes = [2, 32], strides = [1, 1]} : vector<2x128xf32> to vector<2x32xf32>
    %412 = vector.extract_strided_slice %409 {offsets = [0, 64], sizes = [2, 32], strides = [1, 1]} : vector<2x128xf32> to vector<2x32xf32>
    %413 = vector.extract_strided_slice %409 {offsets = [0, 96], sizes = [2, 32], strides = [1, 1]} : vector<2x128xf32> to vector<2x32xf32>
    %414 = arith.mulf %411, %393 : vector<2x32xf32>
    %415 = arith.mulf %410, %412 : vector<2x32xf32>
    %416 = arith.addf %414, %415 : vector<2x32xf32>
    %417 = math.tanh %416 : vector<2x32xf32>
    %418 = arith.mulf %413, %417 : vector<2x32xf32>
    %419 = vector.extract_strided_slice %294 {offsets = [10, 0], sizes = [2, 128], strides = [1, 1]} : vector<20x128xf32> to vector<2x128xf32>
    %cst_136 = arith.constant dense<0.000000e+00> : vector<2x128xf32>
    %420 = tpu.matmul %418, %295, %cst_136 {dimension_numbers = #tpu.dot_dimension_numbers<[1], [0], [0], [1], [0, 0, 1, 1], [], []>} : vector<2x32xf32>, vector<32x128xf32>, vector<2x128xf32> -> vector<2x128xf32>
    %421 = arith.addf %419, %420 : vector<2x128xf32>
    %422 = math.tanh %421 : vector<2x128xf32>
    %cst_137 = arith.constant 5.000000e-01 : f32
    %423 = vector.broadcast %cst_137 : f32 to vector<2x128xf32>
    %424 = arith.mulf %423, %421 : vector<2x128xf32>
    %425 = math.tanh %424 : vector<2x128xf32>
    %cst_138 = arith.constant 1.000000e+00 : f32
    %426 = vector.broadcast %cst_138 : f32 to vector<2x128xf32>
    %427 = arith.addf %425, %426 : vector<2x128xf32>
    %cst_139 = arith.constant 5.000000e-01 : f32
    %428 = vector.broadcast %cst_139 : f32 to vector<2x128xf32>
    %429 = arith.mulf %428, %427 : vector<2x128xf32>
    %430 = vector.shape_cast %301 : vector<1x128xi1> to vector<1x128xi1>
    %431 = vector.broadcast %430 : vector<1x128xi1> to vector<2x128xi1>
    %432 = arith.select %431, %422, %429 : vector<2x128xi1>, vector<2x128xf32>
    %433 = vector.extract_strided_slice %432 {offsets = [0, 0], sizes = [2, 32], strides = [1, 1]} : vector<2x128xf32> to vector<2x32xf32>
    %434 = vector.extract_strided_slice %432 {offsets = [0, 32], sizes = [2, 32], strides = [1, 1]} : vector<2x128xf32> to vector<2x32xf32>
    %435 = vector.extract_strided_slice %432 {offsets = [0, 64], sizes = [2, 32], strides = [1, 1]} : vector<2x128xf32> to vector<2x32xf32>
    %436 = vector.extract_strided_slice %432 {offsets = [0, 96], sizes = [2, 32], strides = [1, 1]} : vector<2x128xf32> to vector<2x32xf32>
    %437 = arith.mulf %434, %416 : vector<2x32xf32>
    %438 = arith.mulf %433, %435 : vector<2x32xf32>
    %439 = arith.addf %437, %438 : vector<2x32xf32>
    %440 = math.tanh %439 : vector<2x32xf32>
    %441 = arith.mulf %436, %440 : vector<2x32xf32>
    %442 = vector.extract_strided_slice %294 {offsets = [12, 0], sizes = [2, 128], strides = [1, 1]} : vector<20x128xf32> to vector<2x128xf32>
    %cst_140 = arith.constant dense<0.000000e+00> : vector<2x128xf32>
    %443 = tpu.matmul %441, %295, %cst_140 {dimension_numbers = #tpu.dot_dimension_numbers<[1], [0], [0], [1], [0, 0, 1, 1], [], []>} : vector<2x32xf32>, vector<32x128xf32>, vector<2x128xf32> -> vector<2x128xf32>
    %444 = arith.addf %442, %443 : vector<2x128xf32>
    %445 = math.tanh %444 : vector<2x128xf32>
    %cst_141 = arith.constant 5.000000e-01 : f32
    %446 = vector.broadcast %cst_141 : f32 to vector<2x128xf32>
    %447 = arith.mulf %446, %444 : vector<2x128xf32>
    %448 = math.tanh %447 : vector<2x128xf32>
    %cst_142 = arith.constant 1.000000e+00 : f32
    %449 = vector.broadcast %cst_142 : f32 to vector<2x128xf32>
    %450 = arith.addf %448, %449 : vector<2x128xf32>
    %cst_143 = arith.constant 5.000000e-01 : f32
    %451 = vector.broadcast %cst_143 : f32 to vector<2x128xf32>
    %452 = arith.mulf %451, %450 : vector<2x128xf32>
    %453 = vector.shape_cast %301 : vector<1x128xi1> to vector<1x128xi1>
    %454 = vector.broadcast %453 : vector<1x128xi1> to vector<2x128xi1>
    %455 = arith.select %454, %445, %452 : vector<2x128xi1>, vector<2x128xf32>
    %456 = vector.extract_strided_slice %455 {offsets = [0, 0], sizes = [2, 32], strides = [1, 1]} : vector<2x128xf32> to vector<2x32xf32>
    %457 = vector.extract_strided_slice %455 {offsets = [0, 32], sizes = [2, 32], strides = [1, 1]} : vector<2x128xf32> to vector<2x32xf32>
    %458 = vector.extract_strided_slice %455 {offsets = [0, 64], sizes = [2, 32], strides = [1, 1]} : vector<2x128xf32> to vector<2x32xf32>
    %459 = vector.extract_strided_slice %455 {offsets = [0, 96], sizes = [2, 32], strides = [1, 1]} : vector<2x128xf32> to vector<2x32xf32>
    %460 = arith.mulf %457, %439 : vector<2x32xf32>
    %461 = arith.mulf %456, %458 : vector<2x32xf32>
    %462 = arith.addf %460, %461 : vector<2x32xf32>
    %463 = math.tanh %462 : vector<2x32xf32>
    %464 = arith.mulf %459, %463 : vector<2x32xf32>
    %465 = vector.extract_strided_slice %294 {offsets = [14, 0], sizes = [2, 128], strides = [1, 1]} : vector<20x128xf32> to vector<2x128xf32>
    %cst_144 = arith.constant dense<0.000000e+00> : vector<2x128xf32>
    %466 = tpu.matmul %464, %295, %cst_144 {dimension_numbers = #tpu.dot_dimension_numbers<[1], [0], [0], [1], [0, 0, 1, 1], [], []>} : vector<2x32xf32>, vector<32x128xf32>, vector<2x128xf32> -> vector<2x128xf32>
    %467 = arith.addf %465, %466 : vector<2x128xf32>
    %468 = math.tanh %467 : vector<2x128xf32>
    %cst_145 = arith.constant 5.000000e-01 : f32
    %469 = vector.broadcast %cst_145 : f32 to vector<2x128xf32>
    %470 = arith.mulf %469, %467 : vector<2x128xf32>
    %471 = math.tanh %470 : vector<2x128xf32>
    %cst_146 = arith.constant 1.000000e+00 : f32
    %472 = vector.broadcast %cst_146 : f32 to vector<2x128xf32>
    %473 = arith.addf %471, %472 : vector<2x128xf32>
    %cst_147 = arith.constant 5.000000e-01 : f32
    %474 = vector.broadcast %cst_147 : f32 to vector<2x128xf32>
    %475 = arith.mulf %474, %473 : vector<2x128xf32>
    %476 = vector.shape_cast %301 : vector<1x128xi1> to vector<1x128xi1>
    %477 = vector.broadcast %476 : vector<1x128xi1> to vector<2x128xi1>
    %478 = arith.select %477, %468, %475 : vector<2x128xi1>, vector<2x128xf32>
    %479 = vector.extract_strided_slice %478 {offsets = [0, 0], sizes = [2, 32], strides = [1, 1]} : vector<2x128xf32> to vector<2x32xf32>
    %480 = vector.extract_strided_slice %478 {offsets = [0, 32], sizes = [2, 32], strides = [1, 1]} : vector<2x128xf32> to vector<2x32xf32>
    %481 = vector.extract_strided_slice %478 {offsets = [0, 64], sizes = [2, 32], strides = [1, 1]} : vector<2x128xf32> to vector<2x32xf32>
    %482 = vector.extract_strided_slice %478 {offsets = [0, 96], sizes = [2, 32], strides = [1, 1]} : vector<2x128xf32> to vector<2x32xf32>
    %483 = arith.mulf %480, %462 : vector<2x32xf32>
    %484 = arith.mulf %479, %481 : vector<2x32xf32>
    %485 = arith.addf %483, %484 : vector<2x32xf32>
    %486 = math.tanh %485 : vector<2x32xf32>
    %487 = arith.mulf %482, %486 : vector<2x32xf32>
    %488 = vector.extract_strided_slice %294 {offsets = [16, 0], sizes = [2, 128], strides = [1, 1]} : vector<20x128xf32> to vector<2x128xf32>
    %cst_148 = arith.constant dense<0.000000e+00> : vector<2x128xf32>
    %489 = tpu.matmul %487, %295, %cst_148 {dimension_numbers = #tpu.dot_dimension_numbers<[1], [0], [0], [1], [0, 0, 1, 1], [], []>} : vector<2x32xf32>, vector<32x128xf32>, vector<2x128xf32> -> vector<2x128xf32>
    %490 = arith.addf %488, %489 : vector<2x128xf32>
    %491 = math.tanh %490 : vector<2x128xf32>
    %cst_149 = arith.constant 5.000000e-01 : f32
    %492 = vector.broadcast %cst_149 : f32 to vector<2x128xf32>
    %493 = arith.mulf %492, %490 : vector<2x128xf32>
    %494 = math.tanh %493 : vector<2x128xf32>
    %cst_150 = arith.constant 1.000000e+00 : f32
    %495 = vector.broadcast %cst_150 : f32 to vector<2x128xf32>
    %496 = arith.addf %494, %495 : vector<2x128xf32>
    %cst_151 = arith.constant 5.000000e-01 : f32
    %497 = vector.broadcast %cst_151 : f32 to vector<2x128xf32>
    %498 = arith.mulf %497, %496 : vector<2x128xf32>
    %499 = vector.shape_cast %301 : vector<1x128xi1> to vector<1x128xi1>
    %500 = vector.broadcast %499 : vector<1x128xi1> to vector<2x128xi1>
    %501 = arith.select %500, %491, %498 : vector<2x128xi1>, vector<2x128xf32>
    %502 = vector.extract_strided_slice %501 {offsets = [0, 0], sizes = [2, 32], strides = [1, 1]} : vector<2x128xf32> to vector<2x32xf32>
    %503 = vector.extract_strided_slice %501 {offsets = [0, 32], sizes = [2, 32], strides = [1, 1]} : vector<2x128xf32> to vector<2x32xf32>
    %504 = vector.extract_strided_slice %501 {offsets = [0, 64], sizes = [2, 32], strides = [1, 1]} : vector<2x128xf32> to vector<2x32xf32>
    %505 = vector.extract_strided_slice %501 {offsets = [0, 96], sizes = [2, 32], strides = [1, 1]} : vector<2x128xf32> to vector<2x32xf32>
    %506 = arith.mulf %503, %485 : vector<2x32xf32>
    %507 = arith.mulf %502, %504 : vector<2x32xf32>
    %508 = arith.addf %506, %507 : vector<2x32xf32>
    %509 = math.tanh %508 : vector<2x32xf32>
    %510 = arith.mulf %505, %509 : vector<2x32xf32>
    %511 = vector.extract_strided_slice %294 {offsets = [18, 0], sizes = [2, 128], strides = [1, 1]} : vector<20x128xf32> to vector<2x128xf32>
    %cst_152 = arith.constant dense<0.000000e+00> : vector<2x128xf32>
    %512 = tpu.matmul %510, %295, %cst_152 {dimension_numbers = #tpu.dot_dimension_numbers<[1], [0], [0], [1], [0, 0, 1, 1], [], []>} : vector<2x32xf32>, vector<32x128xf32>, vector<2x128xf32> -> vector<2x128xf32>
    %513 = arith.addf %511, %512 : vector<2x128xf32>
    %514 = math.tanh %513 : vector<2x128xf32>
    %cst_153 = arith.constant 5.000000e-01 : f32
    %515 = vector.broadcast %cst_153 : f32 to vector<2x128xf32>
    %516 = arith.mulf %515, %513 : vector<2x128xf32>
    %517 = math.tanh %516 : vector<2x128xf32>
    %cst_154 = arith.constant 1.000000e+00 : f32
    %518 = vector.broadcast %cst_154 : f32 to vector<2x128xf32>
    %519 = arith.addf %517, %518 : vector<2x128xf32>
    %cst_155 = arith.constant 5.000000e-01 : f32
    %520 = vector.broadcast %cst_155 : f32 to vector<2x128xf32>
    %521 = arith.mulf %520, %519 : vector<2x128xf32>
    %522 = vector.shape_cast %301 : vector<1x128xi1> to vector<1x128xi1>
    %523 = vector.broadcast %522 : vector<1x128xi1> to vector<2x128xi1>
    %524 = arith.select %523, %514, %521 : vector<2x128xi1>, vector<2x128xf32>
    %525 = vector.extract_strided_slice %524 {offsets = [0, 0], sizes = [2, 32], strides = [1, 1]} : vector<2x128xf32> to vector<2x32xf32>
    %526 = vector.extract_strided_slice %524 {offsets = [0, 32], sizes = [2, 32], strides = [1, 1]} : vector<2x128xf32> to vector<2x32xf32>
    %527 = vector.extract_strided_slice %524 {offsets = [0, 64], sizes = [2, 32], strides = [1, 1]} : vector<2x128xf32> to vector<2x32xf32>
    %528 = vector.extract_strided_slice %524 {offsets = [0, 96], sizes = [2, 32], strides = [1, 1]} : vector<2x128xf32> to vector<2x32xf32>
    %529 = arith.mulf %526, %508 : vector<2x32xf32>
    %530 = arith.mulf %525, %527 : vector<2x32xf32>
    %531 = arith.addf %529, %530 : vector<2x32xf32>
    %532 = math.tanh %531 : vector<2x32xf32>
    %533 = arith.mulf %528, %532 : vector<2x32xf32>
    %c0_156 = arith.constant 0 : index
    %c0_157 = arith.constant 0 : index
    %534 = vector.load %arg12[%c0_156, %c0_157] : memref<32x2xf32, #tpu.memory_space<vmem>>, vector<32x2xf32>
    %cst_158 = arith.constant dense<0.000000e+00> : vector<2x2xf32>
    %535 = tpu.matmul %533, %534, %cst_158 {dimension_numbers = #tpu.dot_dimension_numbers<[1], [0], [0], [1], [0, 0, 1, 1], [], []>} : vector<2x32xf32>, vector<32x2xf32>, vector<2x2xf32> -> vector<2x2xf32>
    %c0_159 = arith.constant 0 : index
    %c0_160 = arith.constant 0 : index
    %536 = vector.load %arg13[%c0_159, %c0_160] : memref<1x2xf32, #tpu.memory_space<vmem>>, vector<1x2xf32>
    %537 = vector.broadcast %536 : vector<1x2xf32> to vector<2x2xf32>
    %538 = arith.addf %535, %537 : vector<2x2xf32>
    %cst_161 = arith.constant dense<0xFF800000> : vector<2xf32>
    %539 = vector.multi_reduction <maximumf>, %538, %cst_161 [1] : vector<2x2xf32> to vector<2xf32>
    %540 = vector.shape_cast %539 : vector<2xf32> to vector<2x1xf32>
    %541 = vector.broadcast %540 : vector<2x1xf32> to vector<2x2xf32>
    %542 = arith.subf %538, %541 : vector<2x2xf32>
    %543 = math.exp %542 : vector<2x2xf32>
    %cst_162 = arith.constant dense<0.000000e+00> : vector<2xf32>
    %544 = vector.multi_reduction <add>, %543, %cst_162 [1] : vector<2x2xf32> to vector<2xf32>
    %545 = vector.shape_cast %544 : vector<2xf32> to vector<2x1xf32>
    %546 = tpu.reciprocal %545 {approx = true} : vector<2x1xf32> -> vector<2x1xf32>
    %547 = vector.broadcast %546 : vector<2x1xf32> to vector<2x2xf32>
    %548 = arith.mulf %543, %547 : vector<2x2xf32>
    %c0_163 = arith.constant 0 : index
    %c0_164 = arith.constant 0 : index
    %549 = vector.load %arg14[%c0_163, %c0_164] : memref<2x2xf32, #tpu.memory_space<vmem>>, vector<2x2xf32>
    tpu.vector_store %arg14[%c0_163, %c0_164], %548 {strides = array<i32>} : memref<2x2xf32, #tpu.memory_space<vmem>>, vector<2x2xf32>,
    return
  }
}

</mosaic_0001>

<llo_original>
// kernel: conv_lstm_forward.1
$region0: #{conv_lstm_forward.1}
  #allocation0 [shape = 'u32[]', space=smem, size = 0x4, offset = 0x4, fixed_abs, tag = 'smem constant byte address 0x4 - core index']
  #allocation1 [shape = 'u32[144,128]{1,0:T(1,128)}', space=vmem, size = 0x12000, scoped, tag = 'internal scratch']
  %s0 = inlined_call_operand.vmem [shape: f32[3,20,12], index: 0, kind: input, shape index: {}]
  %s1 = inlined_call_operand.vmem [shape: f32[12,64], index: 1, kind: input, shape index: {}]
  %s2 = inlined_call_operand.vmem [shape: f32[1,64], index: 2, kind: input, shape index: {}]
  %s3 = inlined_call_operand.vmem [shape: f32[4,64], index: 3, kind: input, shape index: {}]
  %s4 = inlined_call_operand.vmem [shape: f32[4,64], index: 4, kind: input, shape index: {}]
  %s5 = inlined_call_operand.vmem [shape: f32[192,64], index: 5, kind: input, shape index: {}]
  %s6 = inlined_call_operand.vmem [shape: f32[192,64], index: 6, kind: input, shape index: {}]
  %s7 = inlined_call_operand.vmem [shape: f32[192,64], index: 7, kind: input, shape index: {}]
  %s8 = inlined_call_operand.vmem [shape: f32[192,64], index: 8, kind: input, shape index: {}]
  %s9 = inlined_call_operand.vmem [shape: f32[192,128], index: 9, kind: input, shape index: {}]
  %s10 = inlined_call_operand.vmem [shape: f32[1,128], index: 10, kind: input, shape index: {}]
  %s11 = inlined_call_operand.vmem [shape: f32[32,128], index: 11, kind: input, shape index: {}]
  %s12 = inlined_call_operand.vmem [shape: f32[32,2], index: 12, kind: input, shape index: {}]
  %s13 = inlined_call_operand.vmem [shape: f32[1,2], index: 13, kind: input, shape index: {}]
  %s14 = inlined_call_operand.hbm [shape: f32[2,2], index: 14, kind: output, shape index: {}]
  %s15 = sld [smem:[#allocation0]]
  $region66: #{conv_lstm_forward.1} parent=0
    _
  %s17 = ssub.s32 1, %s15
  %s18 = scalar_select 0, %s17, %s15
  $region1: #{conv_lstm_forward.1} parent=0
    #allocation2 [shape = 'u8[1024]{0}', space=vmem, size = 0x400, scoped, tag = 'output window, operand 0, single buffered']
    #allocation3 [shape = 's32[1]{0}', space=sflag, size = 0x4, scoped, tag = 'scoped memory for conv_lstm_forward.1']
    %19 = vsyncpa [#allocation3], 0
    // Predicated region
    $region2: #{conv_lstm_forward.1} parent=1 // pred_check
      _
    $region3: #{conv_lstm_forward.1} parent=1 // pred_check_branch
      %21 = sbr.rel (0) target = $region5
    $region4: #{conv_lstm_forward.1} parent=1 // pred_region
      _
    $region5: #{conv_lstm_forward.1} parent=1 // pred_fallthru
      _
    // Predicated region
    $region6: #{conv_lstm_forward.1} parent=1 // pred_check
      _
    $region7: #{conv_lstm_forward.1} parent=1 // pred_check_branch
      %23 = sbr.rel (0) target = $region9
    $region8: #{conv_lstm_forward.1} parent=1 // pred_region
      _
    $region9: #{conv_lstm_forward.1} parent=1 // pred_fallthru
      _
    // Predicated region
    $region10: #{conv_lstm_forward.1} parent=1 // pred_check
      _
    $region11: #{conv_lstm_forward.1} parent=1 // pred_check_branch
      %25 = sbr.rel (0) target = $region13
    $region12: #{conv_lstm_forward.1} parent=1 // pred_region
      _
    $region13: #{conv_lstm_forward.1} parent=1 // pred_fallthru
      _
    // Predicated region
    $region14: #{conv_lstm_forward.1} parent=1 // pred_check
      _
    $region15: #{conv_lstm_forward.1} parent=1 // pred_check_branch
      %27 = sbr.rel (0) target = $region17
    $region16: #{conv_lstm_forward.1} parent=1 // pred_region
      _
    $region17: #{conv_lstm_forward.1} parent=1 // pred_fallthru
      _
    // Predicated region
    $region18: #{conv_lstm_forward.1} parent=1 // pred_check
      _
    $region19: #{conv_lstm_forward.1} parent=1 // pred_check_branch
      %29 = sbr.rel (0) target = $region21
    $region20: #{conv_lstm_forward.1} parent=1 // pred_region
      _
    $region21: #{conv_lstm_forward.1} parent=1 // pred_fallthru
      _
    // Predicated region
    $region22: #{conv_lstm_forward.1} parent=1 // pred_check
      _
    $region23: #{conv_lstm_forward.1} parent=1 // pred_check_branch
      %31 = sbr.rel (0) target = $region25
    $region24: #{conv_lstm_forward.1} parent=1 // pred_region
      _
    $region25: #{conv_lstm_forward.1} parent=1 // pred_fallthru
      _
    // Predicated region
    $region26: #{conv_lstm_forward.1} parent=1 // pred_check
      _
    $region27: #{conv_lstm_forward.1} parent=1 // pred_check_branch
      %33 = sbr.rel (0) target = $region29
    $region28: #{conv_lstm_forward.1} parent=1 // pred_region
      _
    $region29: #{conv_lstm_forward.1} parent=1 // pred_fallthru
      _
    // Predicated region
    $region30: #{conv_lstm_forward.1} parent=1 // pred_check
      _
    $region31: #{conv_lstm_forward.1} parent=1 // pred_check_branch
      %35 = sbr.rel (0) target = $region33
    $region32: #{conv_lstm_forward.1} parent=1 // pred_region
      _
    $region33: #{conv_lstm_forward.1} parent=1 // pred_fallthru
      _
    // Predicated region
    $region34: #{conv_lstm_forward.1} parent=1 // pred_check
      _
    $region35: #{conv_lstm_forward.1} parent=1 // pred_check_branch
      %37 = sbr.rel (0) target = $region37
    $region36: #{conv_lstm_forward.1} parent=1 // pred_region
      _
    $region37: #{conv_lstm_forward.1} parent=1 // pred_fallthru
      _
    // Predicated region
    $region38: #{conv_lstm_forward.1} parent=1 // pred_check
      _
    $region39: #{conv_lstm_forward.1} parent=1 // pred_check_branch
      %39 = sbr.rel (0) target = $region41
    $region40: #{conv_lstm_forward.1} parent=1 // pred_region
      _
    $region41: #{conv_lstm_forward.1} parent=1 // pred_fallthru
      _
    // Predicated region
    $region42: #{conv_lstm_forward.1} parent=1 // pred_check
      _
    $region43: #{conv_lstm_forward.1} parent=1 // pred_check_branch
      %41 = sbr.rel (0) target = $region45
    $region44: #{conv_lstm_forward.1} parent=1 // pred_region
      _
    $region45: #{conv_lstm_forward.1} parent=1 // pred_fallthru
      _
    // Predicated region
    $region46: #{conv_lstm_forward.1} parent=1 // pred_check
      _
    $region47: #{conv_lstm_forward.1} parent=1 // pred_check_branch
      %43 = sbr.rel (0) target = $region49
    $region48: #{conv_lstm_forward.1} parent=1 // pred_region
      _
    $region49: #{conv_lstm_forward.1} parent=1 // pred_fallthru
      _
    // Predicated region
    $region50: #{conv_lstm_forward.1} parent=1 // pred_check
      _
    $region51: #{conv_lstm_forward.1} parent=1 // pred_check_branch
      %45 = sbr.rel (0) target = $region53
    $region52: #{conv_lstm_forward.1} parent=1 // pred_region
      _
    $region53: #{conv_lstm_forward.1} parent=1 // pred_fallthru
      _
    // Predicated region
    $region54: #{conv_lstm_forward.1} parent=1 // pred_check
      _
    $region55: #{conv_lstm_forward.1} parent=1 // pred_check_branch
      %47 = sbr.rel (0) target = $region57
    $region56: #{conv_lstm_forward.1} parent=1 // pred_region
      _
    $region57: #{conv_lstm_forward.1} parent=1 // pred_fallthru
      _
    %v48 = vld [vmem:[%s3] sm:$0xf]
    %v49 = vld [vmem:[%s4] sm:$0xf]
    %v50 = vld [vmem:[%s1] sm:$0xff]
    %v51 = vld [vmem:[%s1 + $0x8] sm:$0xf]
    %v52 = vld [vmem:[%s2] sm:$0x1]
    %v53 = vld [vmem:[%s0] sm:$0xff]
    %v54 = vld [vmem:[%s0 + $0x8] sm:$0xff]
    %v55 = vld [vmem:[%s0 + $0x10] sm:$0xf]
    %v57 = vlaneseq
    %v58 = vshrl.u32 %v57, 7
    %v59 = vsub.s32 0, %v58
    %v60 = vrot.slane %v52, %v59
    %vm62 = vcmask 97280
    %v64 = vsel %vm62, %v53, 0
    %v67 = vsel %vm62, %v54, 0
    %v70 = vsel %vm62, %v55, 0
    %vm72 = vcmask 1043456
    %v74 = vsel %vm72, %v51, 0
    %76 = vmatprep.subr.mxu0 0.0
    %77 = vmatpush1.msra.mxu0 %v50
    %78 = vmatprep.subr.mxu0 0.0
    %79 = vmatpush1.msra.mxu0 %v74
    %80 = vmatprep.subr.mxu0 0.0
    %81 = vmatpush1.msra.mxu0 0.0
    %82 = vmatprep.subr.mxu0 0.0
    %83 = vmatpush1.msra.mxu0 0.0
    %84 = vmatprep.subr.mxu0 0.0
    %85 = vmatpush1.msra.mxu0 0.0
    %86 = vmatprep.subr.mxu0 0.0
    %87 = vmatpush1.msra.mxu0 0.0
    %88 = vmatprep.subr.mxu0 0.0
    %89 = vmatpush1.msra.mxu0 0.0
    %90 = vmatprep.subr.mxu0 0.0
    %91 = vmatpush1.msra.mxu0 0.0
    %92 = vmatprep.subr.mxu0 0.0
    %93 = vmatpush1.msra.mxu0 0.0
    %94 = vmatprep.subr.mxu0 0.0
    %95 = vmatpush1.msra.mxu0 0.0
    %96 = vmatprep.subr.mxu0 0.0
    %97 = vmatpush1.msra.mxu0 0.0
    %98 = vmatprep.subr.mxu0 0.0
    %99 = vmatpush1.msra.mxu0 0.0
    %100 = vmatprep.subr.mxu0 0.0
    %101 = vmatpush1.msra.mxu0 0.0
    %102 = vmatprep.subr.mxu0 0.0
    %103 = vmatpush1.msra.mxu0 0.0
    %104 = vmatprep.subr.mxu0 0.0
    %105 = vmatpush1.msra.mxu0 0.0
    %106 = vmatprep.subr.mxu0 0.0
    %107 = vmatpush1.msra.mxu0 0.0
    %108 = vmatprep.subr.mxu0 0.0
    %109 = vmatpush1.msra.mxu0 0.0
    %110 = vmatprep.subr.mxu0 0.0
    %111 = vmatpush1.msra.mxu0 0.0
    %112 = vmatprep.subr.mxu0 0.0
    %113 = vmatpush1.msra.mxu0 0.0
    %114 = vmatprep.subr.mxu0 0.0
    %115 = vmatpush1.msra.mxu0 0.0
    %116 = vmatprep.subr.mxu0 0.0
    %117 = vmatpush1.msra.mxu0 0.0
    %118 = vmatprep.subr.mxu0 0.0
    %119 = vmatpush1.msra.mxu0 0.0
    %120 = vmatprep.subr.mxu0 0.0
    %121 = vmatpush1.msra.mxu0 0.0
    %122 = vmatprep.subr.mxu0 0.0
    %123 = vmatpush1.msra.mxu0 0.0
    %124 = vmatprep.subr.mxu0 0.0
    %125 = vmatpush1.msra.mxu0 0.0
    %126 = vmatprep.subr.mxu0 0.0
    %127 = vmatpush1.msra.mxu0 0.0
    %128 = vmatprep.subr.mxu0 0.0
    %129 = vmatpush1.msra.mxu0 0.0
    %130 = vmatprep.subr.mxu0 0.0
    %131 = vmatpush1.msra.mxu0 0.0
    %132 = vmatprep.subr.mxu0 0.0
    %133 = vmatpush1.msra.mxu0 0.0
    %134 = vmatprep.subr.mxu0 0.0
    %135 = vmatpush1.msra.mxu0 0.0
    %136 = vmatprep.subr.mxu0 0.0
    %137 = vmatpush1.msra.mxu0 0.0
    %138 = vmatprep.subr.mxu0 0.0
    %139 = vmatpush1.msra.mxu0 0.0
    %140 = vmatprep.mubr.f32.mxu0 0.0
    %141 = vmatmul.mubr.f32.gmra.mrb[0].mxu0 %v64
    %v142 = vpop.f32.mrb[0].mxu0
    %v143 = vadd.f32 %v60, %v142
    %v144 = vpop.f32.mrb[0].mxu0
    %145 = vmatprep.mubr.f32.mxu0 0.0
    %146 = vmatmul.mubr.f32.gmra.mrb[0].mxu0 %v67
    %v147 = vpop.f32.mrb[0].mxu0
    %v148 = vadd.f32 %v60, %v147
    %v149 = vpop.f32.mrb[0].mxu0
    %150 = vmatprep.mubr.f32.mxu0 0.0
    %151 = vmatmul.mubr.f32.gmra.mrb[0].mxu0 %v70
    %v152 = vpop.f32.mrb[0].mxu0
    %v153 = vadd.f32 %v60, %v152
    %v154 = vpop.f32.mrb[0].mxu0
    %155 = vdwg.mxu0
    %s156 = scalar_lea.vmem %s0, 24
    %v157 = vld [vmem:[%s156] sm:$0xff]
    %v158 = vld [vmem:[%s156 + $0x8] sm:$0xff]
    %v159 = vld [vmem:[%s156 + $0x10] sm:$0xf]
    %v161 = vsel %vm62, %v157, 0
    %v164 = vsel %vm62, %v158, 0
    %v167 = vsel %vm62, %v159, 0
    %169 = vmatprep.subr.mxu0 0.0
    %170 = vmatpush1.msra.mxu0 %v50
    %171 = vmatprep.subr.mxu0 0.0
    %172 = vmatpush1.msra.mxu0 %v74
    %173 = vmatprep.subr.mxu0 0.0
    %174 = vmatpush1.msra.mxu0 0.0
    %175 = vmatprep.subr.mxu0 0.0
    %176 = vmatpush1.msra.mxu0 0.0
    %177 = vmatprep.subr.mxu0 0.0
    %178 = vmatpush1.msra.mxu0 0.0
    %179 = vmatprep.subr.mxu0 0.0
    %180 = vmatpush1.msra.mxu0 0.0
    %181 = vmatprep.subr.mxu0 0.0
    %182 = vmatpush1.msra.mxu0 0.0
    %183 = vmatprep.subr.mxu0 0.0
    %184 = vmatpush1.msra.mxu0 0.0
    %185 = vmatprep.subr.mxu0 0.0
    %186 = vmatpush1.msra.mxu0 0.0
    %187 = vmatprep.subr.mxu0 0.0
    %188 = vmatpush1.msra.mxu0 0.0
    %189 = vmatprep.subr.mxu0 0.0
    %190 = vmatpush1.msra.mxu0 0.0
    %191 = vmatprep.subr.mxu0 0.0
    %192 = vmatpush1.msra.mxu0 0.0
    %193 = vmatprep.subr.mxu0 0.0
    %194 = vmatpush1.msra.mxu0 0.0
    %195 = vmatprep.subr.mxu0 0.0
    %196 = vmatpush1.msra.mxu0 0.0
    %197 = vmatprep.subr.mxu0 0.0
    %198 = vmatpush1.msra.mxu0 0.0
    %199 = vmatprep.subr.mxu0 0.0
    %200 = vmatpush1.msra.mxu0 0.0
    %201 = vmatprep.subr.mxu0 0.0
    %202 = vmatpush1.msra.mxu0 0.0
    %203 = vmatprep.subr.mxu0 0.0
    %204 = vmatpush1.msra.mxu0 0.0
    %205 = vmatprep.subr.mxu0 0.0
    %206 = vmatpush1.msra.mxu0 0.0
    %207 = vmatprep.subr.mxu0 0.0
    %208 = vmatpush1.msra.mxu0 0.0
    %209 = vmatprep.subr.mxu0 0.0
    %210 = vmatpush1.msra.mxu0 0.0
    %211 = vmatprep.subr.mxu0 0.0
    %212 = vmatpush1.msra.mxu0 0.0
    %213 = vmatprep.subr.mxu0 0.0
    %214 = vmatpush1.msra.mxu0 0.0
    %215 = vmatprep.subr.mxu0 0.0
    %216 = vmatpush1.msra.mxu0 0.0
    %217 = vmatprep.subr.mxu0 0.0
    %218 = vmatpush1.msra.mxu0 0.0
    %219 = vmatprep.subr.mxu0 0.0
    %220 = vmatpush1.msra.mxu0 0.0
    %221 = vmatprep.subr.mxu0 0.0
    %222 = vmatpush1.msra.mxu0 0.0
    %223 = vmatprep.subr.mxu0 0.0
    %224 = vmatpush1.msra.mxu0 0.0
    %225 = vmatprep.subr.mxu0 0.0
    %226 = vmatpush1.msra.mxu0 0.0
    %227 = vmatprep.subr.mxu0 0.0
    %228 = vmatpush1.msra.mxu0 0.0
    %229 = vmatprep.subr.mxu0 0.0
    %230 = vmatpush1.msra.mxu0 0.0
    %231 = vmatprep.subr.mxu0 0.0
    %232 = vmatpush1.msra.mxu0 0.0
    %233 = vmatprep.mubr.f32.mxu0 0.0
    %234 = vmatmul.mubr.f32.gmra.mrb[0].mxu0 %v161
    %v235 = vpop.f32.mrb[0].mxu0
    %v236 = vadd.f32 %v60, %v235
    %v237 = vpop.f32.mrb[0].mxu0
    %238 = vmatprep.mubr.f32.mxu0 0.0
    %239 = vmatmul.mubr.f32.gmra.mrb[0].mxu0 %v164
    %v240 = vpop.f32.mrb[0].mxu0
    %v241 = vadd.f32 %v60, %v240
    %v242 = vpop.f32.mrb[0].mxu0
    %243 = vmatprep.mubr.f32.mxu0 0.0
    %244 = vmatmul.mubr.f32.gmra.mrb[0].mxu0 %v167
    %v245 = vpop.f32.mrb[0].mxu0
    %v246 = vadd.f32 %v60, %v245
    %v247 = vpop.f32.mrb[0].mxu0
    %248 = vdwg.mxu0
    %s249 = scalar_lea.vmem %s0, 48
    %v250 = vld [vmem:[%s249] sm:$0xff]
    %v251 = vld [vmem:[%s249 + $0x8] sm:$0xff]
    %v252 = vld [vmem:[%s249 + $0x10] sm:$0xf]
    %v254 = vsel %vm62, %v250, 0
    %v257 = vsel %vm62, %v251, 0
    %v260 = vsel %vm62, %v252, 0
    %262 = vmatprep.subr.mxu0 0.0
    %263 = vmatpush1.msra.mxu0 %v50
    %264 = vmatprep.subr.mxu0 0.0
    %265 = vmatpush1.msra.mxu0 %v74
    %266 = vmatprep.subr.mxu0 0.0
    %267 = vmatpush1.msra.mxu0 0.0
    %268 = vmatprep.subr.mxu0 0.0
    %269 = vmatpush1.msra.mxu0 0.0
    %270 = vmatprep.subr.mxu0 0.0
    %271 = vmatpush1.msra.mxu0 0.0
    %272 = vmatprep.subr.mxu0 0.0
    %273 = vmatpush1.msra.mxu0 0.0
    %274 = vmatprep.subr.mxu0 0.0
    %275 = vmatpush1.msra.mxu0 0.0
    %276 = vmatprep.subr.mxu0 0.0
    %277 = vmatpush1.msra.mxu0 0.0
    %278 = vmatprep.subr.mxu0 0.0
    %279 = vmatpush1.msra.mxu0 0.0
    %280 = vmatprep.subr.mxu0 0.0
    %281 = vmatpush1.msra.mxu0 0.0
    %282 = vmatprep.subr.mxu0 0.0
    %283 = vmatpush1.msra.mxu0 0.0
    %284 = vmatprep.subr.mxu0 0.0
    %285 = vmatpush1.msra.mxu0 0.0
    %286 = vmatprep.subr.mxu0 0.0
    %287 = vmatpush1.msra.mxu0 0.0
    %288 = vmatprep.subr.mxu0 0.0
    %289 = vmatpush1.msra.mxu0 0.0
    %290 = vmatprep.subr.mxu0 0.0
    %291 = vmatpush1.msra.mxu0 0.0
    %292 = vmatprep.subr.mxu0 0.0
    %293 = vmatpush1.msra.mxu0 0.0
    %294 = vmatprep.subr.mxu0 0.0
    %295 = vmatpush1.msra.mxu0 0.0
    %296 = vmatprep.subr.mxu0 0.0
    %297 = vmatpush1.msra.mxu0 0.0
    %298 = vmatprep.subr.mxu0 0.0
    %299 = vmatpush1.msra.mxu0 0.0
    %300 = vmatprep.subr.mxu0 0.0
    %301 = vmatpush1.msra.mxu0 0.0
    %302 = vmatprep.subr.mxu0 0.0
    %303 = vmatpush1.msra.mxu0 0.0
    %304 = vmatprep.subr.mxu0 0.0
    %305 = vmatpush1.msra.mxu0 0.0
    %306 = vmatprep.subr.mxu0 0.0
    %307 = vmatpush1.msra.mxu0 0.0
    %308 = vmatprep.subr.mxu0 0.0
    %309 = vmatpush1.msra.mxu0 0.0
    %310 = vmatprep.subr.mxu0 0.0
    %311 = vmatpush1.msra.mxu0 0.0
    %312 = vmatprep.subr.mxu0 0.0
    %313 = vmatpush1.msra.mxu0 0.0
    %314 = vmatprep.subr.mxu0 0.0
    %315 = vmatpush1.msra.mxu0 0.0
    %316 = vmatprep.subr.mxu0 0.0
    %317 = vmatpush1.msra.mxu0 0.0
    %318 = vmatprep.subr.mxu0 0.0
    %319 = vmatpush1.msra.mxu0 0.0
    %320 = vmatprep.subr.mxu0 0.0
    %321 = vmatpush1.msra.mxu0 0.0
    %322 = vmatprep.subr.mxu0 0.0
    %323 = vmatpush1.msra.mxu0 0.0
    %324 = vmatprep.subr.mxu0 0.0
    %325 = vmatpush1.msra.mxu0 0.0
    %326 = vmatprep.mubr.f32.mxu0 0.0
    %327 = vmatmul.mubr.f32.gmra.mrb[0].mxu0 %v254
    %v328 = vpop.f32.mrb[0].mxu0
    %v329 = vadd.f32 %v60, %v328
    %v330 = vpop.f32.mrb[0].mxu0
    %331 = vmatprep.mubr.f32.mxu0 0.0
    %332 = vmatmul.mubr.f32.gmra.mrb[0].mxu0 %v257
    %v333 = vpop.f32.mrb[0].mxu0
    %v334 = vadd.f32 %v60, %v333
    %v335 = vpop.f32.mrb[0].mxu0
    %336 = vmatprep.mubr.f32.mxu0 0.0
    %337 = vmatmul.mubr.f32.gmra.mrb[0].mxu0 %v260
    %v338 = vpop.f32.mrb[0].mxu0
    %v339 = vadd.f32 %v60, %v338
    %v340 = vpop.f32.mrb[0].mxu0
    %341 = vdwg.mxu0
    %vm342 = vcmask 523264
    %v343 = vsel %vm342, %v143, 0.0
    %v344 = vsel %vm342, %v148, 0.0
    %v345 = vadd.f32 %v343, %v344
    %vm346 = vcmask 519168
    %v347 = vsel %vm346, %v153, 0.0
    %v348 = vadd.f32 %v345, %v347
    %v349 = vrot.slane %v348, 4
    %v350 = vadd.f32 %v348, %v349
    %v351 = vrot.slane %v350, 2
    %v352 = vadd.f32 %v350, %v351
    %v353 = vrot.slane %v352, 1
    %v354 = vadd.f32 %v352, %v353
    %v355 = vadd.f32 %v354, 0.0
    %v356 = vsel %vm342, %v236, 0.0
    %v357 = vsel %vm342, %v241, 0.0
    %v358 = vadd.f32 %v356, %v357
    %v359 = vsel %vm346, %v246, 0.0
    %v360 = vadd.f32 %v358, %v359
    %v361 = vrot.slane %v360, 4
    %v362 = vadd.f32 %v360, %v361
    %v363 = vrot.slane %v362, 2
    %v364 = vadd.f32 %v362, %v363
    %v365 = vrot.slane %v364, 1
    %v366 = vadd.f32 %v364, %v365
    %v367 = vadd.f32 %v355, %v366
    %v368 = vsel %vm342, %v329, 0.0
    %v369 = vsel %vm342, %v334, 0.0
    %v370 = vadd.f32 %v368, %v369
    %v371 = vsel %vm346, %v339, 0.0
    %v372 = vadd.f32 %v370, %v371
    %v373 = vrot.slane %v372, 4
    %v374 = vadd.f32 %v372, %v373
    %v375 = vrot.slane %v374, 2
    %v376 = vadd.f32 %v374, %v375
    %v377 = vrot.slane %v376, 1
    %v378 = vadd.f32 %v376, %v377
    %v379 = vadd.f32 %v367, %v378
    %v380 = vrcp.pop 60.0
    %v381 = vmul.f32 %v379, %v380
    %v382 = vsub.f32 %v143, %v381
    %v383 = vsub.f32 %v148, %v381
    %v384 = vsub.f32 %v153, %v381
    %v385 = vsub.f32 %v236, %v381
    %v386 = vsub.f32 %v241, %v381
    %v387 = vsub.f32 %v246, %v381
    %v388 = vsub.f32 %v329, %v381
    %v389 = vsub.f32 %v334, %v381
    %v390 = vsub.f32 %v339, %v381
    %v391 = vmul.f32 %v382, %v382
    %v392 = vmul.f32 %v383, %v383
    %v393 = vmul.f32 %v384, %v384
    %v394 = vsel %vm342, %v391, 0.0
    %v395 = vsel %vm342, %v392, 0.0
    %v396 = vadd.f32 %v394, %v395
    %v397 = vsel %vm346, %v393, 0.0
    %v398 = vadd.f32 %v396, %v397
    %v399 = vrot.slane %v398, 4
    %v400 = vadd.f32 %v398, %v399
    %v401 = vrot.slane %v400, 2
    %v402 = vadd.f32 %v400, %v401
    %v403 = vrot.slane %v402, 1
    %v404 = vadd.f32 %v402, %v403
    %v405 = vadd.f32 %v404, 0.0
    %v406 = vmul.f32 %v385, %v385
    %v407 = vmul.f32 %v386, %v386
    %v408 = vmul.f32 %v387, %v387
    %v409 = vsel %vm342, %v406, 0.0
    %v410 = vsel %vm342, %v407, 0.0
    %v411 = vadd.f32 %v409, %v410
    %v412 = vsel %vm346, %v408, 0.0
    %v413 = vadd.f32 %v411, %v412
    %v414 = vrot.slane %v413, 4
    %v415 = vadd.f32 %v413, %v414
    %v416 = vrot.slane %v415, 2
    %v417 = vadd.f32 %v415, %v416
    %v418 = vrot.slane %v417, 1
    %v419 = vadd.f32 %v417, %v418
    %v420 = vadd.f32 %v405, %v419
    %v421 = vmul.f32 %v388, %v388
    %v422 = vmul.f32 %v389, %v389
    %v423 = vmul.f32 %v390, %v390
    %v424 = vsel %vm342, %v421, 0.0
    %v425 = vsel %vm342, %v422, 0.0
    %v426 = vadd.f32 %v424, %v425
    %v427 = vsel %vm346, %v423, 0.0
    %v428 = vadd.f32 %v426, %v427
    %v429 = vrot.slane %v428, 4
    %v430 = vadd.f32 %v428, %v429
    %v431 = vrot.slane %v430, 2
    %v432 = vadd.f32 %v430, %v431
    %v433 = vrot.slane %v432, 1
    %v434 = vadd.f32 %v432, %v433
    %v435 = vadd.f32 %v420, %v434
    %v436 = vmul.f32 %v435, %v380
    %v437 = vadd.f32 %v436, 1e-05
    %v438 = vrsqrt.pop %v437
    %v439 = vmul.f32 %v438, %v48
    %v440 = vlaneseq
    %v441 = vshrl.u32 %v440, 7
    %v442 = vsub.s32 0, %v441
    %v443 = vrot.slane %v439, %v442
    %v444 = vmul.f32 %v382, %v443
    %v445 = vmul.f32 %v383, %v443
    %v446 = vmul.f32 %v384, %v443
    %v447 = vlaneseq
    %v448 = vshrl.u32 %v447, 7
    %v449 = vsub.s32 0, %v448
    %v450 = vrot.slane %v49, %v449
    %v451 = vadd.f32 %v444, %v450
    %v452 = vadd.f32 %v445, %v450
    %v453 = vadd.f32 %v446, %v450
    %v454 = vmax.f32 %v451, 0.0
    %v455 = vmax.f32 %v452, 0.0
    %v456 = vmax.f32 %v453, 0.0
    %v457 = vmul.f32 %v385, %v443
    %v458 = vmul.f32 %v386, %v443
    %v459 = vmul.f32 %v387, %v443
    %v460 = vadd.f32 %v457, %v450
    %v461 = vadd.f32 %v458, %v450
    %v462 = vadd.f32 %v459, %v450
    %v463 = vmax.f32 %v460, 0.0
    %v464 = vmax.f32 %v461, 0.0
    %v465 = vmax.f32 %v462, 0.0
    %v466 = vmul.f32 %v388, %v443
    %v467 = vmul.f32 %v389, %v443
    %v468 = vmul.f32 %v390, %v443
    %v469 = vadd.f32 %v466, %v450
    %v470 = vadd.f32 %v467, %v450
    %v471 = vadd.f32 %v468, %v450
    %v472 = vmax.f32 %v469, 0.0
    %v473 = vmax.f32 %v470, 0.0
    %v474 = vmax.f32 %v471, 0.0
    %478 = vrot.lane.b32.xlu0 %v463, 64
    %v479 = vpop.permute.xlu0 %478
    %480 = vrot.lane.b32.xlu0 %v464, 64
    %v481 = vpop.permute.xlu0 %480
    %482 = vrot.lane.b32.xlu0 %v465, 64
    %v483 = vpop.permute.xlu0 %482
    %v487 = vsel %vm342, %v454, %v479
    %v488 = vsel %vm342, %v455, %v481
    %v489 = vsel %vm342, %v456, %v483
    %v490 = vld [vmem:[%s5 + $0x40] sm:$0xff]
    %v491 = vld [vmem:[%s5 + $0x48] sm:$0xff]
    %v492 = vld [vmem:[%s5 + $0x50] sm:$0xff]
    %v493 = vld [vmem:[%s5 + $0x58] sm:$0xff]
    %v494 = vld [vmem:[%s5 + $0x60] sm:$0xff]
    %v495 = vld [vmem:[%s5 + $0x68] sm:$0xff]
    %v496 = vld [vmem:[%s5 + $0x70] sm:$0xff]
    %v497 = vld [vmem:[%s5 + $0x78] sm:$0xff]
    %v498 = vld [vmem:[%s5 + $0x80] sm:$0xff]
    %v499 = vld [vmem:[%s5 + $0x88] sm:$0xff]
    %v500 = vld [vmem:[%s5 + $0x90] sm:$0xff]
    %v501 = vld [vmem:[%s5 + $0x98] sm:$0xff]
    %v502 = vld [vmem:[%s5 + $0xa0] sm:$0xff]
    %v503 = vld [vmem:[%s5 + $0xa8] sm:$0xff]
    %v504 = vld [vmem:[%s5 + $0xb0] sm:$0xff]
    %v505 = vld [vmem:[%s5 + $0xb8] sm:$0xff]
    %506 = vmatprep.subr.mxu0 0.0
    %507 = vmatpush1.msra.mxu0 %v490
    %508 = vmatprep.subr.mxu0 0.0
    %509 = vmatpush1.msra.mxu0 %v491
    %510 = vmatprep.subr.mxu0 0.0
    %511 = vmatpush1.msra.mxu0 %v492
    %512 = vmatprep.subr.mxu0 0.0
    %513 = vmatpush1.msra.mxu0 %v493
    %514 = vmatprep.subr.mxu0 0.0
    %515 = vmatpush1.msra.mxu0 %v494
    %516 = vmatprep.subr.mxu0 0.0
    %517 = vmatpush1.msra.mxu0 %v495
    %518 = vmatprep.subr.mxu0 0.0
    %519 = vmatpush1.msra.mxu0 %v496
    %520 = vmatprep.subr.mxu0 0.0
    %521 = vmatpush1.msra.mxu0 %v497
    %522 = vmatprep.subr.mxu0 0.0
    %523 = vmatpush1.msra.mxu0 %v498
    %524 = vmatprep.subr.mxu0 0.0
    %525 = vmatpush1.msra.mxu0 %v499
    %526 = vmatprep.subr.mxu0 0.0
    %527 = vmatpush1.msra.mxu0 %v500
    %528 = vmatprep.subr.mxu0 0.0
    %529 = vmatpush1.msra.mxu0 %v501
    %530 = vmatprep.subr.mxu0 0.0
    %531 = vmatpush1.msra.mxu0 %v502
    %532 = vmatprep.subr.mxu0 0.0
    %533 = vmatpush1.msra.mxu0 %v503
    %534 = vmatprep.subr.mxu0 0.0
    %535 = vmatpush1.msra.mxu0 %v504
    %536 = vmatprep.subr.mxu0 0.0
    %537 = vmatpush1.msra.mxu0 %v505
    %538 = vmatprep.subr.mxu0 0.0
    %539 = vmatpush1.msra.mxu0 0.0
    %540 = vmatprep.subr.mxu0 0.0
    %541 = vmatpush1.msra.mxu0 0.0
    %542 = vmatprep.subr.mxu0 0.0
    %543 = vmatpush1.msra.mxu0 0.0
    %544 = vmatprep.subr.mxu0 0.0
    %545 = vmatpush1.msra.mxu0 0.0
    %546 = vmatprep.subr.mxu0 0.0
    %547 = vmatpush1.msra.mxu0 0.0
    %548 = vmatprep.subr.mxu0 0.0
    %549 = vmatpush1.msra.mxu0 0.0
    %550 = vmatprep.subr.mxu0 0.0
    %551 = vmatpush1.msra.mxu0 0.0
    %552 = vmatprep.subr.mxu0 0.0
    %553 = vmatpush1.msra.mxu0 0.0
    %554 = vmatprep.subr.mxu0 0.0
    %555 = vmatpush1.msra.mxu0 0.0
    %556 = vmatprep.subr.mxu0 0.0
    %557 = vmatpush1.msra.mxu0 0.0
    %558 = vmatprep.subr.mxu0 0.0
    %559 = vmatpush1.msra.mxu0 0.0
    %560 = vmatprep.subr.mxu0 0.0
    %561 = vmatpush1.msra.mxu0 0.0
    %562 = vmatprep.subr.mxu0 0.0
    %563 = vmatpush1.msra.mxu0 0.0
    %564 = vmatprep.subr.mxu0 0.0
    %565 = vmatpush1.msra.mxu0 0.0
    %566 = vmatprep.subr.mxu0 0.0
    %567 = vmatpush1.msra.mxu0 0.0
    %568 = vmatprep.subr.mxu0 0.0
    %569 = vmatpush1.msra.mxu0 0.0
    %570 = vmatprep.mubr.f32.mxu0 0.0
    %571 = vmatmul.mubr.f32.gmra.mrb[0].mxu0 %v487
    %v572 = vpop.f32.mrb[0].mxu0
    %v573 = vadd.f32 0.0, %v572
    %v574 = vpop.f32.mrb[0].mxu0
    %575 = vmatprep.mubr.f32.mxu0 0.0
    %576 = vmatmul.mubr.f32.gmra.mrb[0].mxu0 %v488
    %v577 = vpop.f32.mrb[0].mxu0
    %v578 = vadd.f32 0.0, %v577
    %v579 = vpop.f32.mrb[0].mxu0
    %580 = vmatprep.mubr.f32.mxu0 0.0
    %581 = vmatmul.mubr.f32.gmra.mrb[0].mxu0 %v489
    %v582 = vpop.f32.mrb[0].mxu0
    %v583 = vadd.f32 0.0, %v582
    %v584 = vpop.f32.mrb[0].mxu0
    %585 = vdwg.mxu0
    %v586 = vld [vmem:[%s5] sm:$0xff]
    %v587 = vld [vmem:[%s5 + $0x8] sm:$0xff]
    %v588 = vld [vmem:[%s5 + $0x10] sm:$0xff]
    %v589 = vld [vmem:[%s5 + $0x18] sm:$0xff]
    %v590 = vld [vmem:[%s5 + $0x20] sm:$0xff]
    %v591 = vld [vmem:[%s5 + $0x28] sm:$0xff]
    %v592 = vld [vmem:[%s5 + $0x30] sm:$0xff]
    %v593 = vld [vmem:[%s5 + $0x38] sm:$0xff]
    %v595 = vsel %vm342, %v472, 0
    %v598 = vsel %vm342, %v473, 0
    %v601 = vsel %vm342, %v474, 0
    %603 = vmatprep.subr.mxu0 0.0
    %604 = vmatpush1.msra.mxu0 %v586
    %605 = vmatprep.subr.mxu0 0.0
    %606 = vmatpush1.msra.mxu0 %v587
    %607 = vmatprep.subr.mxu0 0.0
    %608 = vmatpush1.msra.mxu0 %v588
    %609 = vmatprep.subr.mxu0 0.0
    %610 = vmatpush1.msra.mxu0 %v589
    %611 = vmatprep.subr.mxu0 0.0
    %612 = vmatpush1.msra.mxu0 %v590
    %613 = vmatprep.subr.mxu0 0.0
    %614 = vmatpush1.msra.mxu0 %v591
    %615 = vmatprep.subr.mxu0 0.0
    %616 = vmatpush1.msra.mxu0 %v592
    %617 = vmatprep.subr.mxu0 0.0
    %618 = vmatpush1.msra.mxu0 %v593
    %619 = vmatprep.subr.mxu0 0.0
    %620 = vmatpush1.msra.mxu0 %v490
    %621 = vmatprep.subr.mxu0 0.0
    %622 = vmatpush1.msra.mxu0 %v491
    %623 = vmatprep.subr.mxu0 0.0
    %624 = vmatpush1.msra.mxu0 %v492
    %625 = vmatprep.subr.mxu0 0.0
    %626 = vmatpush1.msra.mxu0 %v493
    %627 = vmatprep.subr.mxu0 0.0
    %628 = vmatpush1.msra.mxu0 %v494
    %629 = vmatprep.subr.mxu0 0.0
    %630 = vmatpush1.msra.mxu0 %v495
    %631 = vmatprep.subr.mxu0 0.0
    %632 = vmatpush1.msra.mxu0 %v496
    %633 = vmatprep.subr.mxu0 0.0
    %634 = vmatpush1.msra.mxu0 %v497
    %635 = vmatprep.subr.mxu0 0.0
    %636 = vmatpush1.msra.mxu0 %v498
    %637 = vmatprep.subr.mxu0 0.0
    %638 = vmatpush1.msra.mxu0 %v499
    %639 = vmatprep.subr.mxu0 0.0
    %640 = vmatpush1.msra.mxu0 %v500
    %641 = vmatprep.subr.mxu0 0.0
    %642 = vmatpush1.msra.mxu0 %v501
    %643 = vmatprep.subr.mxu0 0.0
    %644 = vmatpush1.msra.mxu0 %v502
    %645 = vmatprep.subr.mxu0 0.0
    %646 = vmatpush1.msra.mxu0 %v503
    %647 = vmatprep.subr.mxu0 0.0
    %648 = vmatpush1.msra.mxu0 %v504
    %649 = vmatprep.subr.mxu0 0.0
    %650 = vmatpush1.msra.mxu0 %v505
    %651 = vmatprep.subr.mxu0 0.0
    %652 = vmatpush1.msra.mxu0 0.0
    %653 = vmatprep.subr.mxu0 0.0
    %654 = vmatpush1.msra.mxu0 0.0
    %655 = vmatprep.subr.mxu0 0.0
    %656 = vmatpush1.msra.mxu0 0.0
    %657 = vmatprep.subr.mxu0 0.0
    %658 = vmatpush1.msra.mxu0 0.0
    %659 = vmatprep.subr.mxu0 0.0
    %660 = vmatpush1.msra.mxu0 0.0
    %661 = vmatprep.subr.mxu0 0.0
    %662 = vmatpush1.msra.mxu0 0.0
    %663 = vmatprep.subr.mxu0 0.0
    %664 = vmatpush1.msra.mxu0 0.0
    %665 = vmatprep.subr.mxu0 0.0
    %666 = vmatpush1.msra.mxu0 0.0
    %667 = vmatprep.mubr.f32.mxu0 %v595
    %668 = vmatmul.mubr.f32.gmra.mrb[0].mxu0 %v487
    %v669 = vpop.f32.mrb[0].mxu0
    %v670 = vadd.f32 0.0, %v669
    %v671 = vpop.f32.mrb[0].mxu0
    %672 = vmatprep.mubr.f32.mxu0 %v598
    %673 = vmatmul.mubr.f32.gmra.mrb[0].mxu0 %v488
    %v674 = vpop.f32.mrb[0].mxu0
    %v675 = vadd.f32 0.0, %v674
    %v676 = vpop.f32.mrb[0].mxu0
    %677 = vmatprep.mubr.f32.mxu0 %v601
    %678 = vmatmul.mubr.f32.gmra.mrb[0].mxu0 %v489
    %v679 = vpop.f32.mrb[0].mxu0
    %v680 = vadd.f32 0.0, %v679
    %v681 = vpop.f32.mrb[0].mxu0
    %682 = vdwg.mxu0
    %683 = vrot.lane.b32.xlu0 %v472, 64
    %v684 = vpop.permute.xlu0 %683
    %685 = vrot.lane.b32.xlu0 %v473, 64
    %v686 = vpop.permute.xlu0 %685
    %687 = vrot.lane.b32.xlu0 %v474, 64
    %v688 = vpop.permute.xlu0 %687
    %v692 = vsel %vm342, %v463, %v684
    %v693 = vsel %vm342, %v464, %v686
    %v694 = vsel %vm342, %v465, %v688
    %v695 = vld [vmem:[%s5] sm:$0xff]
    %v696 = vld [vmem:[%s5 + $0x8] sm:$0xff]
    %v697 = vld [vmem:[%s5 + $0x10] sm:$0xff]
    %v698 = vld [vmem:[%s5 + $0x18] sm:$0xff]
    %v699 = vld [vmem:[%s5 + $0x20] sm:$0xff]
    %v700 = vld [vmem:[%s5 + $0x28] sm:$0xff]
    %v701 = vld [vmem:[%s5 + $0x30] sm:$0xff]
    %v702 = vld [vmem:[%s5 + $0x38] sm:$0xff]
    %v703 = vld [vmem:[%s5 + $0x40] sm:$0xff]
    %v704 = vld [vmem:[%s5 + $0x48] sm:$0xff]
    %v705 = vld [vmem:[%s5 + $0x50] sm:$0xff]
    %v706 = vld [vmem:[%s5 + $0x58] sm:$0xff]
    %v707 = vld [vmem:[%s5 + $0x60] sm:$0xff]
    %v708 = vld [vmem:[%s5 + $0x68] sm:$0xff]
    %v709 = vld [vmem:[%s5 + $0x70] sm:$0xff]
    %v710 = vld [vmem:[%s5 + $0x78] sm:$0xff]
    %711 = vmatprep.subr.mxu0 0.0
    %712 = vmatpush1.msra.mxu0 %v695
    %713 = vmatprep.subr.mxu0 0.0
    %714 = vmatpush1.msra.mxu0 %v696
    %715 = vmatprep.subr.mxu0 0.0
    %716 = vmatpush1.msra.mxu0 %v697
    %717 = vmatprep.subr.mxu0 0.0
    %718 = vmatpush1.msra.mxu0 %v698
    %719 = vmatprep.subr.mxu0 0.0
    %720 = vmatpush1.msra.mxu0 %v699
    %721 = vmatprep.subr.mxu0 0.0
    %722 = vmatpush1.msra.mxu0 %v700
    %723 = vmatprep.subr.mxu0 0.0
    %724 = vmatpush1.msra.mxu0 %v701
    %725 = vmatprep.subr.mxu0 0.0
    %726 = vmatpush1.msra.mxu0 %v702
    %727 = vmatprep.subr.mxu0 0.0
    %728 = vmatpush1.msra.mxu0 %v703
    %729 = vmatprep.subr.mxu0 0.0
    %730 = vmatpush1.msra.mxu0 %v704
    %731 = vmatprep.subr.mxu0 0.0
    %732 = vmatpush1.msra.mxu0 %v705
    %733 = vmatprep.subr.mxu0 0.0
    %734 = vmatpush1.msra.mxu0 %v706
    %735 = vmatprep.subr.mxu0 0.0
    %736 = vmatpush1.msra.mxu0 %v707
    %737 = vmatprep.subr.mxu0 0.0
    %738 = vmatpush1.msra.mxu0 %v708
    %739 = vmatprep.subr.mxu0 0.0
    %740 = vmatpush1.msra.mxu0 %v709
    %741 = vmatprep.subr.mxu0 0.0
    %742 = vmatpush1.msra.mxu0 %v710
    %743 = vmatprep.subr.mxu0 0.0
    %744 = vmatpush1.msra.mxu0 0.0
    %745 = vmatprep.subr.mxu0 0.0
    %746 = vmatpush1.msra.mxu0 0.0
    %747 = vmatprep.subr.mxu0 0.0
    %748 = vmatpush1.msra.mxu0 0.0
    %749 = vmatprep.subr.mxu0 0.0
    %750 = vmatpush1.msra.mxu0 0.0
    %751 = vmatprep.subr.mxu0 0.0
    %752 = vmatpush1.msra.mxu0 0.0
    %753 = vmatprep.subr.mxu0 0.0
    %754 = vmatpush1.msra.mxu0 0.0
    %755 = vmatprep.subr.mxu0 0.0
    %756 = vmatpush1.msra.mxu0 0.0
    %757 = vmatprep.subr.mxu0 0.0
    %758 = vmatpush1.msra.mxu0 0.0
    %759 = vmatprep.subr.mxu0 0.0
    %760 = vmatpush1.msra.mxu0 0.0
    %761 = vmatprep.subr.mxu0 0.0
    %762 = vmatpush1.msra.mxu0 0.0
    %763 = vmatprep.subr.mxu0 0.0
    %764 = vmatpush1.msra.mxu0 0.0
    %765 = vmatprep.subr.mxu0 0.0
    %766 = vmatpush1.msra.mxu0 0.0
    %767 = vmatprep.subr.mxu0 0.0
    %768 = vmatpush1.msra.mxu0 0.0
    %769 = vmatprep.subr.mxu0 0.0
    %770 = vmatpush1.msra.mxu0 0.0
    %771 = vmatprep.subr.mxu0 0.0
    %772 = vmatpush1.msra.mxu0 0.0
    %773 = vmatprep.subr.mxu0 0.0
    %774 = vmatpush1.msra.mxu0 0.0
    %775 = vmatprep.mubr.f32.mxu0 0.0
    %776 = vmatmul.mubr.f32.gmra.mrb[0].mxu0 %v692
    %v777 = vpop.f32.mrb[0].mxu0
    %v778 = vadd.f32 0.0, %v777
    %v779 = vpop.f32.mrb[0].mxu0
    %780 = vmatprep.mubr.f32.mxu0 0.0
    %781 = vmatmul.mubr.f32.gmra.mrb[0].mxu0 %v693
    %v782 = vpop.f32.mrb[0].mxu0
    %v783 = vadd.f32 0.0, %v782
    %v784 = vpop.f32.mrb[0].mxu0
    %785 = vmatprep.mubr.f32.mxu0 0.0
    %786 = vmatmul.mubr.f32.gmra.mrb[0].mxu0 %v694
    %v787 = vpop.f32.mrb[0].mxu0
    %v788 = vadd.f32 0.0, %v787
    %v789 = vpop.f32.mrb[0].mxu0
    %790 = vdwg.mxu0
    %v791 = vsel %vm342, %v573, 0.0
    %v792 = vsel %vm342, %v578, 0.0
    %v793 = vadd.f32 %v791, %v792
    %v794 = vsel %vm346, %v583, 0.0
    %v795 = vadd.f32 %v793, %v794
    %v796 = vrot.slane %v795, 4
    %v797 = vadd.f32 %v795, %v796
    %v798 = vrot.slane %v797, 2
    %v799 = vadd.f32 %v797, %v798
    %v800 = vrot.slane %v799, 1
    %v801 = vadd.f32 %v799, %v800
    %v802 = vadd.f32 %v801, 0.0
    %v803 = vsel %vm342, %v670, 0.0
    %v804 = vsel %vm342, %v675, 0.0
    %v805 = vadd.f32 %v803, %v804
    %v806 = vsel %vm346, %v680, 0.0
    %v807 = vadd.f32 %v805, %v806
    %v808 = vrot.slane %v807, 4
    %v809 = vadd.f32 %v807, %v808
    %v810 = vrot.slane %v809, 2
    %v811 = vadd.f32 %v809, %v810
    %v812 = vrot.slane %v811, 1
    %v813 = vadd.f32 %v811, %v812
    %v814 = vadd.f32 %v802, %v813
    %v815 = vsel %vm342, %v778, 0.0
    %v816 = vsel %vm342, %v783, 0.0
    %v817 = vadd.f32 %v815, %v816
    %v818 = vsel %vm346, %v788, 0.0
    %v819 = vadd.f32 %v817, %v818
    %v820 = vrot.slane %v819, 4
    %v821 = vadd.f32 %v819, %v820
    %v822 = vrot.slane %v821, 2
    %v823 = vadd.f32 %v821, %v822
    %v824 = vrot.slane %v823, 1
    %v825 = vadd.f32 %v823, %v824
    %v826 = vadd.f32 %v814, %v825
    %v827 = vmul.f32 %v826, %v380
    %v828 = vsub.f32 %v573, %v827
    %v829 = vsub.f32 %v578, %v827
    %v830 = vsub.f32 %v583, %v827
    %v831 = vsub.f32 %v670, %v827
    %v832 = vsub.f32 %v675, %v827
    %v833 = vsub.f32 %v680, %v827
    %v834 = vsub.f32 %v778, %v827
    %v835 = vsub.f32 %v783, %v827
    %v836 = vsub.f32 %v788, %v827
    %v837 = vmul.f32 %v828, %v828
    %v838 = vmul.f32 %v829, %v829
    %v839 = vmul.f32 %v830, %v830
    %v840 = vsel %vm342, %v837, 0.0
    %v841 = vsel %vm342, %v838, 0.0
    %v842 = vadd.f32 %v840, %v841
    %v843 = vsel %vm346, %v839, 0.0
    %v844 = vadd.f32 %v842, %v843
    %v845 = vrot.slane %v844, 4
    %v846 = vadd.f32 %v844, %v845
    %v847 = vrot.slane %v846, 2
    %v848 = vadd.f32 %v846, %v847
    %v849 = vrot.slane %v848, 1
    %v850 = vadd.f32 %v848, %v849
    %v851 = vadd.f32 %v850, 0.0
    %v852 = vmul.f32 %v831, %v831
    %v853 = vmul.f32 %v832, %v832
    %v854 = vmul.f32 %v833, %v833
    %v855 = vsel %vm342, %v852, 0.0
    %v856 = vsel %vm342, %v853, 0.0
    %v857 = vadd.f32 %v855, %v856
    %v858 = vsel %vm346, %v854, 0.0
    %v859 = vadd.f32 %v857, %v858
    %v860 = vrot.slane %v859, 4
    %v861 = vadd.f32 %v859, %v860
    %v862 = vrot.slane %v861, 2
    %v863 = vadd.f32 %v861, %v862
    %v864 = vrot.slane %v863, 1
    %v865 = vadd.f32 %v863, %v864
    %v866 = vadd.f32 %v851, %v865
    %v867 = vmul.f32 %v834, %v834
    %v868 = vmul.f32 %v835, %v835
    %v869 = vmul.f32 %v836, %v836
    %v870 = vsel %vm342, %v867, 0.0
    %v871 = vsel %vm342, %v868, 0.0
    %v872 = vadd.f32 %v870, %v871
    %v873 = vsel %vm346, %v869, 0.0
    %v874 = vadd.f32 %v872, %v873
    %v875 = vrot.slane %v874, 4
    %v876 = vadd.f32 %v874, %v875
    %v877 = vrot.slane %v876, 2
    %v878 = vadd.f32 %v876, %v877
    %v879 = vrot.slane %v878, 1
    %v880 = vadd.f32 %v878, %v879
    %v881 = vadd.f32 %v866, %v880
    %v882 = vmul.f32 %v881, %v380
    %v883 = vadd.f32 %v882, 1e-05
    %v884 = vrsqrt.pop %v883
    %v885 = vmul.f32 %v884, %v48
    %v886 = vlaneseq
    %v887 = vshrl.u32 %v886, 7
    %v888 = vsub.s32 1, %v887
    %v889 = vrot.slane %v885, %v888
    %v890 = vmul.f32 %v828, %v889
    %v891 = vmul.f32 %v829, %v889
    %v892 = vmul.f32 %v830, %v889
    %v893 = vlaneseq
    %v894 = vshrl.u32 %v893, 7
    %v895 = vsub.s32 1, %v894
    %v896 = vrot.slane %v49, %v895
    %v897 = vadd.f32 %v890, %v896
    %v898 = vadd.f32 %v891, %v896
    %v899 = vadd.f32 %v892, %v896
    %v900 = vmax.f32 %v897, 0.0
    %v901 = vmax.f32 %v898, 0.0
    %v902 = vmax.f32 %v899, 0.0
    %v903 = vmul.f32 %v831, %v889
    %v904 = vmul.f32 %v832, %v889
    %v905 = vmul.f32 %v833, %v889
    %v906 = vadd.f32 %v903, %v896
    %v907 = vadd.f32 %v904, %v896
    %v908 = vadd.f32 %v905, %v896
    %v909 = vmax.f32 %v906, 0.0
    %v910 = vmax.f32 %v907, 0.0
    %v911 = vmax.f32 %v908, 0.0
    %v912 = vmul.f32 %v834, %v889
    %v913 = vmul.f32 %v835, %v889
    %v914 = vmul.f32 %v836, %v889
    %v915 = vadd.f32 %v912, %v896
    %v916 = vadd.f32 %v913, %v896
    %v917 = vadd.f32 %v914, %v896
    %v918 = vmax.f32 %v915, 0.0
    %v919 = vmax.f32 %v916, 0.0
    %v920 = vmax.f32 %v917, 0.0
    %924 = vrot.lane.b32.xlu0 %v909, 64
    %v925 = vpop.permute.xlu0 %924
    %926 = vrot.lane.b32.xlu0 %v910, 64
    %v927 = vpop.permute.xlu0 %926
    %928 = vrot.lane.b32.xlu0 %v911, 64
    %v929 = vpop.permute.xlu0 %928
    %v933 = vsel %vm342, %v900, %v925
    %v934 = vsel %vm342, %v901, %v927
    %v935 = vsel %vm342, %v902, %v929
    %v936 = vld [vmem:[%s6 + $0x40] sm:$0xff]
    %v937 = vld [vmem:[%s6 + $0x48] sm:$0xff]
    %v938 = vld [vmem:[%s6 + $0x50] sm:$0xff]
    %v939 = vld [vmem:[%s6 + $0x58] sm:$0xff]
    %v940 = vld [vmem:[%s6 + $0x60] sm:$0xff]
    %v941 = vld [vmem:[%s6 + $0x68] sm:$0xff]
    %v942 = vld [vmem:[%s6 + $0x70] sm:$0xff]
    %v943 = vld [vmem:[%s6 + $0x78] sm:$0xff]
    %v944 = vld [vmem:[%s6 + $0x80] sm:$0xff]
    %v945 = vld [vmem:[%s6 + $0x88] sm:$0xff]
    %v946 = vld [vmem:[%s6 + $0x90] sm:$0xff]
    %v947 = vld [vmem:[%s6 + $0x98] sm:$0xff]
    %v948 = vld [vmem:[%s6 + $0xa0] sm:$0xff]
    %v949 = vld [vmem:[%s6 + $0xa8] sm:$0xff]
    %v950 = vld [vmem:[%s6 + $0xb0] sm:$0xff]
    %v951 = vld [vmem:[%s6 + $0xb8] sm:$0xff]
    %v952 = vld [vmem:[%s6] sm:$0xff]
    %v953 = vld [vmem:[%s6 + $0x8] sm:$0xff]
    %v954 = vld [vmem:[%s6 + $0x10] sm:$0xff]
    %v955 = vld [vmem:[%s6 + $0x18] sm:$0xff]
    %v956 = vld [vmem:[%s6 + $0x20] sm:$0xff]
    %v957 = vld [vmem:[%s6 + $0x28] sm:$0xff]
    %v958 = vld [vmem:[%s6 + $0x30] sm:$0xff]
    %v959 = vld [vmem:[%s6 + $0x38] sm:$0xff]
    %963 = vrot.lane.b32.xlu0 %v918, 64
    %v964 = vpop.permute.xlu0 %963
    %965 = vrot.lane.b32.xlu0 %v919, 64
    %v966 = vpop.permute.xlu0 %965
    %967 = vrot.lane.b32.xlu0 %v920, 64
    %v968 = vpop.permute.xlu0 %967
    %v972 = vsel %vm342, %v909, %v964
    %v973 = vsel %vm342, %v910, %v966
    %v974 = vsel %vm342, %v911, %v968
    %975 = vmatprep.subr.mxu0 0.0
    %976 = vmatpush1.msra.mxu0 %v936
    %977 = vmatprep.subr.mxu0 0.0
    %978 = vmatpush1.msra.mxu0 %v937
    %979 = vmatprep.subr.mxu0 0.0
    %980 = vmatpush1.msra.mxu0 %v938
    %981 = vmatprep.subr.mxu0 0.0
    %982 = vmatpush1.msra.mxu0 %v939
    %983 = vmatprep.subr.mxu0 0.0
    %984 = vmatpush1.msra.mxu0 %v940
    %985 = vmatprep.subr.mxu0 0.0
    %986 = vmatpush1.msra.mxu0 %v941
    %987 = vmatprep.subr.mxu0 0.0
    %988 = vmatpush1.msra.mxu0 %v942
    %989 = vmatprep.subr.mxu0 0.0
    %990 = vmatpush1.msra.mxu0 %v943
    %991 = vmatprep.subr.mxu0 0.0
    %992 = vmatpush1.msra.mxu0 %v944
    %993 = vmatprep.subr.mxu0 0.0
    %994 = vmatpush1.msra.mxu0 %v945
    %995 = vmatprep.subr.mxu0 0.0
    %996 = vmatpush1.msra.mxu0 %v946
    %997 = vmatprep.subr.mxu0 0.0
    %998 = vmatpush1.msra.mxu0 %v947
    %999 = vmatprep.subr.mxu0 0.0
    %1000 = vmatpush1.msra.mxu0 %v948
    %1001 = vmatprep.subr.mxu0 0.0
    %1002 = vmatpush1.msra.mxu0 %v949
    %1003 = vmatprep.subr.mxu0 0.0
    %1004 = vmatpush1.msra.mxu0 %v950
    %1005 = vmatprep.subr.mxu0 0.0
    %1006 = vmatpush1.msra.mxu0 %v951
    %1007 = vmatprep.subr.mxu0 0.0
    %1008 = vmatpush1.msra.mxu0 0.0
    %1009 = vmatprep.subr.mxu0 0.0
    %1010 = vmatpush1.msra.mxu0 0.0
    %1011 = vmatprep.subr.mxu0 0.0
    %1012 = vmatpush1.msra.mxu0 0.0
    %1013 = vmatprep.subr.mxu0 0.0
    %1014 = vmatpush1.msra.mxu0 0.0
    %1015 = vmatprep.subr.mxu0 0.0
    %1016 = vmatpush1.msra.mxu0 0.0
    %1017 = vmatprep.subr.mxu0 0.0
    %1018 = vmatpush1.msra.mxu0 0.0
    %1019 = vmatprep.subr.mxu0 0.0
    %1020 = vmatpush1.msra.mxu0 0.0
    %1021 = vmatprep.subr.mxu0 0.0
    %1022 = vmatpush1.msra.mxu0 0.0
    %1023 = vmatprep.subr.mxu0 0.0
    %1024 = vmatpush1.msra.mxu0 0.0
    %1025 = vmatprep.subr.mxu0 0.0
    %1026 = vmatpush1.msra.mxu0 0.0
    %1027 = vmatprep.subr.mxu0 0.0
    %1028 = vmatpush1.msra.mxu0 0.0
    %1029 = vmatprep.subr.mxu0 0.0
    %1030 = vmatpush1.msra.mxu0 0.0
    %1031 = vmatprep.subr.mxu0 0.0
    %1032 = vmatpush1.msra.mxu0 0.0
    %1033 = vmatprep.subr.mxu0 0.0
    %1034 = vmatpush1.msra.mxu0 0.0
    %1035 = vmatprep.subr.mxu0 0.0
    %1036 = vmatpush1.msra.mxu0 0.0
    %1037 = vmatprep.subr.mxu0 0.0
    %1038 = vmatpush1.msra.mxu0 0.0
    %1039 = vmatprep.mubr.f32.mxu0 0.0
    %1040 = vmatmul.mubr.f32.gmra.mrb[0].mxu0 %v933
    %v1041 = vpop.f32.mrb[0].mxu0
    %v1042 = vadd.f32 %v143, %v1041
    %v1043 = vpop.f32.mrb[0].mxu0
    %1044 = vmatprep.mubr.f32.mxu0 0.0
    %1045 = vmatmul.mubr.f32.gmra.mrb[0].mxu0 %v934
    %v1046 = vpop.f32.mrb[0].mxu0
    %v1047 = vadd.f32 %v148, %v1046
    %v1048 = vpop.f32.mrb[0].mxu0
    %1049 = vmatprep.mubr.f32.mxu0 0.0
    %1050 = vmatmul.mubr.f32.gmra.mrb[0].mxu0 %v935
    %v1051 = vpop.f32.mrb[0].mxu0
    %v1052 = vadd.f32 %v153, %v1051
    %v1053 = vpop.f32.mrb[0].mxu0
    %1054 = vdwg.mxu0
    %v1055 = vsel %vm342, %v918, 0
    %v1057 = vsel %vm342, %v919, 0
    %v1059 = vsel %vm342, %v920, 0
    %1061 = vmatprep.subr.mxu0 0.0
    %1062 = vmatpush1.msra.mxu0 %v952
    %1063 = vmatprep.subr.mxu0 0.0
    %1064 = vmatpush1.msra.mxu0 %v953
    %1065 = vmatprep.subr.mxu0 0.0
    %1066 = vmatpush1.msra.mxu0 %v954
    %1067 = vmatprep.subr.mxu0 0.0
    %1068 = vmatpush1.msra.mxu0 %v955
    %1069 = vmatprep.subr.mxu0 0.0
    %1070 = vmatpush1.msra.mxu0 %v956
    %1071 = vmatprep.subr.mxu0 0.0
    %1072 = vmatpush1.msra.mxu0 %v957
    %1073 = vmatprep.subr.mxu0 0.0
    %1074 = vmatpush1.msra.mxu0 %v958
    %1075 = vmatprep.subr.mxu0 0.0
    %1076 = vmatpush1.msra.mxu0 %v959
    %1077 = vmatprep.subr.mxu0 0.0
    %1078 = vmatpush1.msra.mxu0 %v936
    %1079 = vmatprep.subr.mxu0 0.0
    %1080 = vmatpush1.msra.mxu0 %v937
    %1081 = vmatprep.subr.mxu0 0.0
    %1082 = vmatpush1.msra.mxu0 %v938
    %1083 = vmatprep.subr.mxu0 0.0
    %1084 = vmatpush1.msra.mxu0 %v939
    %1085 = vmatprep.subr.mxu0 0.0
    %1086 = vmatpush1.msra.mxu0 %v940
    %1087 = vmatprep.subr.mxu0 0.0
    %1088 = vmatpush1.msra.mxu0 %v941
    %1089 = vmatprep.subr.mxu0 0.0
    %1090 = vmatpush1.msra.mxu0 %v942
    %1091 = vmatprep.subr.mxu0 0.0
    %1092 = vmatpush1.msra.mxu0 %v943
    %1093 = vmatprep.subr.mxu0 0.0
    %1094 = vmatpush1.msra.mxu0 %v944
    %1095 = vmatprep.subr.mxu0 0.0
    %1096 = vmatpush1.msra.mxu0 %v945
    %1097 = vmatprep.subr.mxu0 0.0
    %1098 = vmatpush1.msra.mxu0 %v946
    %1099 = vmatprep.subr.mxu0 0.0
    %1100 = vmatpush1.msra.mxu0 %v947
    %1101 = vmatprep.subr.mxu0 0.0
    %1102 = vmatpush1.msra.mxu0 %v948
    %1103 = vmatprep.subr.mxu0 0.0
    %1104 = vmatpush1.msra.mxu0 %v949
    %1105 = vmatprep.subr.mxu0 0.0
    %1106 = vmatpush1.msra.mxu0 %v950
    %1107 = vmatprep.subr.mxu0 0.0
    %1108 = vmatpush1.msra.mxu0 %v951
    %1109 = vmatprep.subr.mxu0 0.0
    %1110 = vmatpush1.msra.mxu0 0.0
    %1111 = vmatprep.subr.mxu0 0.0
    %1112 = vmatpush1.msra.mxu0 0.0
    %1113 = vmatprep.subr.mxu0 0.0
    %1114 = vmatpush1.msra.mxu0 0.0
    %1115 = vmatprep.subr.mxu0 0.0
    %1116 = vmatpush1.msra.mxu0 0.0
    %1117 = vmatprep.subr.mxu0 0.0
    %1118 = vmatpush1.msra.mxu0 0.0
    %1119 = vmatprep.subr.mxu0 0.0
    %1120 = vmatpush1.msra.mxu0 0.0
    %1121 = vmatprep.subr.mxu0 0.0
    %1122 = vmatpush1.msra.mxu0 0.0
    %1123 = vmatprep.subr.mxu0 0.0
    %1124 = vmatpush1.msra.mxu0 0.0
    %1125 = vmatprep.mubr.f32.mxu0 %v1055
    %1126 = vmatmul.mubr.f32.gmra.mrb[0].mxu0 %v933
    %v1127 = vpop.f32.mrb[0].mxu0
    %v1128 = vadd.f32 %v236, %v1127
    %v1129 = vpop.f32.mrb[0].mxu0
    %1130 = vmatprep.mubr.f32.mxu0 %v1057
    %1131 = vmatmul.mubr.f32.gmra.mrb[0].mxu0 %v934
    %v1132 = vpop.f32.mrb[0].mxu0
    %v1133 = vadd.f32 %v241, %v1132
    %v1134 = vpop.f32.mrb[0].mxu0
    %1135 = vmatprep.mubr.f32.mxu0 %v1059
    %1136 = vmatmul.mubr.f32.gmra.mrb[0].mxu0 %v935
    %v1137 = vpop.f32.mrb[0].mxu0
    %v1138 = vadd.f32 %v246, %v1137
    %v1139 = vpop.f32.mrb[0].mxu0
    %1140 = vdwg.mxu0
    %1141 = vmatprep.subr.mxu0 0.0
    %1142 = vmatpush1.msra.mxu0 %v952
    %1143 = vmatprep.subr.mxu0 0.0
    %1144 = vmatpush1.msra.mxu0 %v953
    %1145 = vmatprep.subr.mxu0 0.0
    %1146 = vmatpush1.msra.mxu0 %v954
    %1147 = vmatprep.subr.mxu0 0.0
    %1148 = vmatpush1.msra.mxu0 %v955
    %1149 = vmatprep.subr.mxu0 0.0
    %1150 = vmatpush1.msra.mxu0 %v956
    %1151 = vmatprep.subr.mxu0 0.0
    %1152 = vmatpush1.msra.mxu0 %v957
    %1153 = vmatprep.subr.mxu0 0.0
    %1154 = vmatpush1.msra.mxu0 %v958
    %1155 = vmatprep.subr.mxu0 0.0
    %1156 = vmatpush1.msra.mxu0 %v959
    %1157 = vmatprep.subr.mxu0 0.0
    %1158 = vmatpush1.msra.mxu0 %v936
    %1159 = vmatprep.subr.mxu0 0.0
    %1160 = vmatpush1.msra.mxu0 %v937
    %1161 = vmatprep.subr.mxu0 0.0
    %1162 = vmatpush1.msra.mxu0 %v938
    %1163 = vmatprep.subr.mxu0 0.0
    %1164 = vmatpush1.msra.mxu0 %v939
    %1165 = vmatprep.subr.mxu0 0.0
    %1166 = vmatpush1.msra.mxu0 %v940
    %1167 = vmatprep.subr.mxu0 0.0
    %1168 = vmatpush1.msra.mxu0 %v941
    %1169 = vmatprep.subr.mxu0 0.0
    %1170 = vmatpush1.msra.mxu0 %v942
    %1171 = vmatprep.subr.mxu0 0.0
    %1172 = vmatpush1.msra.mxu0 %v943
    %1173 = vmatprep.subr.mxu0 0.0
    %1174 = vmatpush1.msra.mxu0 0.0
    %1175 = vmatprep.subr.mxu0 0.0
    %1176 = vmatpush1.msra.mxu0 0.0
    %1177 = vmatprep.subr.mxu0 0.0
    %1178 = vmatpush1.msra.mxu0 0.0
    %1179 = vmatprep.subr.mxu0 0.0
    %1180 = vmatpush1.msra.mxu0 0.0
    %1181 = vmatprep.subr.mxu0 0.0
    %1182 = vmatpush1.msra.mxu0 0.0
    %1183 = vmatprep.subr.mxu0 0.0
    %1184 = vmatpush1.msra.mxu0 0.0
    %1185 = vmatprep.subr.mxu0 0.0
    %1186 = vmatpush1.msra.mxu0 0.0
    %1187 = vmatprep.subr.mxu0 0.0
    %1188 = vmatpush1.msra.mxu0 0.0
    %1189 = vmatprep.subr.mxu0 0.0
    %1190 = vmatpush1.msra.mxu0 0.0
    %1191 = vmatprep.subr.mxu0 0.0
    %1192 = vmatpush1.msra.mxu0 0.0
    %1193 = vmatprep.subr.mxu0 0.0
    %1194 = vmatpush1.msra.mxu0 0.0
    %1195 = vmatprep.subr.mxu0 0.0
    %1196 = vmatpush1.msra.mxu0 0.0
    %1197 = vmatprep.subr.mxu0 0.0
    %1198 = vmatpush1.msra.mxu0 0.0
    %1199 = vmatprep.subr.mxu0 0.0
    %1200 = vmatpush1.msra.mxu0 0.0
    %1201 = vmatprep.subr.mxu0 0.0
    %1202 = vmatpush1.msra.mxu0 0.0
    %1203 = vmatprep.subr.mxu0 0.0
    %1204 = vmatpush1.msra.mxu0 0.0
    %1205 = vmatprep.mubr.f32.mxu0 0.0
    %1206 = vmatmul.mubr.f32.gmra.mrb[0].mxu0 %v972
    %v1207 = vpop.f32.mrb[0].mxu0
    %v1208 = vadd.f32 %v329, %v1207
    %v1209 = vpop.f32.mrb[0].mxu0
    %1210 = vmatprep.mubr.f32.mxu0 0.0
    %1211 = vmatmul.mubr.f32.gmra.mrb[0].mxu0 %v973
    %v1212 = vpop.f32.mrb[0].mxu0
    %v1213 = vadd.f32 %v334, %v1212
    %v1214 = vpop.f32.mrb[0].mxu0
    %1215 = vmatprep.mubr.f32.mxu0 0.0
    %1216 = vmatmul.mubr.f32.gmra.mrb[0].mxu0 %v974
    %v1217 = vpop.f32.mrb[0].mxu0
    %v1218 = vadd.f32 %v339, %v1217
    %v1219 = vpop.f32.mrb[0].mxu0
    %1220 = vdwg.mxu0
    %v1221 = vsel %vm342, %v1042, 0.0
    %v1222 = vsel %vm342, %v1047, 0.0
    %v1223 = vadd.f32 %v1221, %v1222
    %v1224 = vsel %vm346, %v1052, 0.0
    %v1225 = vadd.f32 %v1223, %v1224
    %v1226 = vrot.slane %v1225, 4
    %v1227 = vadd.f32 %v1225, %v1226
    %v1228 = vrot.slane %v1227, 2
    %v1229 = vadd.f32 %v1227, %v1228
    %v1230 = vrot.slane %v1229, 1
    %v1231 = vadd.f32 %v1229, %v1230
    %v1232 = vadd.f32 %v1231, 0.0
    %v1233 = vsel %vm342, %v1128, 0.0
    %v1234 = vsel %vm342, %v1133, 0.0
    %v1235 = vadd.f32 %v1233, %v1234
    %v1236 = vsel %vm346, %v1138, 0.0
    %v1237 = vadd.f32 %v1235, %v1236
    %v1238 = vrot.slane %v1237, 4
    %v1239 = vadd.f32 %v1237, %v1238
    %v1240 = vrot.slane %v1239, 2
    %v1241 = vadd.f32 %v1239, %v1240
    %v1242 = vrot.slane %v1241, 1
    %v1243 = vadd.f32 %v1241, %v1242
    %v1244 = vadd.f32 %v1232, %v1243
    %v1245 = vsel %vm342, %v1208, 0.0
    %v1246 = vsel %vm342, %v1213, 0.0
    %v1247 = vadd.f32 %v1245, %v1246
    %v1248 = vsel %vm346, %v1218, 0.0
    %v1249 = vadd.f32 %v1247, %v1248
    %v1250 = vrot.slane %v1249, 4
    %v1251 = vadd.f32 %v1249, %v1250
    %v1252 = vrot.slane %v1251, 2
    %v1253 = vadd.f32 %v1251, %v1252
    %v1254 = vrot.slane %v1253, 1
    %v1255 = vadd.f32 %v1253, %v1254
    %v1256 = vadd.f32 %v1244, %v1255
    %v1257 = vmul.f32 %v1256, %v380
    %v1258 = vsub.f32 %v1042, %v1257
    %v1259 = vsub.f32 %v1047, %v1257
    %v1260 = vsub.f32 %v1052, %v1257
    %v1261 = vsub.f32 %v1128, %v1257
    %v1262 = vsub.f32 %v1133, %v1257
    %v1263 = vsub.f32 %v1138, %v1257
    %v1264 = vsub.f32 %v1208, %v1257
    %v1265 = vsub.f32 %v1213, %v1257
    %v1266 = vsub.f32 %v1218, %v1257
    %v1267 = vmul.f32 %v1258, %v1258
    %v1268 = vmul.f32 %v1259, %v1259
    %v1269 = vmul.f32 %v1260, %v1260
    %v1270 = vsel %vm342, %v1267, 0.0
    %v1271 = vsel %vm342, %v1268, 0.0
    %v1272 = vadd.f32 %v1270, %v1271
    %v1273 = vsel %vm346, %v1269, 0.0
    %v1274 = vadd.f32 %v1272, %v1273
    %v1275 = vrot.slane %v1274, 4
    %v1276 = vadd.f32 %v1274, %v1275
    %v1277 = vrot.slane %v1276, 2
    %v1278 = vadd.f32 %v1276, %v1277
    %v1279 = vrot.slane %v1278, 1
    %v1280 = vadd.f32 %v1278, %v1279
    %v1281 = vadd.f32 %v1280, 0.0
    %v1282 = vmul.f32 %v1261, %v1261
    %v1283 = vmul.f32 %v1262, %v1262
    %v1284 = vmul.f32 %v1263, %v1263
    %v1285 = vsel %vm342, %v1282, 0.0
    %v1286 = vsel %vm342, %v1283, 0.0
    %v1287 = vadd.f32 %v1285, %v1286
    %v1288 = vsel %vm346, %v1284, 0.0
    %v1289 = vadd.f32 %v1287, %v1288
    %v1290 = vrot.slane %v1289, 4
    %v1291 = vadd.f32 %v1289, %v1290
    %v1292 = vrot.slane %v1291, 2
    %v1293 = vadd.f32 %v1291, %v1292
    %v1294 = vrot.slane %v1293, 1
    %v1295 = vadd.f32 %v1293, %v1294
    %v1296 = vadd.f32 %v1281, %v1295
    %v1297 = vmul.f32 %v1264, %v1264
    %v1298 = vmul.f32 %v1265, %v1265
    %v1299 = vmul.f32 %v1266, %v1266
    %v1300 = vsel %vm342, %v1297, 0.0
    %v1301 = vsel %vm342, %v1298, 0.0
    %v1302 = vadd.f32 %v1300, %v1301
    %v1303 = vsel %vm346, %v1299, 0.0
    %v1304 = vadd.f32 %v1302, %v1303
    %v1305 = vrot.slane %v1304, 4
    %v1306 = vadd.f32 %v1304, %v1305
    %v1307 = vrot.slane %v1306, 2
    %v1308 = vadd.f32 %v1306, %v1307
    %v1309 = vrot.slane %v1308, 1
    %v1310 = vadd.f32 %v1308, %v1309
    %v1311 = vadd.f32 %v1296, %v1310
    %v1312 = vmul.f32 %v1311, %v380
    %v1313 = vadd.f32 %v1312, 1e-05
    %v1314 = vrsqrt.pop %v1313
    %v1315 = vmul.f32 %v1314, %v48
    %v1316 = vlaneseq
    %v1317 = vshrl.u32 %v1316, 7
    %v1318 = vsub.s32 2, %v1317
    %v1319 = vrot.slane %v1315, %v1318
    %v1320 = vmul.f32 %v1258, %v1319
    %v1321 = vmul.f32 %v1259, %v1319
    %v1322 = vmul.f32 %v1260, %v1319
    %v1323 = vlaneseq
    %v1324 = vshrl.u32 %v1323, 7
    %v1325 = vsub.s32 2, %v1324
    %v1326 = vrot.slane %v49, %v1325
    %v1327 = vadd.f32 %v1320, %v1326
    %v1328 = vadd.f32 %v1321, %v1326
    %v1329 = vadd.f32 %v1322, %v1326
    %v1330 = vmax.f32 %v1327, 0.0
    %v1331 = vmax.f32 %v1328, 0.0
    %v1332 = vmax.f32 %v1329, 0.0
    %v1333 = vmul.f32 %v1261, %v1319
    %v1334 = vmul.f32 %v1262, %v1319
    %v1335 = vmul.f32 %v1263, %v1319
    %v1336 = vadd.f32 %v1333, %v1326
    %v1337 = vadd.f32 %v1334, %v1326
    %v1338 = vadd.f32 %v1335, %v1326
    %v1339 = vmax.f32 %v1336, 0.0
    %v1340 = vmax.f32 %v1337, 0.0
    %v1341 = vmax.f32 %v1338, 0.0
    %v1342 = vmul.f32 %v1264, %v1319
    %v1343 = vmul.f32 %v1265, %v1319
    %v1344 = vmul.f32 %v1266, %v1319
    %v1345 = vadd.f32 %v1342, %v1326
    %v1346 = vadd.f32 %v1343, %v1326
    %v1347 = vadd.f32 %v1344, %v1326
    %v1348 = vmax.f32 %v1345, 0.0
    %v1349 = vmax.f32 %v1346, 0.0
    %v1350 = vmax.f32 %v1347, 0.0
    %1354 = vrot.lane.b32.xlu0 %v1339, 64
    %v1355 = vpop.permute.xlu0 %1354
    %1356 = vrot.lane.b32.xlu0 %v1340, 64
    %v1357 = vpop.permute.xlu0 %1356
    %1358 = vrot.lane.b32.xlu0 %v1341, 64
    %v1359 = vpop.permute.xlu0 %1358
    %v1363 = vsel %vm342, %v1330, %v1355
    %v1364 = vsel %vm342, %v1331, %v1357
    %v1365 = vsel %vm342, %v1332, %v1359
    %v1366 = vld [vmem:[%s7 + $0x40] sm:$0xff]
    %v1367 = vld [vmem:[%s7 + $0x48] sm:$0xff]
    %v1368 = vld [vmem:[%s7 + $0x50] sm:$0xff]
    %v1369 = vld [vmem:[%s7 + $0x58] sm:$0xff]
    %v1370 = vld [vmem:[%s7 + $0x60] sm:$0xff]
    %v1371 = vld [vmem:[%s7 + $0x68] sm:$0xff]
    %v1372 = vld [vmem:[%s7 + $0x70] sm:$0xff]
    %v1373 = vld [vmem:[%s7 + $0x78] sm:$0xff]
    %v1374 = vld [vmem:[%s7 + $0x80] sm:$0xff]
    %v1375 = vld [vmem:[%s7 + $0x88] sm:$0xff]
    %v1376 = vld [vmem:[%s7 + $0x90] sm:$0xff]
    %v1377 = vld [vmem:[%s7 + $0x98] sm:$0xff]
    %v1378 = vld [vmem:[%s7 + $0xa0] sm:$0xff]
    %v1379 = vld [vmem:[%s7 + $0xa8] sm:$0xff]
    %v1380 = vld [vmem:[%s7 + $0xb0] sm:$0xff]
    %v1381 = vld [vmem:[%s7 + $0xb8] sm:$0xff]
    %1382 = vmatprep.subr.mxu0 0.0
    %1383 = vmatpush1.msra.mxu0 %v1366
    %1384 = vmatprep.subr.mxu0 0.0
    %1385 = vmatpush1.msra.mxu0 %v1367
    %1386 = vmatprep.subr.mxu0 0.0
    %1387 = vmatpush1.msra.mxu0 %v1368
    %1388 = vmatprep.subr.mxu0 0.0
    %1389 = vmatpush1.msra.mxu0 %v1369
    %1390 = vmatprep.subr.mxu0 0.0
    %1391 = vmatpush1.msra.mxu0 %v1370
    %1392 = vmatprep.subr.mxu0 0.0
    %1393 = vmatpush1.msra.mxu0 %v1371
    %1394 = vmatprep.subr.mxu0 0.0
    %1395 = vmatpush1.msra.mxu0 %v1372
    %1396 = vmatprep.subr.mxu0 0.0
    %1397 = vmatpush1.msra.mxu0 %v1373
    %1398 = vmatprep.subr.mxu0 0.0
    %1399 = vmatpush1.msra.mxu0 %v1374
    %1400 = vmatprep.subr.mxu0 0.0
    %1401 = vmatpush1.msra.mxu0 %v1375
    %1402 = vmatprep.subr.mxu0 0.0
    %1403 = vmatpush1.msra.mxu0 %v1376
    %1404 = vmatprep.subr.mxu0 0.0
    %1405 = vmatpush1.msra.mxu0 %v1377
    %1406 = vmatprep.subr.mxu0 0.0
    %1407 = vmatpush1.msra.mxu0 %v1378
    %1408 = vmatprep.subr.mxu0 0.0
    %1409 = vmatpush1.msra.mxu0 %v1379
    %1410 = vmatprep.subr.mxu0 0.0
    %1411 = vmatpush1.msra.mxu0 %v1380
    %1412 = vmatprep.subr.mxu0 0.0
    %1413 = vmatpush1.msra.mxu0 %v1381
    %1414 = vmatprep.subr.mxu0 0.0
    %1415 = vmatpush1.msra.mxu0 0.0
    %1416 = vmatprep.subr.mxu0 0.0
    %1417 = vmatpush1.msra.mxu0 0.0
    %1418 = vmatprep.subr.mxu0 0.0
    %1419 = vmatpush1.msra.mxu0 0.0
    %1420 = vmatprep.subr.mxu0 0.0
    %1421 = vmatpush1.msra.mxu0 0.0
    %1422 = vmatprep.subr.mxu0 0.0
    %1423 = vmatpush1.msra.mxu0 0.0
    %1424 = vmatprep.subr.mxu0 0.0
    %1425 = vmatpush1.msra.mxu0 0.0
    %1426 = vmatprep.subr.mxu0 0.0
    %1427 = vmatpush1.msra.mxu0 0.0
    %1428 = vmatprep.subr.mxu0 0.0
    %1429 = vmatpush1.msra.mxu0 0.0
    %1430 = vmatprep.subr.mxu0 0.0
    %1431 = vmatpush1.msra.mxu0 0.0
    %1432 = vmatprep.subr.mxu0 0.0
    %1433 = vmatpush1.msra.mxu0 0.0
    %1434 = vmatprep.subr.mxu0 0.0
    %1435 = vmatpush1.msra.mxu0 0.0
    %1436 = vmatprep.subr.mxu0 0.0
    %1437 = vmatpush1.msra.mxu0 0.0
    %1438 = vmatprep.subr.mxu0 0.0
    %1439 = vmatpush1.msra.mxu0 0.0
    %1440 = vmatprep.subr.mxu0 0.0
    %1441 = vmatpush1.msra.mxu0 0.0
    %1442 = vmatprep.subr.mxu0 0.0
    %1443 = vmatpush1.msra.mxu0 0.0
    %1444 = vmatprep.subr.mxu0 0.0
    %1445 = vmatpush1.msra.mxu0 0.0
    %1446 = vmatprep.mubr.f32.mxu0 0.0
    %1447 = vmatmul.mubr.f32.gmra.mrb[0].mxu0 %v1363
    %v1448 = vpop.f32.mrb[0].mxu0
    %v1449 = vadd.f32 0.0, %v1448
    %v1450 = vpop.f32.mrb[0].mxu0
    %1451 = vmatprep.mubr.f32.mxu0 0.0
    %1452 = vmatmul.mubr.f32.gmra.mrb[0].mxu0 %v1364
    %v1453 = vpop.f32.mrb[0].mxu0
    %v1454 = vadd.f32 0.0, %v1453
    %v1455 = vpop.f32.mrb[0].mxu0
    %1456 = vmatprep.mubr.f32.mxu0 0.0
    %1457 = vmatmul.mubr.f32.gmra.mrb[0].mxu0 %v1365
    %v1458 = vpop.f32.mrb[0].mxu0
    %v1459 = vadd.f32 0.0, %v1458
    %v1460 = vpop.f32.mrb[0].mxu0
    %1461 = vdwg.mxu0
    %v1462 = vld [vmem:[%s7] sm:$0xff]
    %v1463 = vld [vmem:[%s7 + $0x8] sm:$0xff]
    %v1464 = vld [vmem:[%s7 + $0x10] sm:$0xff]
    %v1465 = vld [vmem:[%s7 + $0x18] sm:$0xff]
    %v1466 = vld [vmem:[%s7 + $0x20] sm:$0xff]
    %v1467 = vld [vmem:[%s7 + $0x28] sm:$0xff]
    %v1468 = vld [vmem:[%s7 + $0x30] sm:$0xff]
    %v1469 = vld [vmem:[%s7 + $0x38] sm:$0xff]
    %v1471 = vsel %vm342, %v1348, 0
    %v1474 = vsel %vm342, %v1349, 0
    %v1477 = vsel %vm342, %v1350, 0
    %1479 = vmatprep.subr.mxu0 0.0
    %1480 = vmatpush1.msra.mxu0 %v1462
    %1481 = vmatprep.subr.mxu0 0.0
    %1482 = vmatpush1.msra.mxu0 %v1463
    %1483 = vmatprep.subr.mxu0 0.0
    %1484 = vmatpush1.msra.mxu0 %v1464
    %1485 = vmatprep.subr.mxu0 0.0
    %1486 = vmatpush1.msra.mxu0 %v1465
    %1487 = vmatprep.subr.mxu0 0.0
    %1488 = vmatpush1.msra.mxu0 %v1466
    %1489 = vmatprep.subr.mxu0 0.0
    %1490 = vmatpush1.msra.mxu0 %v1467
    %1491 = vmatprep.subr.mxu0 0.0
    %1492 = vmatpush1.msra.mxu0 %v1468
    %1493 = vmatprep.subr.mxu0 0.0
    %1494 = vmatpush1.msra.mxu0 %v1469
    %1495 = vmatprep.subr.mxu0 0.0
    %1496 = vmatpush1.msra.mxu0 %v1366
    %1497 = vmatprep.subr.mxu0 0.0
    %1498 = vmatpush1.msra.mxu0 %v1367
    %1499 = vmatprep.subr.mxu0 0.0
    %1500 = vmatpush1.msra.mxu0 %v1368
    %1501 = vmatprep.subr.mxu0 0.0
    %1502 = vmatpush1.msra.mxu0 %v1369
    %1503 = vmatprep.subr.mxu0 0.0
    %1504 = vmatpush1.msra.mxu0 %v1370
    %1505 = vmatprep.subr.mxu0 0.0
    %1506 = vmatpush1.msra.mxu0 %v1371
    %1507 = vmatprep.subr.mxu0 0.0
    %1508 = vmatpush1.msra.mxu0 %v1372
    %1509 = vmatprep.subr.mxu0 0.0
    %1510 = vmatpush1.msra.mxu0 %v1373
    %1511 = vmatprep.subr.mxu0 0.0
    %1512 = vmatpush1.msra.mxu0 %v1374
    %1513 = vmatprep.subr.mxu0 0.0
    %1514 = vmatpush1.msra.mxu0 %v1375
    %1515 = vmatprep.subr.mxu0 0.0
    %1516 = vmatpush1.msra.mxu0 %v1376
    %1517 = vmatprep.subr.mxu0 0.0
    %1518 = vmatpush1.msra.mxu0 %v1377
    %1519 = vmatprep.subr.mxu0 0.0
    %1520 = vmatpush1.msra.mxu0 %v1378
    %1521 = vmatprep.subr.mxu0 0.0
    %1522 = vmatpush1.msra.mxu0 %v1379
    %1523 = vmatprep.subr.mxu0 0.0
    %1524 = vmatpush1.msra.mxu0 %v1380
    %1525 = vmatprep.subr.mxu0 0.0
    %1526 = vmatpush1.msra.mxu0 %v1381
    %1527 = vmatprep.subr.mxu0 0.0
    %1528 = vmatpush1.msra.mxu0 0.0
    %1529 = vmatprep.subr.mxu0 0.0
    %1530 = vmatpush1.msra.mxu0 0.0
    %1531 = vmatprep.subr.mxu0 0.0
    %1532 = vmatpush1.msra.mxu0 0.0
    %1533 = vmatprep.subr.mxu0 0.0
    %1534 = vmatpush1.msra.mxu0 0.0
    %1535 = vmatprep.subr.mxu0 0.0
    %1536 = vmatpush1.msra.mxu0 0.0
    %1537 = vmatprep.subr.mxu0 0.0
    %1538 = vmatpush1.msra.mxu0 0.0
    %1539 = vmatprep.subr.mxu0 0.0
    %1540 = vmatpush1.msra.mxu0 0.0
    %1541 = vmatprep.subr.mxu0 0.0
    %1542 = vmatpush1.msra.mxu0 0.0
    %1543 = vmatprep.mubr.f32.mxu0 %v1471
    %1544 = vmatmul.mubr.f32.gmra.mrb[0].mxu0 %v1363
    %v1545 = vpop.f32.mrb[0].mxu0
    %v1546 = vadd.f32 0.0, %v1545
    %v1547 = vpop.f32.mrb[0].mxu0
    %1548 = vmatprep.mubr.f32.mxu0 %v1474
    %1549 = vmatmul.mubr.f32.gmra.mrb[0].mxu0 %v1364
    %v1550 = vpop.f32.mrb[0].mxu0
    %v1551 = vadd.f32 0.0, %v1550
    %v1552 = vpop.f32.mrb[0].mxu0
    %1553 = vmatprep.mubr.f32.mxu0 %v1477
    %1554 = vmatmul.mubr.f32.gmra.mrb[0].mxu0 %v1365
    %v1555 = vpop.f32.mrb[0].mxu0
    %v1556 = vadd.f32 0.0, %v1555
    %v1557 = vpop.f32.mrb[0].mxu0
    %1558 = vdwg.mxu0
    %1559 = vrot.lane.b32.xlu0 %v1348, 64
    %v1560 = vpop.permute.xlu0 %1559
    %1561 = vrot.lane.b32.xlu0 %v1349, 64
    %v1562 = vpop.permute.xlu0 %1561
    %1563 = vrot.lane.b32.xlu0 %v1350, 64
    %v1564 = vpop.permute.xlu0 %1563
    %v1568 = vsel %vm342, %v1339, %v1560
    %v1569 = vsel %vm342, %v1340, %v1562
    %v1570 = vsel %vm342, %v1341, %v1564
    %v1571 = vld [vmem:[%s7] sm:$0xff]
    %v1572 = vld [vmem:[%s7 + $0x8] sm:$0xff]
    %v1573 = vld [vmem:[%s7 + $0x10] sm:$0xff]
    %v1574 = vld [vmem:[%s7 + $0x18] sm:$0xff]
    %v1575 = vld [vmem:[%s7 + $0x20] sm:$0xff]
    %v1576 = vld [vmem:[%s7 + $0x28] sm:$0xff]
    %v1577 = vld [vmem:[%s7 + $0x30] sm:$0xff]
    %v1578 = vld [vmem:[%s7 + $0x38] sm:$0xff]
    %v1579 = vld [vmem:[%s7 + $0x40] sm:$0xff]
    %v1580 = vld [vmem:[%s7 + $0x48] sm:$0xff]
    %v1581 = vld [vmem:[%s7 + $0x50] sm:$0xff]
    %v1582 = vld [vmem:[%s7 + $0x58] sm:$0xff]
    %v1583 = vld [vmem:[%s7 + $0x60] sm:$0xff]
    %v1584 = vld [vmem:[%s7 + $0x68] sm:$0xff]
    %v1585 = vld [vmem:[%s7 + $0x70] sm:$0xff]
    %v1586 = vld [vmem:[%s7 + $0x78] sm:$0xff]
    %1587 = vmatprep.subr.mxu0 0.0
    %1588 = vmatpush1.msra.mxu0 %v1571
    %1589 = vmatprep.subr.mxu0 0.0
    %1590 = vmatpush1.msra.mxu0 %v1572
    %1591 = vmatprep.subr.mxu0 0.0
    %1592 = vmatpush1.msra.mxu0 %v1573
    %1593 = vmatprep.subr.mxu0 0.0
    %1594 = vmatpush1.msra.mxu0 %v1574
    %1595 = vmatprep.subr.mxu0 0.0
    %1596 = vmatpush1.msra.mxu0 %v1575
    %1597 = vmatprep.subr.mxu0 0.0
    %1598 = vmatpush1.msra.mxu0 %v1576
    %1599 = vmatprep.subr.mxu0 0.0
    %1600 = vmatpush1.msra.mxu0 %v1577
    %1601 = vmatprep.subr.mxu0 0.0
    %1602 = vmatpush1.msra.mxu0 %v1578
    %1603 = vmatprep.subr.mxu0 0.0
    %1604 = vmatpush1.msra.mxu0 %v1579
    %1605 = vmatprep.subr.mxu0 0.0
    %1606 = vmatpush1.msra.mxu0 %v1580
    %1607 = vmatprep.subr.mxu0 0.0
    %1608 = vmatpush1.msra.mxu0 %v1581
    %1609 = vmatprep.subr.mxu0 0.0
    %1610 = vmatpush1.msra.mxu0 %v1582
    %1611 = vmatprep.subr.mxu0 0.0
    %1612 = vmatpush1.msra.mxu0 %v1583
    %1613 = vmatprep.subr.mxu0 0.0
    %1614 = vmatpush1.msra.mxu0 %v1584
    %1615 = vmatprep.subr.mxu0 0.0
    %1616 = vmatpush1.msra.mxu0 %v1585
    %1617 = vmatprep.subr.mxu0 0.0
    %1618 = vmatpush1.msra.mxu0 %v1586
    %1619 = vmatprep.subr.mxu0 0.0
    %1620 = vmatpush1.msra.mxu0 0.0
    %1621 = vmatprep.subr.mxu0 0.0
    %1622 = vmatpush1.msra.mxu0 0.0
    %1623 = vmatprep.subr.mxu0 0.0
    %1624 = vmatpush1.msra.mxu0 0.0
    %1625 = vmatprep.subr.mxu0 0.0
    %1626 = vmatpush1.msra.mxu0 0.0
    %1627 = vmatprep.subr.mxu0 0.0
    %1628 = vmatpush1.msra.mxu0 0.0
    %1629 = vmatprep.subr.mxu0 0.0
    %1630 = vmatpush1.msra.mxu0 0.0
    %1631 = vmatprep.subr.mxu0 0.0
    %1632 = vmatpush1.msra.mxu0 0.0
    %1633 = vmatprep.subr.mxu0 0.0
    %1634 = vmatpush1.msra.mxu0 0.0
    %1635 = vmatprep.subr.mxu0 0.0
    %1636 = vmatpush1.msra.mxu0 0.0
    %1637 = vmatprep.subr.mxu0 0.0
    %1638 = vmatpush1.msra.mxu0 0.0
    %1639 = vmatprep.subr.mxu0 0.0
    %1640 = vmatpush1.msra.mxu0 0.0
    %1641 = vmatprep.subr.mxu0 0.0
    %1642 = vmatpush1.msra.mxu0 0.0
    %1643 = vmatprep.subr.mxu0 0.0
    %1644 = vmatpush1.msra.mxu0 0.0
    %1645 = vmatprep.subr.mxu0 0.0
    %1646 = vmatpush1.msra.mxu0 0.0
    %1647 = vmatprep.subr.mxu0 0.0
    %1648 = vmatpush1.msra.mxu0 0.0
    %1649 = vmatprep.subr.mxu0 0.0
    %1650 = vmatpush1.msra.mxu0 0.0
    %1651 = vmatprep.mubr.f32.mxu0 0.0
    %1652 = vmatmul.mubr.f32.gmra.mrb[0].mxu0 %v1568
    %v1653 = vpop.f32.mrb[0].mxu0
    %v1654 = vadd.f32 0.0, %v1653
    %v1655 = vpop.f32.mrb[0].mxu0
    %1656 = vmatprep.mubr.f32.mxu0 0.0
    %1657 = vmatmul.mubr.f32.gmra.mrb[0].mxu0 %v1569
    %v1658 = vpop.f32.mrb[0].mxu0
    %v1659 = vadd.f32 0.0, %v1658
    %v1660 = vpop.f32.mrb[0].mxu0
    %1661 = vmatprep.mubr.f32.mxu0 0.0
    %1662 = vmatmul.mubr.f32.gmra.mrb[0].mxu0 %v1570
    %v1663 = vpop.f32.mrb[0].mxu0
    %v1664 = vadd.f32 0.0, %v1663
    %v1665 = vpop.f32.mrb[0].mxu0
    %1666 = vdwg.mxu0
    %v1667 = vsel %vm342, %v1449, 0.0
    %v1668 = vsel %vm342, %v1454, 0.0
    %v1669 = vadd.f32 %v1667, %v1668
    %v1670 = vsel %vm346, %v1459, 0.0
    %v1671 = vadd.f32 %v1669, %v1670
    %v1672 = vrot.slane %v1671, 4
    %v1673 = vadd.f32 %v1671, %v1672
    %v1674 = vrot.slane %v1673, 2
    %v1675 = vadd.f32 %v1673, %v1674
    %v1676 = vrot.slane %v1675, 1
    %v1677 = vadd.f32 %v1675, %v1676
    %v1678 = vadd.f32 %v1677, 0.0
    %v1679 = vsel %vm342, %v1546, 0.0
    %v1680 = vsel %vm342, %v1551, 0.0
    %v1681 = vadd.f32 %v1679, %v1680
    %v1682 = vsel %vm346, %v1556, 0.0
    %v1683 = vadd.f32 %v1681, %v1682
    %v1684 = vrot.slane %v1683, 4
    %v1685 = vadd.f32 %v1683, %v1684
    %v1686 = vrot.slane %v1685, 2
    %v1687 = vadd.f32 %v1685, %v1686
    %v1688 = vrot.slane %v1687, 1
    %v1689 = vadd.f32 %v1687, %v1688
    %v1690 = vadd.f32 %v1678, %v1689
    %v1691 = vsel %vm342, %v1654, 0.0
    %v1692 = vsel %vm342, %v1659, 0.0
    %v1693 = vadd.f32 %v1691, %v1692
    %v1694 = vsel %vm346, %v1664, 0.0
    %v1695 = vadd.f32 %v1693, %v1694
    %v1696 = vrot.slane %v1695, 4
    %v1697 = vadd.f32 %v1695, %v1696
    %v1698 = vrot.slane %v1697, 2
    %v1699 = vadd.f32 %v1697, %v1698
    %v1700 = vrot.slane %v1699, 1
    %v1701 = vadd.f32 %v1699, %v1700
    %v1702 = vadd.f32 %v1690, %v1701
    %v1703 = vmul.f32 %v1702, %v380
    %v1704 = vsub.f32 %v1449, %v1703
    %v1705 = vsub.f32 %v1454, %v1703
    %v1706 = vsub.f32 %v1459, %v1703
    %v1707 = vsub.f32 %v1546, %v1703
    %v1708 = vsub.f32 %v1551, %v1703
    %v1709 = vsub.f32 %v1556, %v1703
    %v1710 = vsub.f32 %v1654, %v1703
    %v1711 = vsub.f32 %v1659, %v1703
    %v1712 = vsub.f32 %v1664, %v1703
    %v1713 = vmul.f32 %v1704, %v1704
    %v1714 = vmul.f32 %v1705, %v1705
    %v1715 = vmul.f32 %v1706, %v1706
    %v1716 = vsel %vm342, %v1713, 0.0
    %v1717 = vsel %vm342, %v1714, 0.0
    %v1718 = vadd.f32 %v1716, %v1717
    %v1719 = vsel %vm346, %v1715, 0.0
    %v1720 = vadd.f32 %v1718, %v1719
    %v1721 = vrot.slane %v1720, 4
    %v1722 = vadd.f32 %v1720, %v1721
    %v1723 = vrot.slane %v1722, 2
    %v1724 = vadd.f32 %v1722, %v1723
    %v1725 = vrot.slane %v1724, 1
    %v1726 = vadd.f32 %v1724, %v1725
    %v1727 = vadd.f32 %v1726, 0.0
    %v1728 = vmul.f32 %v1707, %v1707
    %v1729 = vmul.f32 %v1708, %v1708
    %v1730 = vmul.f32 %v1709, %v1709
    %v1731 = vsel %vm342, %v1728, 0.0
    %v1732 = vsel %vm342, %v1729, 0.0
    %v1733 = vadd.f32 %v1731, %v1732
    %v1734 = vsel %vm346, %v1730, 0.0
    %v1735 = vadd.f32 %v1733, %v1734
    %v1736 = vrot.slane %v1735, 4
    %v1737 = vadd.f32 %v1735, %v1736
    %v1738 = vrot.slane %v1737, 2
    %v1739 = vadd.f32 %v1737, %v1738
    %v1740 = vrot.slane %v1739, 1
    %v1741 = vadd.f32 %v1739, %v1740
    %v1742 = vadd.f32 %v1727, %v1741
    %v1743 = vmul.f32 %v1710, %v1710
    %v1744 = vmul.f32 %v1711, %v1711
    %v1745 = vmul.f32 %v1712, %v1712
    %v1746 = vsel %vm342, %v1743, 0.0
    %v1747 = vsel %vm342, %v1744, 0.0
    %v1748 = vadd.f32 %v1746, %v1747
    %v1749 = vsel %vm346, %v1745, 0.0
    %v1750 = vadd.f32 %v1748, %v1749
    %v1751 = vrot.slane %v1750, 4
    %v1752 = vadd.f32 %v1750, %v1751
    %v1753 = vrot.slane %v1752, 2
    %v1754 = vadd.f32 %v1752, %v1753
    %v1755 = vrot.slane %v1754, 1
    %v1756 = vadd.f32 %v1754, %v1755
    %v1757 = vadd.f32 %v1742, %v1756
    %v1758 = vmul.f32 %v1757, %v380
    %v1759 = vadd.f32 %v1758, 1e-05
    %v1760 = vrsqrt.pop %v1759
    %v1761 = vmul.f32 %v1760, %v48
    %v1762 = vlaneseq
    %v1763 = vshrl.u32 %v1762, 7
    %v1764 = vsub.s32 3, %v1763
    %v1765 = vrot.slane %v1761, %v1764
    %v1766 = vmul.f32 %v1704, %v1765
    %v1767 = vmul.f32 %v1705, %v1765
    %v1768 = vmul.f32 %v1706, %v1765
    %v1769 = vlaneseq
    %v1770 = vshrl.u32 %v1769, 7
    %v1771 = vsub.s32 3, %v1770
    %v1772 = vrot.slane %v49, %v1771
    %v1773 = vadd.f32 %v1766, %v1772
    %v1774 = vadd.f32 %v1767, %v1772
    %v1775 = vadd.f32 %v1768, %v1772
    %v1776 = vmax.f32 %v1773, 0.0
    %v1777 = vmax.f32 %v1774, 0.0
    %v1778 = vmax.f32 %v1775, 0.0
    %v1779 = vmul.f32 %v1707, %v1765
    %v1780 = vmul.f32 %v1708, %v1765
    %v1781 = vmul.f32 %v1709, %v1765
    %v1782 = vadd.f32 %v1779, %v1772
    %v1783 = vadd.f32 %v1780, %v1772
    %v1784 = vadd.f32 %v1781, %v1772
    %v1785 = vmax.f32 %v1782, 0.0
    %v1786 = vmax.f32 %v1783, 0.0
    %v1787 = vmax.f32 %v1784, 0.0
    %v1788 = vmul.f32 %v1710, %v1765
    %v1789 = vmul.f32 %v1711, %v1765
    %v1790 = vmul.f32 %v1712, %v1765
    %v1791 = vadd.f32 %v1788, %v1772
    %v1792 = vadd.f32 %v1789, %v1772
    %v1793 = vadd.f32 %v1790, %v1772
    %v1794 = vmax.f32 %v1791, 0.0
    %v1795 = vmax.f32 %v1792, 0.0
    %v1796 = vmax.f32 %v1793, 0.0
    %1800 = vrot.lane.b32.xlu0 %v1785, 64
    %v1801 = vpop.permute.xlu0 %1800
    %1802 = vrot.lane.b32.xlu0 %v1786, 64
    %v1803 = vpop.permute.xlu0 %1802
    %1804 = vrot.lane.b32.xlu0 %v1787, 64
    %v1805 = vpop.permute.xlu0 %1804
    %v1809 = vsel %vm342, %v1776, %v1801
    %v1810 = vsel %vm342, %v1777, %v1803
    %v1811 = vsel %vm342, %v1778, %v1805
    %v1812 = vld [vmem:[%s8 + $0x40] sm:$0xff]
    %v1813 = vld [vmem:[%s8 + $0x48] sm:$0xff]
    %v1814 = vld [vmem:[%s8 + $0x50] sm:$0xff]
    %v1815 = vld [vmem:[%s8 + $0x58] sm:$0xff]
    %v1816 = vld [vmem:[%s8 + $0x60] sm:$0xff]
    %v1817 = vld [vmem:[%s8 + $0x68] sm:$0xff]
    %v1818 = vld [vmem:[%s8 + $0x70] sm:$0xff]
    %v1819 = vld [vmem:[%s8 + $0x78] sm:$0xff]
    %v1820 = vld [vmem:[%s8 + $0x80] sm:$0xff]
    %v1821 = vld [vmem:[%s8 + $0x88] sm:$0xff]
    %v1822 = vld [vmem:[%s8 + $0x90] sm:$0xff]
    %v1823 = vld [vmem:[%s8 + $0x98] sm:$0xff]
    %v1824 = vld [vmem:[%s8 + $0xa0] sm:$0xff]
    %v1825 = vld [vmem:[%s8 + $0xa8] sm:$0xff]
    %v1826 = vld [vmem:[%s8 + $0xb0] sm:$0xff]
    %v1827 = vld [vmem:[%s8 + $0xb8] sm:$0xff]
    %v1828 = vld [vmem:[%s8] sm:$0xff]
    %v1829 = vld [vmem:[%s8 + $0x8] sm:$0xff]
    %v1830 = vld [vmem:[%s8 + $0x10] sm:$0xff]
    %v1831 = vld [vmem:[%s8 + $0x18] sm:$0xff]
    %v1832 = vld [vmem:[%s8 + $0x20] sm:$0xff]
    %v1833 = vld [vmem:[%s8 + $0x28] sm:$0xff]
    %v1834 = vld [vmem:[%s8 + $0x30] sm:$0xff]
    %v1835 = vld [vmem:[%s8 + $0x38] sm:$0xff]
    %1839 = vrot.lane.b32.xlu0 %v1794, 64
    %v1840 = vpop.permute.xlu0 %1839
    %1841 = vrot.lane.b32.xlu0 %v1795, 64
    %v1842 = vpop.permute.xlu0 %1841
    %1843 = vrot.lane.b32.xlu0 %v1796, 64
    %v1844 = vpop.permute.xlu0 %1843
    %v1848 = vsel %vm342, %v1785, %v1840
    %v1849 = vsel %vm342, %v1786, %v1842
    %v1850 = vsel %vm342, %v1787, %v1844
    %1851 = vmatprep.subr.mxu0 0.0
    %1852 = vmatpush1.msra.mxu0 %v1812
    %1853 = vmatprep.subr.mxu0 0.0
    %1854 = vmatpush1.msra.mxu0 %v1813
    %1855 = vmatprep.subr.mxu0 0.0
    %1856 = vmatpush1.msra.mxu0 %v1814
    %1857 = vmatprep.subr.mxu0 0.0
    %1858 = vmatpush1.msra.mxu0 %v1815
    %1859 = vmatprep.subr.mxu0 0.0
    %1860 = vmatpush1.msra.mxu0 %v1816
    %1861 = vmatprep.subr.mxu0 0.0
    %1862 = vmatpush1.msra.mxu0 %v1817
    %1863 = vmatprep.subr.mxu0 0.0
    %1864 = vmatpush1.msra.mxu0 %v1818
    %1865 = vmatprep.subr.mxu0 0.0
    %1866 = vmatpush1.msra.mxu0 %v1819
    %1867 = vmatprep.subr.mxu0 0.0
    %1868 = vmatpush1.msra.mxu0 %v1820
    %1869 = vmatprep.subr.mxu0 0.0
    %1870 = vmatpush1.msra.mxu0 %v1821
    %1871 = vmatprep.subr.mxu0 0.0
    %1872 = vmatpush1.msra.mxu0 %v1822
    %1873 = vmatprep.subr.mxu0 0.0
    %1874 = vmatpush1.msra.mxu0 %v1823
    %1875 = vmatprep.subr.mxu0 0.0
    %1876 = vmatpush1.msra.mxu0 %v1824
    %1877 = vmatprep.subr.mxu0 0.0
    %1878 = vmatpush1.msra.mxu0 %v1825
    %1879 = vmatprep.subr.mxu0 0.0
    %1880 = vmatpush1.msra.mxu0 %v1826
    %1881 = vmatprep.subr.mxu0 0.0
    %1882 = vmatpush1.msra.mxu0 %v1827
    %1883 = vmatprep.subr.mxu0 0.0
    %1884 = vmatpush1.msra.mxu0 0.0
    %1885 = vmatprep.subr.mxu0 0.0
    %1886 = vmatpush1.msra.mxu0 0.0
    %1887 = vmatprep.subr.mxu0 0.0
    %1888 = vmatpush1.msra.mxu0 0.0
    %1889 = vmatprep.subr.mxu0 0.0
    %1890 = vmatpush1.msra.mxu0 0.0
    %1891 = vmatprep.subr.mxu0 0.0
    %1892 = vmatpush1.msra.mxu0 0.0
    %1893 = vmatprep.subr.mxu0 0.0
    %1894 = vmatpush1.msra.mxu0 0.0
    %1895 = vmatprep.subr.mxu0 0.0
    %1896 = vmatpush1.msra.mxu0 0.0
    %1897 = vmatprep.subr.mxu0 0.0
    %1898 = vmatpush1.msra.mxu0 0.0
    %1899 = vmatprep.subr.mxu0 0.0
    %1900 = vmatpush1.msra.mxu0 0.0
    %1901 = vmatprep.subr.mxu0 0.0
    %1902 = vmatpush1.msra.mxu0 0.0
    %1903 = vmatprep.subr.mxu0 0.0
    %1904 = vmatpush1.msra.mxu0 0.0
    %1905 = vmatprep.subr.mxu0 0.0
    %1906 = vmatpush1.msra.mxu0 0.0
    %1907 = vmatprep.subr.mxu0 0.0
    %1908 = vmatpush1.msra.mxu0 0.0
    %1909 = vmatprep.subr.mxu0 0.0
    %1910 = vmatpush1.msra.mxu0 0.0
    %1911 = vmatprep.subr.mxu0 0.0
    %1912 = vmatpush1.msra.mxu0 0.0
    %1913 = vmatprep.subr.mxu0 0.0
    %1914 = vmatpush1.msra.mxu0 0.0
    %1915 = vmatprep.mubr.f32.mxu0 0.0
    %1916 = vmatmul.mubr.f32.gmra.mrb[0].mxu0 %v1809
    %v1917 = vpop.f32.mrb[0].mxu0
    %v1918 = vadd.f32 %v1042, %v1917
    %v1919 = vpop.f32.mrb[0].mxu0
    %1920 = vmatprep.mubr.f32.mxu0 0.0
    %1921 = vmatmul.mubr.f32.gmra.mrb[0].mxu0 %v1810
    %v1922 = vpop.f32.mrb[0].mxu0
    %v1923 = vadd.f32 %v1047, %v1922
    %v1924 = vpop.f32.mrb[0].mxu0
    %1925 = vmatprep.mubr.f32.mxu0 0.0
    %1926 = vmatmul.mubr.f32.gmra.mrb[0].mxu0 %v1811
    %v1927 = vpop.f32.mrb[0].mxu0
    %v1928 = vadd.f32 %v1052, %v1927
    %v1929 = vpop.f32.mrb[0].mxu0
    %1930 = vdwg.mxu0
    %v1931 = vsel %vm342, %v1794, 0
    %v1933 = vsel %vm342, %v1795, 0
    %v1935 = vsel %vm342, %v1796, 0
    %1937 = vmatprep.subr.mxu0 0.0
    %1938 = vmatpush1.msra.mxu0 %v1828
    %1939 = vmatprep.subr.mxu0 0.0
    %1940 = vmatpush1.msra.mxu0 %v1829
    %1941 = vmatprep.subr.mxu0 0.0
    %1942 = vmatpush1.msra.mxu0 %v1830
    %1943 = vmatprep.subr.mxu0 0.0
    %1944 = vmatpush1.msra.mxu0 %v1831
    %1945 = vmatprep.subr.mxu0 0.0
    %1946 = vmatpush1.msra.mxu0 %v1832
    %1947 = vmatprep.subr.mxu0 0.0
    %1948 = vmatpush1.msra.mxu0 %v1833
    %1949 = vmatprep.subr.mxu0 0.0
    %1950 = vmatpush1.msra.mxu0 %v1834
    %1951 = vmatprep.subr.mxu0 0.0
    %1952 = vmatpush1.msra.mxu0 %v1835
    %1953 = vmatprep.subr.mxu0 0.0
    %1954 = vmatpush1.msra.mxu0 %v1812
    %1955 = vmatprep.subr.mxu0 0.0
    %1956 = vmatpush1.msra.mxu0 %v1813
    %1957 = vmatprep.subr.mxu0 0.0
    %1958 = vmatpush1.msra.mxu0 %v1814
    %1959 = vmatprep.subr.mxu0 0.0
    %1960 = vmatpush1.msra.mxu0 %v1815
    %1961 = vmatprep.subr.mxu0 0.0
    %1962 = vmatpush1.msra.mxu0 %v1816
    %1963 = vmatprep.subr.mxu0 0.0
    %1964 = vmatpush1.msra.mxu0 %v1817
    %1965 = vmatprep.subr.mxu0 0.0
    %1966 = vmatpush1.msra.mxu0 %v1818
    %1967 = vmatprep.subr.mxu0 0.0
    %1968 = vmatpush1.msra.mxu0 %v1819
    %1969 = vmatprep.subr.mxu0 0.0
    %1970 = vmatpush1.msra.mxu0 %v1820
    %1971 = vmatprep.subr.mxu0 0.0
    %1972 = vmatpush1.msra.mxu0 %v1821
    %1973 = vmatprep.subr.mxu0 0.0
    %1974 = vmatpush1.msra.mxu0 %v1822
    %1975 = vmatprep.subr.mxu0 0.0
    %1976 = vmatpush1.msra.mxu0 %v1823
    %1977 = vmatprep.subr.mxu0 0.0
    %1978 = vmatpush1.msra.mxu0 %v1824
    %1979 = vmatprep.subr.mxu0 0.0
    %1980 = vmatpush1.msra.mxu0 %v1825
    %1981 = vmatprep.subr.mxu0 0.0
    %1982 = vmatpush1.msra.mxu0 %v1826
    %1983 = vmatprep.subr.mxu0 0.0
    %1984 = vmatpush1.msra.mxu0 %v1827
    %1985 = vmatprep.subr.mxu0 0.0
    %1986 = vmatpush1.msra.mxu0 0.0
    %1987 = vmatprep.subr.mxu0 0.0
    %1988 = vmatpush1.msra.mxu0 0.0
    %1989 = vmatprep.subr.mxu0 0.0
    %1990 = vmatpush1.msra.mxu0 0.0
    %1991 = vmatprep.subr.mxu0 0.0
    %1992 = vmatpush1.msra.mxu0 0.0
    %1993 = vmatprep.subr.mxu0 0.0
    %1994 = vmatpush1.msra.mxu0 0.0
    %1995 = vmatprep.subr.mxu0 0.0
    %1996 = vmatpush1.msra.mxu0 0.0
    %1997 = vmatprep.subr.mxu0 0.0
    %1998 = vmatpush1.msra.mxu0 0.0
    %1999 = vmatprep.subr.mxu0 0.0
    %2000 = vmatpush1.msra.mxu0 0.0
    %2001 = vmatprep.mubr.f32.mxu0 %v1931
    %2002 = vmatmul.mubr.f32.gmra.mrb[0].mxu0 %v1809
    %v2003 = vpop.f32.mrb[0].mxu0
    %v2004 = vadd.f32 %v1128, %v2003
    %v2005 = vpop.f32.mrb[0].mxu0
    %2006 = vmatprep.mubr.f32.mxu0 %v1933
    %2007 = vmatmul.mubr.f32.gmra.mrb[0].mxu0 %v1810
    %v2008 = vpop.f32.mrb[0].mxu0
    %v2009 = vadd.f32 %v1133, %v2008
    %v2010 = vpop.f32.mrb[0].mxu0
    %2011 = vmatprep.mubr.f32.mxu0 %v1935
    %2012 = vmatmul.mubr.f32.gmra.mrb[0].mxu0 %v1811
    %v2013 = vpop.f32.mrb[0].mxu0
    %v2014 = vadd.f32 %v1138, %v2013
    %v2015 = vpop.f32.mrb[0].mxu0
    %2016 = vdwg.mxu0
    %2017 = vmatprep.subr.mxu0 0.0
    %2018 = vmatpush1.msra.mxu0 %v1828
    %2019 = vmatprep.subr.mxu0 0.0
    %2020 = vmatpush1.msra.mxu0 %v1829
    %2021 = vmatprep.subr.mxu0 0.0
    %2022 = vmatpush1.msra.mxu0 %v1830
    %2023 = vmatprep.subr.mxu0 0.0
    %2024 = vmatpush1.msra.mxu0 %v1831
    %2025 = vmatprep.subr.mxu0 0.0
    %2026 = vmatpush1.msra.mxu0 %v1832
    %2027 = vmatprep.subr.mxu0 0.0
    %2028 = vmatpush1.msra.mxu0 %v1833
    %2029 = vmatprep.subr.mxu0 0.0
    %2030 = vmatpush1.msra.mxu0 %v1834
    %2031 = vmatprep.subr.mxu0 0.0
    %2032 = vmatpush1.msra.mxu0 %v1835
    %2033 = vmatprep.subr.mxu0 0.0
    %2034 = vmatpush1.msra.mxu0 %v1812
    %2035 = vmatprep.subr.mxu0 0.0
    %2036 = vmatpush1.msra.mxu0 %v1813
    %2037 = vmatprep.subr.mxu0 0.0
    %2038 = vmatpush1.msra.mxu0 %v1814
    %2039 = vmatprep.subr.mxu0 0.0
    %2040 = vmatpush1.msra.mxu0 %v1815
    %2041 = vmatprep.subr.mxu0 0.0
    %2042 = vmatpush1.msra.mxu0 %v1816
    %2043 = vmatprep.subr.mxu0 0.0
    %2044 = vmatpush1.msra.mxu0 %v1817
    %2045 = vmatprep.subr.mxu0 0.0
    %2046 = vmatpush1.msra.mxu0 %v1818
    %2047 = vmatprep.subr.mxu0 0.0
    %2048 = vmatpush1.msra.mxu0 %v1819
    %2049 = vmatprep.subr.mxu0 0.0
    %2050 = vmatpush1.msra.mxu0 0.0
    %2051 = vmatprep.subr.mxu0 0.0
    %2052 = vmatpush1.msra.mxu0 0.0
    %2053 = vmatprep.subr.mxu0 0.0
    %2054 = vmatpush1.msra.mxu0 0.0
    %2055 = vmatprep.subr.mxu0 0.0
    %2056 = vmatpush1.msra.mxu0 0.0
    %2057 = vmatprep.subr.mxu0 0.0
    %2058 = vmatpush1.msra.mxu0 0.0
    %2059 = vmatprep.subr.mxu0 0.0
    %2060 = vmatpush1.msra.mxu0 0.0
    %2061 = vmatprep.subr.mxu0 0.0
    %2062 = vmatpush1.msra.mxu0 0.0
    %2063 = vmatprep.subr.mxu0 0.0
    %2064 = vmatpush1.msra.mxu0 0.0
    %2065 = vmatprep.subr.mxu0 0.0
    %2066 = vmatpush1.msra.mxu0 0.0
    %2067 = vmatprep.subr.mxu0 0.0
    %2068 = vmatpush1.msra.mxu0 0.0
    %2069 = vmatprep.subr.mxu0 0.0
    %2070 = vmatpush1.msra.mxu0 0.0
    %2071 = vmatprep.subr.mxu0 0.0
    %2072 = vmatpush1.msra.mxu0 0.0
    %2073 = vmatprep.subr.mxu0 0.0
    %2074 = vmatpush1.msra.mxu0 0.0
    %2075 = vmatprep.subr.mxu0 0.0
    %2076 = vmatpush1.msra.mxu0 0.0
    %2077 = vmatprep.subr.mxu0 0.0
    %2078 = vmatpush1.msra.mxu0 0.0
    %2079 = vmatprep.subr.mxu0 0.0
    %2080 = vmatpush1.msra.mxu0 0.0
    %2081 = vmatprep.mubr.f32.mxu0 0.0
    %2082 = vmatmul.mubr.f32.gmra.mrb[0].mxu0 %v1848
    %v2083 = vpop.f32.mrb[0].mxu0
    %v2084 = vadd.f32 %v1208, %v2083
    %v2085 = vpop.f32.mrb[0].mxu0
    %2086 = vmatprep.mubr.f32.mxu0 0.0
    %2087 = vmatmul.mubr.f32.gmra.mrb[0].mxu0 %v1849
    %v2088 = vpop.f32.mrb[0].mxu0
    %v2089 = vadd.f32 %v1213, %v2088
    %v2090 = vpop.f32.mrb[0].mxu0
    %2091 = vmatprep.mubr.f32.mxu0 0.0
    %2092 = vmatmul.mubr.f32.gmra.mrb[0].mxu0 %v1850
    %v2093 = vpop.f32.mrb[0].mxu0
    %v2094 = vadd.f32 %v1218, %v2093
    %v2095 = vpop.f32.mrb[0].mxu0
    %2096 = vdwg.mxu0
    %2100 = vrot.lane.b32.xlu0 %v2004, 64
    %v2101 = vpop.permute.xlu0 %2100
    %2102 = vrot.lane.b32.xlu0 %v2009, 64
    %v2103 = vpop.permute.xlu0 %2102
    %2104 = vrot.lane.b32.xlu0 %v2014, 64
    %v2105 = vpop.permute.xlu0 %2104
    %v2109 = vsel %vm342, %v1918, %v2101
    %v2110 = vsel %vm342, %v1923, %v2103
    %v2111 = vsel %vm342, %v1928, %v2105
    %v2112 = vld [vmem:[%s9] sm:$0xff]
    %v2113 = vld [vmem:[%s9 + $0x8] sm:$0xff]
    %v2114 = vld [vmem:[%s9 + $0x10] sm:$0xff]
    %v2115 = vld [vmem:[%s9 + $0x18] sm:$0xff]
    %v2116 = vld [vmem:[%s9 + $0x20] sm:$0xff]
    %v2117 = vld [vmem:[%s9 + $0x28] sm:$0xff]
    %v2118 = vld [vmem:[%s9 + $0x30] sm:$0xff]
    %v2119 = vld [vmem:[%s9 + $0x38] sm:$0xff]
    %v2120 = vld [vmem:[%s9 + $0x40] sm:$0xff]
    %v2121 = vld [vmem:[%s9 + $0x48] sm:$0xff]
    %v2122 = vld [vmem:[%s9 + $0x50] sm:$0xff]
    %v2123 = vld [vmem:[%s9 + $0x58] sm:$0xff]
    %v2124 = vld [vmem:[%s9 + $0x60] sm:$0xff]
    %v2125 = vld [vmem:[%s9 + $0x68] sm:$0xff]
    %v2126 = vld [vmem:[%s9 + $0x70] sm:$0xff]
    %v2127 = vld [vmem:[%s9 + $0x78] sm:$0xff]
    %v2128 = vld [vmem:[%s9 + $0x80] sm:$0xff]
    %v2129 = vld [vmem:[%s9 + $0x88] sm:$0xff]
    %v2130 = vld [vmem:[%s9 + $0x90] sm:$0xff]
    %v2131 = vld [vmem:[%s9 + $0x98] sm:$0xff]
    %v2132 = vld [vmem:[%s9 + $0xa0] sm:$0xff]
    %v2133 = vld [vmem:[%s9 + $0xa8] sm:$0xff]
    %v2134 = vld [vmem:[%s9 + $0xb0] sm:$0xff]
    %v2135 = vld [vmem:[%s9 + $0xb8] sm:$0xff]
    %v2136 = vld [vmem:[%s10] sm:$0x1]
    %v2138 = vlaneseq
    %v2139 = vshrl.u32 %v2138, 7
    %v2140 = vsub.s32 0, %v2139
    %v2141 = vrot.slane %v2136, %v2140
    %v2144 = vsel %vm342, %v2084, 0
    %v2147 = vsel %vm342, %v2089, 0
    %v2150 = vsel %vm342, %v2094, 0
    %2152 = vmatprep.subr.mxu0 0.0
    %2153 = vmatpush1.msra.mxu0 %v2112
    %2154 = vmatprep.subr.mxu0 0.0
    %2155 = vmatpush1.msra.mxu0 %v2113
    %2156 = vmatprep.subr.mxu0 0.0
    %2157 = vmatpush1.msra.mxu0 %v2114
    %2158 = vmatprep.subr.mxu0 0.0
    %2159 = vmatpush1.msra.mxu0 %v2115
    %2160 = vmatprep.subr.mxu0 0.0
    %2161 = vmatpush1.msra.mxu0 %v2116
    %2162 = vmatprep.subr.mxu0 0.0
    %2163 = vmatpush1.msra.mxu0 %v2117
    %2164 = vmatprep.subr.mxu0 0.0
    %2165 = vmatpush1.msra.mxu0 %v2118
    %2166 = vmatprep.subr.mxu0 0.0
    %2167 = vmatpush1.msra.mxu0 %v2119
    %2168 = vmatprep.subr.mxu0 0.0
    %2169 = vmatpush1.msra.mxu0 %v2120
    %2170 = vmatprep.subr.mxu0 0.0
    %2171 = vmatpush1.msra.mxu0 %v2121
    %2172 = vmatprep.subr.mxu0 0.0
    %2173 = vmatpush1.msra.mxu0 %v2122
    %2174 = vmatprep.subr.mxu0 0.0
    %2175 = vmatpush1.msra.mxu0 %v2123
    %2176 = vmatprep.subr.mxu0 0.0
    %2177 = vmatpush1.msra.mxu0 %v2124
    %2178 = vmatprep.subr.mxu0 0.0
    %2179 = vmatpush1.msra.mxu0 %v2125
    %2180 = vmatprep.subr.mxu0 0.0
    %2181 = vmatpush1.msra.mxu0 %v2126
    %2182 = vmatprep.subr.mxu0 0.0
    %2183 = vmatpush1.msra.mxu0 %v2127
    %2184 = vmatprep.subr.mxu0 0.0
    %2185 = vmatpush1.msra.mxu0 %v2128
    %2186 = vmatprep.subr.mxu0 0.0
    %2187 = vmatpush1.msra.mxu0 %v2129
    %2188 = vmatprep.subr.mxu0 0.0
    %2189 = vmatpush1.msra.mxu0 %v2130
    %2190 = vmatprep.subr.mxu0 0.0
    %2191 = vmatpush1.msra.mxu0 %v2131
    %2192 = vmatprep.subr.mxu0 0.0
    %2193 = vmatpush1.msra.mxu0 %v2132
    %2194 = vmatprep.subr.mxu0 0.0
    %2195 = vmatpush1.msra.mxu0 %v2133
    %2196 = vmatprep.subr.mxu0 0.0
    %2197 = vmatpush1.msra.mxu0 %v2134
    %2198 = vmatprep.subr.mxu0 0.0
    %2199 = vmatpush1.msra.mxu0 %v2135
    %2200 = vmatprep.subr.mxu0 0.0
    %2201 = vmatpush1.msra.mxu0 0.0
    %2202 = vmatprep.subr.mxu0 0.0
    %2203 = vmatpush1.msra.mxu0 0.0
    %2204 = vmatprep.subr.mxu0 0.0
    %2205 = vmatpush1.msra.mxu0 0.0
    %2206 = vmatprep.subr.mxu0 0.0
    %2207 = vmatpush1.msra.mxu0 0.0
    %2208 = vmatprep.subr.mxu0 0.0
    %2209 = vmatpush1.msra.mxu0 0.0
    %2210 = vmatprep.subr.mxu0 0.0
    %2211 = vmatpush1.msra.mxu0 0.0
    %2212 = vmatprep.subr.mxu0 0.0
    %2213 = vmatpush1.msra.mxu0 0.0
    %2214 = vmatprep.subr.mxu0 0.0
    %2215 = vmatpush1.msra.mxu0 0.0
    %2216 = vmatprep.mubr.f32.mxu0 %v2144
    %2217 = vmatmul.mubr.f32.gmra.mrb[0].mxu0 %v2109
    %v2218 = vpop.f32.mrb[0].mxu0
    %v2219 = vadd.f32 %v2141, %v2218
    %v2220 = vpop.f32.mrb[0].mxu0
    %2221 = vmatprep.mubr.f32.mxu0 %v2147
    %2222 = vmatmul.mubr.f32.gmra.mrb[0].mxu0 %v2110
    %v2223 = vpop.f32.mrb[0].mxu0
    %v2224 = vadd.f32 %v2141, %v2223
    %v2225 = vpop.f32.mrb[0].mxu0
    %2226 = vmatprep.mubr.f32.mxu0 %v2150
    %2227 = vmatmul.mubr.f32.gmra.mrb[0].mxu0 %v2111
    %v2228 = vpop.f32.mrb[0].mxu0
    %v2229 = vadd.f32 %v2141, %v2228
    %v2230 = vpop.f32.mrb[0].mxu0
    %2231 = vdwg.mxu0
    %v2232 = vld [vmem:[%s11] sm:$0xff]
    %v2233 = vld [vmem:[%s11 + $0x8] sm:$0xff]
    %v2234 = vld [vmem:[%s11 + $0x10] sm:$0xff]
    %v2235 = vld [vmem:[%s11 + $0x18] sm:$0xff]
    %v2236 = vlaneseq
    %v2237 = vand.u32 %v2236, 127
    %vm2238 = vcmp.ge.s32.totalorder %v2237, 64
    %vm2239 = vcmp.lt.s32.totalorder %v2237, 96
    %vm2240 = vmand %vm2238, %vm2239
    %vm2241 = vcmask 261120
    %v2243 = vsel %vm2241, 0.0, 0
    %2245 = vmatprep.subr.mxu0 0.0
    %2246 = vmatpush1.msra.mxu0 %v2232
    %2247 = vmatprep.subr.mxu0 0.0
    %2248 = vmatpush1.msra.mxu0 %v2233
    %2249 = vmatprep.subr.mxu0 0.0
    %2250 = vmatpush1.msra.mxu0 %v2234
    %2251 = vmatprep.subr.mxu0 0.0
    %2252 = vmatpush1.msra.mxu0 %v2235
    %2253 = vmatprep.subr.mxu0 0.0
    %2254 = vmatpush1.msra.mxu0 0.0
    %2255 = vmatprep.subr.mxu0 0.0
    %2256 = vmatpush1.msra.mxu0 0.0
    %2257 = vmatprep.subr.mxu0 0.0
    %2258 = vmatpush1.msra.mxu0 0.0
    %2259 = vmatprep.subr.mxu0 0.0
    %2260 = vmatpush1.msra.mxu0 0.0
    %2261 = vmatprep.subr.mxu0 0.0
    %2262 = vmatpush1.msra.mxu0 0.0
    %2263 = vmatprep.subr.mxu0 0.0
    %2264 = vmatpush1.msra.mxu0 0.0
    %2265 = vmatprep.subr.mxu0 0.0
    %2266 = vmatpush1.msra.mxu0 0.0
    %2267 = vmatprep.subr.mxu0 0.0
    %2268 = vmatpush1.msra.mxu0 0.0
    %2269 = vmatprep.subr.mxu0 0.0
    %2270 = vmatpush1.msra.mxu0 0.0
    %2271 = vmatprep.subr.mxu0 0.0
    %2272 = vmatpush1.msra.mxu0 0.0
    %2273 = vmatprep.subr.mxu0 0.0
    %2274 = vmatpush1.msra.mxu0 0.0
    %2275 = vmatprep.subr.mxu0 0.0
    %2276 = vmatpush1.msra.mxu0 0.0
    %2277 = vmatprep.subr.mxu0 0.0
    %2278 = vmatpush1.msra.mxu0 0.0
    %2279 = vmatprep.subr.mxu0 0.0
    %2280 = vmatpush1.msra.mxu0 0.0
    %2281 = vmatprep.subr.mxu0 0.0
    %2282 = vmatpush1.msra.mxu0 0.0
    %2283 = vmatprep.subr.mxu0 0.0
    %2284 = vmatpush1.msra.mxu0 0.0
    %2285 = vmatprep.subr.mxu0 0.0
    %2286 = vmatpush1.msra.mxu0 0.0
    %2287 = vmatprep.subr.mxu0 0.0
    %2288 = vmatpush1.msra.mxu0 0.0
    %2289 = vmatprep.subr.mxu0 0.0
    %2290 = vmatpush1.msra.mxu0 0.0
    %2291 = vmatprep.subr.mxu0 0.0
    %2292 = vmatpush1.msra.mxu0 0.0
    %2293 = vmatprep.subr.mxu0 0.0
    %2294 = vmatpush1.msra.mxu0 0.0
    %2295 = vmatprep.subr.mxu0 0.0
    %2296 = vmatpush1.msra.mxu0 0.0
    %2297 = vmatprep.subr.mxu0 0.0
    %2298 = vmatpush1.msra.mxu0 0.0
    %2299 = vmatprep.subr.mxu0 0.0
    %2300 = vmatpush1.msra.mxu0 0.0
    %2301 = vmatprep.subr.mxu0 0.0
    %2302 = vmatpush1.msra.mxu0 0.0
    %2303 = vmatprep.subr.mxu0 0.0
    %2304 = vmatpush1.msra.mxu0 0.0
    %2305 = vmatprep.subr.mxu0 0.0
    %2306 = vmatpush1.msra.mxu0 0.0
    %2307 = vmatprep.subr.mxu0 0.0
    %2308 = vmatpush1.msra.mxu0 0.0
    %2309 = vmatprep.mubr.f32.mxu0 0.0
    %2310 = vmatmul.mubr.f32.gmra.mrb[0].mxu0 %v2243
    %v2311 = vpop.f32.mrb[0].mxu0
    %v2312 = vadd.f32 0.0, %v2311
    %v2313 = vpop.f32.mrb[0].mxu0
    %2314 = vdwg.mxu0
    %v2315 = vadd.f32 %v2219, %v2312
    %v2316 = vtanh.pop %v2315
    %v2317 = vmul.f32 %v2315, 0.5
    %v2318 = vtanh.pop %v2317
    %v2319 = vadd.f32 %v2318, 1.0
    %v2320 = vmul.f32 %v2319, 0.5
    %v2321 = vsel %vm2240, 1, 0
    %vm2322 = vcmp.eq.s32.totalorder %v2321, 1
    %v2323 = vsel %vm2322, %v2316, %v2320
    %v2324 = vmul.f32 %v2323, 0.0
    %2326 = vrot.lane.b32.xlu0 %v2323, 64
    %v2327 = vpop.permute.xlu0 %2326
    %v2329 = vmul.f32 %v2323, %v2327
    %2331 = vrot.lane.b32.xlu0 %v2329, 32
    %v2332 = vpop.permute.xlu0 %2331
    %v2334 = vadd.f32 %v2324, %v2332
    %v2335 = vtanh.pop %v2334
    %2337 = vrot.lane.b32.xlu0 %v2335, 64
    %v2338 = vpop.permute.xlu0 %2337
    %v2340 = vmul.f32 %v2323, %v2338
    %2342 = vrot.lane.b32.xlu0 %v2340, 32
    %v2343 = vpop.permute.xlu0 %2342
    %v2344 = vsel %vm2241, %v2343, 0
    %2346 = vmatprep.subr.mxu0 0.0
    %2347 = vmatpush1.msra.mxu0 %v2232
    %2348 = vmatprep.subr.mxu0 0.0
    %2349 = vmatpush1.msra.mxu0 %v2233
    %2350 = vmatprep.subr.mxu0 0.0
    %2351 = vmatpush1.msra.mxu0 %v2234
    %2352 = vmatprep.subr.mxu0 0.0
    %2353 = vmatpush1.msra.mxu0 %v2235
    %2354 = vmatprep.subr.mxu0 0.0
    %2355 = vmatpush1.msra.mxu0 0.0
    %2356 = vmatprep.subr.mxu0 0.0
    %2357 = vmatpush1.msra.mxu0 0.0
    %2358 = vmatprep.subr.mxu0 0.0
    %2359 = vmatpush1.msra.mxu0 0.0
    %2360 = vmatprep.subr.mxu0 0.0
    %2361 = vmatpush1.msra.mxu0 0.0
    %2362 = vmatprep.subr.mxu0 0.0
    %2363 = vmatpush1.msra.mxu0 0.0
    %2364 = vmatprep.subr.mxu0 0.0
    %2365 = vmatpush1.msra.mxu0 0.0
    %2366 = vmatprep.subr.mxu0 0.0
    %2367 = vmatpush1.msra.mxu0 0.0
    %2368 = vmatprep.subr.mxu0 0.0
    %2369 = vmatpush1.msra.mxu0 0.0
    %2370 = vmatprep.subr.mxu0 0.0
    %2371 = vmatpush1.msra.mxu0 0.0
    %2372 = vmatprep.subr.mxu0 0.0
    %2373 = vmatpush1.msra.mxu0 0.0
    %2374 = vmatprep.subr.mxu0 0.0
    %2375 = vmatpush1.msra.mxu0 0.0
    %2376 = vmatprep.subr.mxu0 0.0
    %2377 = vmatpush1.msra.mxu0 0.0
    %2378 = vmatprep.subr.mxu0 0.0
    %2379 = vmatpush1.msra.mxu0 0.0
    %2380 = vmatprep.subr.mxu0 0.0
    %2381 = vmatpush1.msra.mxu0 0.0
    %2382 = vmatprep.subr.mxu0 0.0
    %2383 = vmatpush1.msra.mxu0 0.0
    %2384 = vmatprep.subr.mxu0 0.0
    %2385 = vmatpush1.msra.mxu0 0.0
    %2386 = vmatprep.subr.mxu0 0.0
    %2387 = vmatpush1.msra.mxu0 0.0
    %2388 = vmatprep.subr.mxu0 0.0
    %2389 = vmatpush1.msra.mxu0 0.0
    %2390 = vmatprep.subr.mxu0 0.0
    %2391 = vmatpush1.msra.mxu0 0.0
    %2392 = vmatprep.subr.mxu0 0.0
    %2393 = vmatpush1.msra.mxu0 0.0
    %2394 = vmatprep.subr.mxu0 0.0
    %2395 = vmatpush1.msra.mxu0 0.0
    %2396 = vmatprep.subr.mxu0 0.0
    %2397 = vmatpush1.msra.mxu0 0.0
    %2398 = vmatprep.subr.mxu0 0.0
    %2399 = vmatpush1.msra.mxu0 0.0
    %2400 = vmatprep.subr.mxu0 0.0
    %2401 = vmatpush1.msra.mxu0 0.0
    %2402 = vmatprep.subr.mxu0 0.0
    %2403 = vmatpush1.msra.mxu0 0.0
    %2404 = vmatprep.subr.mxu0 0.0
    %2405 = vmatpush1.msra.mxu0 0.0
    %2406 = vmatprep.subr.mxu0 0.0
    %2407 = vmatpush1.msra.mxu0 0.0
    %2408 = vmatprep.subr.mxu0 0.0
    %2409 = vmatpush1.msra.mxu0 0.0
    %2410 = vmatprep.mubr.f32.mxu0 0.0
    %2411 = vmatmul.mubr.f32.gmra.mrb[0].mxu0 %v2344
    %v2412 = vpop.f32.mrb[0].mxu0
    %v2413 = vadd.f32 0.0, %v2412
    %v2414 = vpop.f32.mrb[0].mxu0
    %2415 = vdwg.mxu0
    %v2417 = vrot.slane %v2413, 6
    %v2419 = vadd.f32 %v2219, %v2417
    %v2420 = vtanh.pop %v2419
    %v2421 = vmul.f32 %v2419, 0.5
    %v2422 = vtanh.pop %v2421
    %v2423 = vadd.f32 %v2422, 1.0
    %v2424 = vmul.f32 %v2423, 0.5
    %v2425 = vsel %vm2322, %v2420, %v2424
    %v2427 = vrot.slane %v2334, 6
    %v2429 = vmul.f32 %v2425, %v2427
    %2431 = vrot.lane.b32.xlu0 %v2425, 64
    %v2432 = vpop.permute.xlu0 %2431
    %v2434 = vmul.f32 %v2425, %v2432
    %2436 = vrot.lane.b32.xlu0 %v2434, 32
    %v2437 = vpop.permute.xlu0 %2436
    %v2439 = vadd.f32 %v2429, %v2437
    %v2440 = vtanh.pop %v2439
    %2442 = vrot.lane.b32.xlu0 %v2440, 64
    %v2443 = vpop.permute.xlu0 %2442
    %v2445 = vmul.f32 %v2425, %v2443
    %v2447 = vrot.slane %v2445, 2
    %2448 = vrot.lane.b32.xlu0 %v2447, 32
    %v2449 = vpop.permute.xlu0 %2448
    %v2450 = vsel %vm2241, %v2449, 0
    %2452 = vmatprep.subr.mxu0 0.0
    %2453 = vmatpush1.msra.mxu0 %v2232
    %2454 = vmatprep.subr.mxu0 0.0
    %2455 = vmatpush1.msra.mxu0 %v2233
    %2456 = vmatprep.subr.mxu0 0.0
    %2457 = vmatpush1.msra.mxu0 %v2234
    %2458 = vmatprep.subr.mxu0 0.0
    %2459 = vmatpush1.msra.mxu0 %v2235
    %2460 = vmatprep.subr.mxu0 0.0
    %2461 = vmatpush1.msra.mxu0 0.0
    %2462 = vmatprep.subr.mxu0 0.0
    %2463 = vmatpush1.msra.mxu0 0.0
    %2464 = vmatprep.subr.mxu0 0.0
    %2465 = vmatpush1.msra.mxu0 0.0
    %2466 = vmatprep.subr.mxu0 0.0
    %2467 = vmatpush1.msra.mxu0 0.0
    %2468 = vmatprep.subr.mxu0 0.0
    %2469 = vmatpush1.msra.mxu0 0.0
    %2470 = vmatprep.subr.mxu0 0.0
    %2471 = vmatpush1.msra.mxu0 0.0
    %2472 = vmatprep.subr.mxu0 0.0
    %2473 = vmatpush1.msra.mxu0 0.0
    %2474 = vmatprep.subr.mxu0 0.0
    %2475 = vmatpush1.msra.mxu0 0.0
    %2476 = vmatprep.subr.mxu0 0.0
    %2477 = vmatpush1.msra.mxu0 0.0
    %2478 = vmatprep.subr.mxu0 0.0
    %2479 = vmatpush1.msra.mxu0 0.0
    %2480 = vmatprep.subr.mxu0 0.0
    %2481 = vmatpush1.msra.mxu0 0.0
    %2482 = vmatprep.subr.mxu0 0.0
    %2483 = vmatpush1.msra.mxu0 0.0
    %2484 = vmatprep.subr.mxu0 0.0
    %2485 = vmatpush1.msra.mxu0 0.0
    %2486 = vmatprep.subr.mxu0 0.0
    %2487 = vmatpush1.msra.mxu0 0.0
    %2488 = vmatprep.subr.mxu0 0.0
    %2489 = vmatpush1.msra.mxu0 0.0
    %2490 = vmatprep.subr.mxu0 0.0
    %2491 = vmatpush1.msra.mxu0 0.0
    %2492 = vmatprep.subr.mxu0 0.0
    %2493 = vmatpush1.msra.mxu0 0.0
    %2494 = vmatprep.subr.mxu0 0.0
    %2495 = vmatpush1.msra.mxu0 0.0
    %2496 = vmatprep.subr.mxu0 0.0
    %2497 = vmatpush1.msra.mxu0 0.0
    %2498 = vmatprep.subr.mxu0 0.0
    %2499 = vmatpush1.msra.mxu0 0.0
    %2500 = vmatprep.subr.mxu0 0.0
    %2501 = vmatpush1.msra.mxu0 0.0
    %2502 = vmatprep.subr.mxu0 0.0
    %2503 = vmatpush1.msra.mxu0 0.0
    %2504 = vmatprep.subr.mxu0 0.0
    %2505 = vmatpush1.msra.mxu0 0.0
    %2506 = vmatprep.subr.mxu0 0.0
    %2507 = vmatpush1.msra.mxu0 0.0
    %2508 = vmatprep.subr.mxu0 0.0
    %2509 = vmatpush1.msra.mxu0 0.0
    %2510 = vmatprep.subr.mxu0 0.0
    %2511 = vmatpush1.msra.mxu0 0.0
    %2512 = vmatprep.subr.mxu0 0.0
    %2513 = vmatpush1.msra.mxu0 0.0
    %2514 = vmatprep.subr.mxu0 0.0
    %2515 = vmatpush1.msra.mxu0 0.0
    %2516 = vmatprep.mubr.f32.mxu0 0.0
    %2517 = vmatmul.mubr.f32.gmra.mrb[0].mxu0 %v2450
    %v2518 = vpop.f32.mrb[0].mxu0
    %v2519 = vadd.f32 0.0, %v2518
    %v2520 = vpop.f32.mrb[0].mxu0
    %2521 = vdwg.mxu0
    %v2523 = vrot.slane %v2519, 4
    %v2525 = vadd.f32 %v2219, %v2523
    %v2526 = vtanh.pop %v2525
    %v2527 = vmul.f32 %v2525, 0.5
    %v2528 = vtanh.pop %v2527
    %v2529 = vadd.f32 %v2528, 1.0
    %v2530 = vmul.f32 %v2529, 0.5
    %v2531 = vsel %vm2322, %v2526, %v2530
    %v2533 = vrot.slane %v2439, 6
    %v2535 = vmul.f32 %v2531, %v2533
    %2537 = vrot.lane.b32.xlu0 %v2531, 64
    %v2538 = vpop.permute.xlu0 %2537
    %v2540 = vmul.f32 %v2531, %v2538
    %2542 = vrot.lane.b32.xlu0 %v2540, 32
    %v2543 = vpop.permute.xlu0 %2542
    %v2545 = vadd.f32 %v2535, %v2543
    %v2546 = vtanh.pop %v2545
    %2548 = vrot.lane.b32.xlu0 %v2546, 64
    %v2549 = vpop.permute.xlu0 %2548
    %v2551 = vmul.f32 %v2531, %v2549
    %v2553 = vrot.slane %v2551, 4
    %2554 = vrot.lane.b32.xlu0 %v2553, 32
    %v2555 = vpop.permute.xlu0 %2554
    %v2556 = vsel %vm2241, %v2555, 0
    %2558 = vmatprep.subr.mxu0 0.0
    %2559 = vmatpush1.msra.mxu0 %v2232
    %2560 = vmatprep.subr.mxu0 0.0
    %2561 = vmatpush1.msra.mxu0 %v2233
    %2562 = vmatprep.subr.mxu0 0.0
    %2563 = vmatpush1.msra.mxu0 %v2234
    %2564 = vmatprep.subr.mxu0 0.0
    %2565 = vmatpush1.msra.mxu0 %v2235
    %2566 = vmatprep.subr.mxu0 0.0
    %2567 = vmatpush1.msra.mxu0 0.0
    %2568 = vmatprep.subr.mxu0 0.0
    %2569 = vmatpush1.msra.mxu0 0.0
    %2570 = vmatprep.subr.mxu0 0.0
    %2571 = vmatpush1.msra.mxu0 0.0
    %2572 = vmatprep.subr.mxu0 0.0
    %2573 = vmatpush1.msra.mxu0 0.0
    %2574 = vmatprep.subr.mxu0 0.0
    %2575 = vmatpush1.msra.mxu0 0.0
    %2576 = vmatprep.subr.mxu0 0.0
    %2577 = vmatpush1.msra.mxu0 0.0
    %2578 = vmatprep.subr.mxu0 0.0
    %2579 = vmatpush1.msra.mxu0 0.0
    %2580 = vmatprep.subr.mxu0 0.0
    %2581 = vmatpush1.msra.mxu0 0.0
    %2582 = vmatprep.subr.mxu0 0.0
    %2583 = vmatpush1.msra.mxu0 0.0
    %2584 = vmatprep.subr.mxu0 0.0
    %2585 = vmatpush1.msra.mxu0 0.0
    %2586 = vmatprep.subr.mxu0 0.0
    %2587 = vmatpush1.msra.mxu0 0.0
    %2588 = vmatprep.subr.mxu0 0.0
    %2589 = vmatpush1.msra.mxu0 0.0
    %2590 = vmatprep.subr.mxu0 0.0
    %2591 = vmatpush1.msra.mxu0 0.0
    %2592 = vmatprep.subr.mxu0 0.0
    %2593 = vmatpush1.msra.mxu0 0.0
    %2594 = vmatprep.subr.mxu0 0.0
    %2595 = vmatpush1.msra.mxu0 0.0
    %2596 = vmatprep.subr.mxu0 0.0
    %2597 = vmatpush1.msra.mxu0 0.0
    %2598 = vmatprep.subr.mxu0 0.0
    %2599 = vmatpush1.msra.mxu0 0.0
    %2600 = vmatprep.subr.mxu0 0.0
    %2601 = vmatpush1.msra.mxu0 0.0
    %2602 = vmatprep.subr.mxu0 0.0
    %2603 = vmatpush1.msra.mxu0 0.0
    %2604 = vmatprep.subr.mxu0 0.0
    %2605 = vmatpush1.msra.mxu0 0.0
    %2606 = vmatprep.subr.mxu0 0.0
    %2607 = vmatpush1.msra.mxu0 0.0
    %2608 = vmatprep.subr.mxu0 0.0
    %2609 = vmatpush1.msra.mxu0 0.0
    %2610 = vmatprep.subr.mxu0 0.0
    %2611 = vmatpush1.msra.mxu0 0.0
    %2612 = vmatprep.subr.mxu0 0.0
    %2613 = vmatpush1.msra.mxu0 0.0
    %2614 = vmatprep.subr.mxu0 0.0
    %2615 = vmatpush1.msra.mxu0 0.0
    %2616 = vmatprep.subr.mxu0 0.0
    %2617 = vmatpush1.msra.mxu0 0.0
    %2618 = vmatprep.subr.mxu0 0.0
    %2619 = vmatpush1.msra.mxu0 0.0
    %2620 = vmatprep.subr.mxu0 0.0
    %2621 = vmatpush1.msra.mxu0 0.0
    %2622 = vmatprep.mubr.f32.mxu0 0.0
    %2623 = vmatmul.mubr.f32.gmra.mrb[0].mxu0 %v2556
    %v2624 = vpop.f32.mrb[0].mxu0
    %v2625 = vadd.f32 0.0, %v2624
    %v2626 = vpop.f32.mrb[0].mxu0
    %2627 = vdwg.mxu0
    %v2629 = vrot.slane %v2625, 2
    %v2631 = vadd.f32 %v2219, %v2629
    %v2632 = vtanh.pop %v2631
    %v2633 = vmul.f32 %v2631, 0.5
    %v2634 = vtanh.pop %v2633
    %v2635 = vadd.f32 %v2634, 1.0
    %v2636 = vmul.f32 %v2635, 0.5
    %v2637 = vsel %vm2322, %v2632, %v2636
    %v2639 = vrot.slane %v2545, 6
    %v2641 = vmul.f32 %v2637, %v2639
    %2643 = vrot.lane.b32.xlu0 %v2637, 64
    %v2644 = vpop.permute.xlu0 %2643
    %v2646 = vmul.f32 %v2637, %v2644
    %2648 = vrot.lane.b32.xlu0 %v2646, 32
    %v2649 = vpop.permute.xlu0 %2648
    %v2651 = vadd.f32 %v2641, %v2649
    %v2652 = vtanh.pop %v2651
    %2654 = vrot.lane.b32.xlu0 %v2652, 64
    %v2655 = vpop.permute.xlu0 %2654
    %v2657 = vmul.f32 %v2637, %v2655
    %v2659 = vrot.slane %v2657, 6
    %2660 = vrot.lane.b32.xlu0 %v2659, 32
    %v2661 = vpop.permute.xlu0 %2660
    %v2662 = vsel %vm2241, %v2661, 0
    %2664 = vmatprep.subr.mxu0 0.0
    %2665 = vmatpush1.msra.mxu0 %v2232
    %2666 = vmatprep.subr.mxu0 0.0
    %2667 = vmatpush1.msra.mxu0 %v2233
    %2668 = vmatprep.subr.mxu0 0.0
    %2669 = vmatpush1.msra.mxu0 %v2234
    %2670 = vmatprep.subr.mxu0 0.0
    %2671 = vmatpush1.msra.mxu0 %v2235
    %2672 = vmatprep.subr.mxu0 0.0
    %2673 = vmatpush1.msra.mxu0 0.0
    %2674 = vmatprep.subr.mxu0 0.0
    %2675 = vmatpush1.msra.mxu0 0.0
    %2676 = vmatprep.subr.mxu0 0.0
    %2677 = vmatpush1.msra.mxu0 0.0
    %2678 = vmatprep.subr.mxu0 0.0
    %2679 = vmatpush1.msra.mxu0 0.0
    %2680 = vmatprep.subr.mxu0 0.0
    %2681 = vmatpush1.msra.mxu0 0.0
    %2682 = vmatprep.subr.mxu0 0.0
    %2683 = vmatpush1.msra.mxu0 0.0
    %2684 = vmatprep.subr.mxu0 0.0
    %2685 = vmatpush1.msra.mxu0 0.0
    %2686 = vmatprep.subr.mxu0 0.0
    %2687 = vmatpush1.msra.mxu0 0.0
    %2688 = vmatprep.subr.mxu0 0.0
    %2689 = vmatpush1.msra.mxu0 0.0
    %2690 = vmatprep.subr.mxu0 0.0
    %2691 = vmatpush1.msra.mxu0 0.0
    %2692 = vmatprep.subr.mxu0 0.0
    %2693 = vmatpush1.msra.mxu0 0.0
    %2694 = vmatprep.subr.mxu0 0.0
    %2695 = vmatpush1.msra.mxu0 0.0
    %2696 = vmatprep.subr.mxu0 0.0
    %2697 = vmatpush1.msra.mxu0 0.0
    %2698 = vmatprep.subr.mxu0 0.0
    %2699 = vmatpush1.msra.mxu0 0.0
    %2700 = vmatprep.subr.mxu0 0.0
    %2701 = vmatpush1.msra.mxu0 0.0
    %2702 = vmatprep.subr.mxu0 0.0
    %2703 = vmatpush1.msra.mxu0 0.0
    %2704 = vmatprep.subr.mxu0 0.0
    %2705 = vmatpush1.msra.mxu0 0.0
    %2706 = vmatprep.subr.mxu0 0.0
    %2707 = vmatpush1.msra.mxu0 0.0
    %2708 = vmatprep.subr.mxu0 0.0
    %2709 = vmatpush1.msra.mxu0 0.0
    %2710 = vmatprep.subr.mxu0 0.0
    %2711 = vmatpush1.msra.mxu0 0.0
    %2712 = vmatprep.subr.mxu0 0.0
    %2713 = vmatpush1.msra.mxu0 0.0
    %2714 = vmatprep.subr.mxu0 0.0
    %2715 = vmatpush1.msra.mxu0 0.0
    %2716 = vmatprep.subr.mxu0 0.0
    %2717 = vmatpush1.msra.mxu0 0.0
    %2718 = vmatprep.subr.mxu0 0.0
    %2719 = vmatpush1.msra.mxu0 0.0
    %2720 = vmatprep.subr.mxu0 0.0
    %2721 = vmatpush1.msra.mxu0 0.0
    %2722 = vmatprep.subr.mxu0 0.0
    %2723 = vmatpush1.msra.mxu0 0.0
    %2724 = vmatprep.subr.mxu0 0.0
    %2725 = vmatpush1.msra.mxu0 0.0
    %2726 = vmatprep.subr.mxu0 0.0
    %2727 = vmatpush1.msra.mxu0 0.0
    %2728 = vmatprep.mubr.f32.mxu0 0.0
    %2729 = vmatmul.mubr.f32.gmra.mrb[0].mxu0 %v2662
    %v2730 = vpop.f32.mrb[0].mxu0
    %v2731 = vadd.f32 0.0, %v2730
    %v2732 = vpop.f32.mrb[0].mxu0
    %2733 = vdwg.mxu0
    %v2734 = vadd.f32 %v2224, %v2731
    %v2735 = vtanh.pop %v2734
    %v2736 = vmul.f32 %v2734, 0.5
    %v2737 = vtanh.pop %v2736
    %v2738 = vadd.f32 %v2737, 1.0
    %v2739 = vmul.f32 %v2738, 0.5
    %v2740 = vsel %vm2322, %v2735, %v2739
    %v2742 = vrot.slane %v2651, 6
    %v2744 = vmul.f32 %v2740, %v2742
    %2746 = vrot.lane.b32.xlu0 %v2740, 64
    %v2747 = vpop.permute.xlu0 %2746
    %v2749 = vmul.f32 %v2740, %v2747
    %2751 = vrot.lane.b32.xlu0 %v2749, 32
    %v2752 = vpop.permute.xlu0 %2751
    %v2754 = vadd.f32 %v2744, %v2752
    %v2755 = vtanh.pop %v2754
    %2757 = vrot.lane.b32.xlu0 %v2755, 64
    %v2758 = vpop.permute.xlu0 %2757
    %v2760 = vmul.f32 %v2740, %v2758
    %2762 = vrot.lane.b32.xlu0 %v2760, 32
    %v2763 = vpop.permute.xlu0 %2762
    %v2764 = vsel %vm2241, %v2763, 0
    %2766 = vmatprep.subr.mxu0 0.0
    %2767 = vmatpush1.msra.mxu0 %v2232
    %2768 = vmatprep.subr.mxu0 0.0
    %2769 = vmatpush1.msra.mxu0 %v2233
    %2770 = vmatprep.subr.mxu0 0.0
    %2771 = vmatpush1.msra.mxu0 %v2234
    %2772 = vmatprep.subr.mxu0 0.0
    %2773 = vmatpush1.msra.mxu0 %v2235
    %2774 = vmatprep.subr.mxu0 0.0
    %2775 = vmatpush1.msra.mxu0 0.0
    %2776 = vmatprep.subr.mxu0 0.0
    %2777 = vmatpush1.msra.mxu0 0.0
    %2778 = vmatprep.subr.mxu0 0.0
    %2779 = vmatpush1.msra.mxu0 0.0
    %2780 = vmatprep.subr.mxu0 0.0
    %2781 = vmatpush1.msra.mxu0 0.0
    %2782 = vmatprep.subr.mxu0 0.0
    %2783 = vmatpush1.msra.mxu0 0.0
    %2784 = vmatprep.subr.mxu0 0.0
    %2785 = vmatpush1.msra.mxu0 0.0
    %2786 = vmatprep.subr.mxu0 0.0
    %2787 = vmatpush1.msra.mxu0 0.0
    %2788 = vmatprep.subr.mxu0 0.0
    %2789 = vmatpush1.msra.mxu0 0.0
    %2790 = vmatprep.subr.mxu0 0.0
    %2791 = vmatpush1.msra.mxu0 0.0
    %2792 = vmatprep.subr.mxu0 0.0
    %2793 = vmatpush1.msra.mxu0 0.0
    %2794 = vmatprep.subr.mxu0 0.0
    %2795 = vmatpush1.msra.mxu0 0.0
    %2796 = vmatprep.subr.mxu0 0.0
    %2797 = vmatpush1.msra.mxu0 0.0
    %2798 = vmatprep.subr.mxu0 0.0
    %2799 = vmatpush1.msra.mxu0 0.0
    %2800 = vmatprep.subr.mxu0 0.0
    %2801 = vmatpush1.msra.mxu0 0.0
    %2802 = vmatprep.subr.mxu0 0.0
    %2803 = vmatpush1.msra.mxu0 0.0
    %2804 = vmatprep.subr.mxu0 0.0
    %2805 = vmatpush1.msra.mxu0 0.0
    %2806 = vmatprep.subr.mxu0 0.0
    %2807 = vmatpush1.msra.mxu0 0.0
    %2808 = vmatprep.subr.mxu0 0.0
    %2809 = vmatpush1.msra.mxu0 0.0
    %2810 = vmatprep.subr.mxu0 0.0
    %2811 = vmatpush1.msra.mxu0 0.0
    %2812 = vmatprep.subr.mxu0 0.0
    %2813 = vmatpush1.msra.mxu0 0.0
    %2814 = vmatprep.subr.mxu0 0.0
    %2815 = vmatpush1.msra.mxu0 0.0
    %2816 = vmatprep.subr.mxu0 0.0
    %2817 = vmatpush1.msra.mxu0 0.0
    %2818 = vmatprep.subr.mxu0 0.0
    %2819 = vmatpush1.msra.mxu0 0.0
    %2820 = vmatprep.subr.mxu0 0.0
    %2821 = vmatpush1.msra.mxu0 0.0
    %2822 = vmatprep.subr.mxu0 0.0
    %2823 = vmatpush1.msra.mxu0 0.0
    %2824 = vmatprep.subr.mxu0 0.0
    %2825 = vmatpush1.msra.mxu0 0.0
    %2826 = vmatprep.subr.mxu0 0.0
    %2827 = vmatpush1.msra.mxu0 0.0
    %2828 = vmatprep.subr.mxu0 0.0
    %2829 = vmatpush1.msra.mxu0 0.0
    %2830 = vmatprep.mubr.f32.mxu0 0.0
    %2831 = vmatmul.mubr.f32.gmra.mrb[0].mxu0 %v2764
    %v2832 = vpop.f32.mrb[0].mxu0
    %v2833 = vadd.f32 0.0, %v2832
    %v2834 = vpop.f32.mrb[0].mxu0
    %2835 = vdwg.mxu0
    %v2837 = vrot.slane %v2833, 6
    %v2839 = vadd.f32 %v2224, %v2837
    %v2840 = vtanh.pop %v2839
    %v2841 = vmul.f32 %v2839, 0.5
    %v2842 = vtanh.pop %v2841
    %v2843 = vadd.f32 %v2842, 1.0
    %v2844 = vmul.f32 %v2843, 0.5
    %v2845 = vsel %vm2322, %v2840, %v2844
    %v2847 = vrot.slane %v2754, 6
    %v2849 = vmul.f32 %v2845, %v2847
    %2851 = vrot.lane.b32.xlu0 %v2845, 64
    %v2852 = vpop.permute.xlu0 %2851
    %v2854 = vmul.f32 %v2845, %v2852
    %2856 = vrot.lane.b32.xlu0 %v2854, 32
    %v2857 = vpop.permute.xlu0 %2856
    %v2859 = vadd.f32 %v2849, %v2857
    %v2860 = vtanh.pop %v2859
    %2862 = vrot.lane.b32.xlu0 %v2860, 64
    %v2863 = vpop.permute.xlu0 %2862
    %v2865 = vmul.f32 %v2845, %v2863
    %v2867 = vrot.slane %v2865, 2
    %2868 = vrot.lane.b32.xlu0 %v2867, 32
    %v2869 = vpop.permute.xlu0 %2868
    %v2870 = vsel %vm2241, %v2869, 0
    %2872 = vmatprep.subr.mxu0 0.0
    %2873 = vmatpush1.msra.mxu0 %v2232
    %2874 = vmatprep.subr.mxu0 0.0
    %2875 = vmatpush1.msra.mxu0 %v2233
    %2876 = vmatprep.subr.mxu0 0.0
    %2877 = vmatpush1.msra.mxu0 %v2234
    %2878 = vmatprep.subr.mxu0 0.0
    %2879 = vmatpush1.msra.mxu0 %v2235
    %2880 = vmatprep.subr.mxu0 0.0
    %2881 = vmatpush1.msra.mxu0 0.0
    %2882 = vmatprep.subr.mxu0 0.0
    %2883 = vmatpush1.msra.mxu0 0.0
    %2884 = vmatprep.subr.mxu0 0.0
    %2885 = vmatpush1.msra.mxu0 0.0
    %2886 = vmatprep.subr.mxu0 0.0
    %2887 = vmatpush1.msra.mxu0 0.0
    %2888 = vmatprep.subr.mxu0 0.0
    %2889 = vmatpush1.msra.mxu0 0.0
    %2890 = vmatprep.subr.mxu0 0.0
    %2891 = vmatpush1.msra.mxu0 0.0
    %2892 = vmatprep.subr.mxu0 0.0
    %2893 = vmatpush1.msra.mxu0 0.0
    %2894 = vmatprep.subr.mxu0 0.0
    %2895 = vmatpush1.msra.mxu0 0.0
    %2896 = vmatprep.subr.mxu0 0.0
    %2897 = vmatpush1.msra.mxu0 0.0
    %2898 = vmatprep.subr.mxu0 0.0
    %2899 = vmatpush1.msra.mxu0 0.0
    %2900 = vmatprep.subr.mxu0 0.0
    %2901 = vmatpush1.msra.mxu0 0.0
    %2902 = vmatprep.subr.mxu0 0.0
    %2903 = vmatpush1.msra.mxu0 0.0
    %2904 = vmatprep.subr.mxu0 0.0
    %2905 = vmatpush1.msra.mxu0 0.0
    %2906 = vmatprep.subr.mxu0 0.0
    %2907 = vmatpush1.msra.mxu0 0.0
    %2908 = vmatprep.subr.mxu0 0.0
    %2909 = vmatpush1.msra.mxu0 0.0
    %2910 = vmatprep.subr.mxu0 0.0
    %2911 = vmatpush1.msra.mxu0 0.0
    %2912 = vmatprep.subr.mxu0 0.0
    %2913 = vmatpush1.msra.mxu0 0.0
    %2914 = vmatprep.subr.mxu0 0.0
    %2915 = vmatpush1.msra.mxu0 0.0
    %2916 = vmatprep.subr.mxu0 0.0
    %2917 = vmatpush1.msra.mxu0 0.0
    %2918 = vmatprep.subr.mxu0 0.0
    %2919 = vmatpush1.msra.mxu0 0.0
    %2920 = vmatprep.subr.mxu0 0.0
    %2921 = vmatpush1.msra.mxu0 0.0
    %2922 = vmatprep.subr.mxu0 0.0
    %2923 = vmatpush1.msra.mxu0 0.0
    %2924 = vmatprep.subr.mxu0 0.0
    %2925 = vmatpush1.msra.mxu0 0.0
    %2926 = vmatprep.subr.mxu0 0.0
    %2927 = vmatpush1.msra.mxu0 0.0
    %2928 = vmatprep.subr.mxu0 0.0
    %2929 = vmatpush1.msra.mxu0 0.0
    %2930 = vmatprep.subr.mxu0 0.0
    %2931 = vmatpush1.msra.mxu0 0.0
    %2932 = vmatprep.subr.mxu0 0.0
    %2933 = vmatpush1.msra.mxu0 0.0
    %2934 = vmatprep.subr.mxu0 0.0
    %2935 = vmatpush1.msra.mxu0 0.0
    %2936 = vmatprep.mubr.f32.mxu0 0.0
    %2937 = vmatmul.mubr.f32.gmra.mrb[0].mxu0 %v2870
    %v2938 = vpop.f32.mrb[0].mxu0
    %v2939 = vadd.f32 0.0, %v2938
    %v2940 = vpop.f32.mrb[0].mxu0
    %2941 = vdwg.mxu0
    %v2943 = vrot.slane %v2939, 4
    %v2945 = vadd.f32 %v2224, %v2943
    %v2946 = vtanh.pop %v2945
    %v2947 = vmul.f32 %v2945, 0.5
    %v2948 = vtanh.pop %v2947
    %v2949 = vadd.f32 %v2948, 1.0
    %v2950 = vmul.f32 %v2949, 0.5
    %v2951 = vsel %vm2322, %v2946, %v2950
    %v2953 = vrot.slane %v2859, 6
    %v2955 = vmul.f32 %v2951, %v2953
    %2957 = vrot.lane.b32.xlu0 %v2951, 64
    %v2958 = vpop.permute.xlu0 %2957
    %v2960 = vmul.f32 %v2951, %v2958
    %2962 = vrot.lane.b32.xlu0 %v2960, 32
    %v2963 = vpop.permute.xlu0 %2962
    %v2965 = vadd.f32 %v2955, %v2963
    %v2966 = vtanh.pop %v2965
    %2968 = vrot.lane.b32.xlu0 %v2966, 64
    %v2969 = vpop.permute.xlu0 %2968
    %v2971 = vmul.f32 %v2951, %v2969
    %v2973 = vrot.slane %v2971, 4
    %2974 = vrot.lane.b32.xlu0 %v2973, 32
    %v2975 = vpop.permute.xlu0 %2974
    %v2976 = vsel %vm2241, %v2975, 0
    %2978 = vmatprep.subr.mxu0 0.0
    %2979 = vmatpush1.msra.mxu0 %v2232
    %2980 = vmatprep.subr.mxu0 0.0
    %2981 = vmatpush1.msra.mxu0 %v2233
    %2982 = vmatprep.subr.mxu0 0.0
    %2983 = vmatpush1.msra.mxu0 %v2234
    %2984 = vmatprep.subr.mxu0 0.0
    %2985 = vmatpush1.msra.mxu0 %v2235
    %2986 = vmatprep.subr.mxu0 0.0
    %2987 = vmatpush1.msra.mxu0 0.0
    %2988 = vmatprep.subr.mxu0 0.0
    %2989 = vmatpush1.msra.mxu0 0.0
    %2990 = vmatprep.subr.mxu0 0.0
    %2991 = vmatpush1.msra.mxu0 0.0
    %2992 = vmatprep.subr.mxu0 0.0
    %2993 = vmatpush1.msra.mxu0 0.0
    %2994 = vmatprep.subr.mxu0 0.0
    %2995 = vmatpush1.msra.mxu0 0.0
    %2996 = vmatprep.subr.mxu0 0.0
    %2997 = vmatpush1.msra.mxu0 0.0
    %2998 = vmatprep.subr.mxu0 0.0
    %2999 = vmatpush1.msra.mxu0 0.0
    %3000 = vmatprep.subr.mxu0 0.0
    %3001 = vmatpush1.msra.mxu0 0.0
    %3002 = vmatprep.subr.mxu0 0.0
    %3003 = vmatpush1.msra.mxu0 0.0
    %3004 = vmatprep.subr.mxu0 0.0
    %3005 = vmatpush1.msra.mxu0 0.0
    %3006 = vmatprep.subr.mxu0 0.0
    %3007 = vmatpush1.msra.mxu0 0.0
    %3008 = vmatprep.subr.mxu0 0.0
    %3009 = vmatpush1.msra.mxu0 0.0
    %3010 = vmatprep.subr.mxu0 0.0
    %3011 = vmatpush1.msra.mxu0 0.0
    %3012 = vmatprep.subr.mxu0 0.0
    %3013 = vmatpush1.msra.mxu0 0.0
    %3014 = vmatprep.subr.mxu0 0.0
    %3015 = vmatpush1.msra.mxu0 0.0
    %3016 = vmatprep.subr.mxu0 0.0
    %3017 = vmatpush1.msra.mxu0 0.0
    %3018 = vmatprep.subr.mxu0 0.0
    %3019 = vmatpush1.msra.mxu0 0.0
    %3020 = vmatprep.subr.mxu0 0.0
    %3021 = vmatpush1.msra.mxu0 0.0
    %3022 = vmatprep.subr.mxu0 0.0
    %3023 = vmatpush1.msra.mxu0 0.0
    %3024 = vmatprep.subr.mxu0 0.0
    %3025 = vmatpush1.msra.mxu0 0.0
    %3026 = vmatprep.subr.mxu0 0.0
    %3027 = vmatpush1.msra.mxu0 0.0
    %3028 = vmatprep.subr.mxu0 0.0
    %3029 = vmatpush1.msra.mxu0 0.0
    %3030 = vmatprep.subr.mxu0 0.0
    %3031 = vmatpush1.msra.mxu0 0.0
    %3032 = vmatprep.subr.mxu0 0.0
    %3033 = vmatpush1.msra.mxu0 0.0
    %3034 = vmatprep.subr.mxu0 0.0
    %3035 = vmatpush1.msra.mxu0 0.0
    %3036 = vmatprep.subr.mxu0 0.0
    %3037 = vmatpush1.msra.mxu0 0.0
    %3038 = vmatprep.subr.mxu0 0.0
    %3039 = vmatpush1.msra.mxu0 0.0
    %3040 = vmatprep.subr.mxu0 0.0
    %3041 = vmatpush1.msra.mxu0 0.0
    %3042 = vmatprep.mubr.f32.mxu0 0.0
    %3043 = vmatmul.mubr.f32.gmra.mrb[0].mxu0 %v2976
    %v3044 = vpop.f32.mrb[0].mxu0
    %v3045 = vadd.f32 0.0, %v3044
    %v3046 = vpop.f32.mrb[0].mxu0
    %3047 = vdwg.mxu0
    %v3049 = vrot.slane %v3045, 2
    %v3051 = vadd.f32 %v2224, %v3049
    %v3052 = vtanh.pop %v3051
    %v3053 = vmul.f32 %v3051, 0.5
    %v3054 = vtanh.pop %v3053
    %v3055 = vadd.f32 %v3054, 1.0
    %v3056 = vmul.f32 %v3055, 0.5
    %v3057 = vsel %vm2322, %v3052, %v3056
    %v3059 = vrot.slane %v2965, 6
    %v3061 = vmul.f32 %v3057, %v3059
    %3063 = vrot.lane.b32.xlu0 %v3057, 64
    %v3064 = vpop.permute.xlu0 %3063
    %v3066 = vmul.f32 %v3057, %v3064
    %3068 = vrot.lane.b32.xlu0 %v3066, 32
    %v3069 = vpop.permute.xlu0 %3068
    %v3071 = vadd.f32 %v3061, %v3069
    %v3072 = vtanh.pop %v3071
    %3074 = vrot.lane.b32.xlu0 %v3072, 64
    %v3075 = vpop.permute.xlu0 %3074
    %v3077 = vmul.f32 %v3057, %v3075
    %v3079 = vrot.slane %v3077, 6
    %3080 = vrot.lane.b32.xlu0 %v3079, 32
    %v3081 = vpop.permute.xlu0 %3080
    %v3082 = vsel %vm2241, %v3081, 0
    %3084 = vmatprep.subr.mxu0 0.0
    %3085 = vmatpush1.msra.mxu0 %v2232
    %3086 = vmatprep.subr.mxu0 0.0
    %3087 = vmatpush1.msra.mxu0 %v2233
    %3088 = vmatprep.subr.mxu0 0.0
    %3089 = vmatpush1.msra.mxu0 %v2234
    %3090 = vmatprep.subr.mxu0 0.0
    %3091 = vmatpush1.msra.mxu0 %v2235
    %3092 = vmatprep.subr.mxu0 0.0
    %3093 = vmatpush1.msra.mxu0 0.0
    %3094 = vmatprep.subr.mxu0 0.0
    %3095 = vmatpush1.msra.mxu0 0.0
    %3096 = vmatprep.subr.mxu0 0.0
    %3097 = vmatpush1.msra.mxu0 0.0
    %3098 = vmatprep.subr.mxu0 0.0
    %3099 = vmatpush1.msra.mxu0 0.0
    %3100 = vmatprep.subr.mxu0 0.0
    %3101 = vmatpush1.msra.mxu0 0.0
    %3102 = vmatprep.subr.mxu0 0.0
    %3103 = vmatpush1.msra.mxu0 0.0
    %3104 = vmatprep.subr.mxu0 0.0
    %3105 = vmatpush1.msra.mxu0 0.0
    %3106 = vmatprep.subr.mxu0 0.0
    %3107 = vmatpush1.msra.mxu0 0.0
    %3108 = vmatprep.subr.mxu0 0.0
    %3109 = vmatpush1.msra.mxu0 0.0
    %3110 = vmatprep.subr.mxu0 0.0
    %3111 = vmatpush1.msra.mxu0 0.0
    %3112 = vmatprep.subr.mxu0 0.0
    %3113 = vmatpush1.msra.mxu0 0.0
    %3114 = vmatprep.subr.mxu0 0.0
    %3115 = vmatpush1.msra.mxu0 0.0
    %3116 = vmatprep.subr.mxu0 0.0
    %3117 = vmatpush1.msra.mxu0 0.0
    %3118 = vmatprep.subr.mxu0 0.0
    %3119 = vmatpush1.msra.mxu0 0.0
    %3120 = vmatprep.subr.mxu0 0.0
    %3121 = vmatpush1.msra.mxu0 0.0
    %3122 = vmatprep.subr.mxu0 0.0
    %3123 = vmatpush1.msra.mxu0 0.0
    %3124 = vmatprep.subr.mxu0 0.0
    %3125 = vmatpush1.msra.mxu0 0.0
    %3126 = vmatprep.subr.mxu0 0.0
    %3127 = vmatpush1.msra.mxu0 0.0
    %3128 = vmatprep.subr.mxu0 0.0
    %3129 = vmatpush1.msra.mxu0 0.0
    %3130 = vmatprep.subr.mxu0 0.0
    %3131 = vmatpush1.msra.mxu0 0.0
    %3132 = vmatprep.subr.mxu0 0.0
    %3133 = vmatpush1.msra.mxu0 0.0
    %3134 = vmatprep.subr.mxu0 0.0
    %3135 = vmatpush1.msra.mxu0 0.0
    %3136 = vmatprep.subr.mxu0 0.0
    %3137 = vmatpush1.msra.mxu0 0.0
    %3138 = vmatprep.subr.mxu0 0.0
    %3139 = vmatpush1.msra.mxu0 0.0
    %3140 = vmatprep.subr.mxu0 0.0
    %3141 = vmatpush1.msra.mxu0 0.0
    %3142 = vmatprep.subr.mxu0 0.0
    %3143 = vmatpush1.msra.mxu0 0.0
    %3144 = vmatprep.subr.mxu0 0.0
    %3145 = vmatpush1.msra.mxu0 0.0
    %3146 = vmatprep.subr.mxu0 0.0
    %3147 = vmatpush1.msra.mxu0 0.0
    %3148 = vmatprep.mubr.f32.mxu0 0.0
    %3149 = vmatmul.mubr.f32.gmra.mrb[0].mxu0 %v3082
    %v3150 = vpop.f32.mrb[0].mxu0
    %v3151 = vadd.f32 0.0, %v3150
    %v3152 = vpop.f32.mrb[0].mxu0
    %3153 = vdwg.mxu0
    %v3154 = vadd.f32 %v2229, %v3151
    %v3155 = vtanh.pop %v3154
    %v3156 = vmul.f32 %v3154, 0.5
    %v3157 = vtanh.pop %v3156
    %v3158 = vadd.f32 %v3157, 1.0
    %v3159 = vmul.f32 %v3158, 0.5
    %v3160 = vsel %vm2322, %v3155, %v3159
    %v3162 = vrot.slane %v3071, 6
    %v3164 = vmul.f32 %v3160, %v3162
    %3166 = vrot.lane.b32.xlu0 %v3160, 64
    %v3167 = vpop.permute.xlu0 %3166
    %v3169 = vmul.f32 %v3160, %v3167
    %3171 = vrot.lane.b32.xlu0 %v3169, 32
    %v3172 = vpop.permute.xlu0 %3171
    %v3174 = vadd.f32 %v3164, %v3172
    %v3175 = vtanh.pop %v3174
    %3177 = vrot.lane.b32.xlu0 %v3175, 64
    %v3178 = vpop.permute.xlu0 %3177
    %v3180 = vmul.f32 %v3160, %v3178
    %3182 = vrot.lane.b32.xlu0 %v3180, 32
    %v3183 = vpop.permute.xlu0 %3182
    %v3184 = vsel %vm2241, %v3183, 0
    %3186 = vmatprep.subr.mxu0 0.0
    %3187 = vmatpush1.msra.mxu0 %v2232
    %3188 = vmatprep.subr.mxu0 0.0
    %3189 = vmatpush1.msra.mxu0 %v2233
    %3190 = vmatprep.subr.mxu0 0.0
    %3191 = vmatpush1.msra.mxu0 %v2234
    %3192 = vmatprep.subr.mxu0 0.0
    %3193 = vmatpush1.msra.mxu0 %v2235
    %3194 = vmatprep.subr.mxu0 0.0
    %3195 = vmatpush1.msra.mxu0 0.0
    %3196 = vmatprep.subr.mxu0 0.0
    %3197 = vmatpush1.msra.mxu0 0.0
    %3198 = vmatprep.subr.mxu0 0.0
    %3199 = vmatpush1.msra.mxu0 0.0
    %3200 = vmatprep.subr.mxu0 0.0
    %3201 = vmatpush1.msra.mxu0 0.0
    %3202 = vmatprep.subr.mxu0 0.0
    %3203 = vmatpush1.msra.mxu0 0.0
    %3204 = vmatprep.subr.mxu0 0.0
    %3205 = vmatpush1.msra.mxu0 0.0
    %3206 = vmatprep.subr.mxu0 0.0
    %3207 = vmatpush1.msra.mxu0 0.0
    %3208 = vmatprep.subr.mxu0 0.0
    %3209 = vmatpush1.msra.mxu0 0.0
    %3210 = vmatprep.subr.mxu0 0.0
    %3211 = vmatpush1.msra.mxu0 0.0
    %3212 = vmatprep.subr.mxu0 0.0
    %3213 = vmatpush1.msra.mxu0 0.0
    %3214 = vmatprep.subr.mxu0 0.0
    %3215 = vmatpush1.msra.mxu0 0.0
    %3216 = vmatprep.subr.mxu0 0.0
    %3217 = vmatpush1.msra.mxu0 0.0
    %3218 = vmatprep.subr.mxu0 0.0
    %3219 = vmatpush1.msra.mxu0 0.0
    %3220 = vmatprep.subr.mxu0 0.0
    %3221 = vmatpush1.msra.mxu0 0.0
    %3222 = vmatprep.subr.mxu0 0.0
    %3223 = vmatpush1.msra.mxu0 0.0
    %3224 = vmatprep.subr.mxu0 0.0
    %3225 = vmatpush1.msra.mxu0 0.0
    %3226 = vmatprep.subr.mxu0 0.0
    %3227 = vmatpush1.msra.mxu0 0.0
    %3228 = vmatprep.subr.mxu0 0.0
    %3229 = vmatpush1.msra.mxu0 0.0
    %3230 = vmatprep.subr.mxu0 0.0
    %3231 = vmatpush1.msra.mxu0 0.0
    %3232 = vmatprep.subr.mxu0 0.0
    %3233 = vmatpush1.msra.mxu0 0.0
    %3234 = vmatprep.subr.mxu0 0.0
    %3235 = vmatpush1.msra.mxu0 0.0
    %3236 = vmatprep.subr.mxu0 0.0
    %3237 = vmatpush1.msra.mxu0 0.0
    %3238 = vmatprep.subr.mxu0 0.0
    %3239 = vmatpush1.msra.mxu0 0.0
    %3240 = vmatprep.subr.mxu0 0.0
    %3241 = vmatpush1.msra.mxu0 0.0
    %3242 = vmatprep.subr.mxu0 0.0
    %3243 = vmatpush1.msra.mxu0 0.0
    %3244 = vmatprep.subr.mxu0 0.0
    %3245 = vmatpush1.msra.mxu0 0.0
    %3246 = vmatprep.subr.mxu0 0.0
    %3247 = vmatpush1.msra.mxu0 0.0
    %3248 = vmatprep.subr.mxu0 0.0
    %3249 = vmatpush1.msra.mxu0 0.0
    %3250 = vmatprep.mubr.f32.mxu0 0.0
    %3251 = vmatmul.mubr.f32.gmra.mrb[0].mxu0 %v3184
    %v3252 = vpop.f32.mrb[0].mxu0
    %v3253 = vadd.f32 0.0, %v3252
    %v3254 = vpop.f32.mrb[0].mxu0
    %3255 = vdwg.mxu0
    %v3257 = vrot.slane %v3253, 6
    %v3259 = vadd.f32 %v2229, %v3257
    %v3260 = vtanh.pop %v3259
    %v3261 = vmul.f32 %v3259, 0.5
    %v3262 = vtanh.pop %v3261
    %v3263 = vadd.f32 %v3262, 1.0
    %v3264 = vmul.f32 %v3263, 0.5
    %v3265 = vsel %vm2322, %v3260, %v3264
    %v3267 = vrot.slane %v3174, 6
    %v3269 = vmul.f32 %v3265, %v3267
    %3271 = vrot.lane.b32.xlu0 %v3265, 64
    %v3272 = vpop.permute.xlu0 %3271
    %v3274 = vmul.f32 %v3265, %v3272
    %3276 = vrot.lane.b32.xlu0 %v3274, 32
    %v3277 = vpop.permute.xlu0 %3276
    %v3279 = vadd.f32 %v3269, %v3277
    %v3280 = vtanh.pop %v3279
    %3282 = vrot.lane.b32.xlu0 %v3280, 64
    %v3283 = vpop.permute.xlu0 %3282
    %v3285 = vmul.f32 %v3265, %v3283
    %v3286 = vld [vmem:[%s12] sm:$0xff]
    %v3287 = vld [vmem:[%s12 + $0x8] sm:$0xff]
    %v3288 = vld [vmem:[%s12 + $0x10] sm:$0xff]
    %v3289 = vld [vmem:[%s12 + $0x18] sm:$0xff]
    %v3290 = vld [vmem:[%s13] sm:$0x1]
    %v3292 = vlaneseq
    %v3293 = vshrl.u32 %v3292, 7
    %v3294 = vsub.s32 0, %v3293
    %v3295 = vrot.slane %v3290, %v3294
    %v3298 = vrot.slane %v3285, 2
    %3299 = vrot.lane.b32.xlu0 %v3298, 32
    %v3300 = vpop.permute.xlu0 %3299
    %v3301 = vsel %vm2241, %v3300, 0
    %3303 = vmatprep.subr.mxu0 0.0
    %3304 = vmatpush1.msra.mxu0 %v3286
    %3305 = vmatprep.subr.mxu0 0.0
    %3306 = vmatpush1.msra.mxu0 %v3287
    %3307 = vmatprep.subr.mxu0 0.0
    %3308 = vmatpush1.msra.mxu0 %v3288
    %3309 = vmatprep.subr.mxu0 0.0
    %3310 = vmatpush1.msra.mxu0 %v3289
    %3311 = vmatprep.subr.mxu0 0.0
    %3312 = vmatpush1.msra.mxu0 0.0
    %3313 = vmatprep.subr.mxu0 0.0
    %3314 = vmatpush1.msra.mxu0 0.0
    %3315 = vmatprep.subr.mxu0 0.0
    %3316 = vmatpush1.msra.mxu0 0.0
    %3317 = vmatprep.subr.mxu0 0.0
    %3318 = vmatpush1.msra.mxu0 0.0
    %3319 = vmatprep.subr.mxu0 0.0
    %3320 = vmatpush1.msra.mxu0 0.0
    %3321 = vmatprep.subr.mxu0 0.0
    %3322 = vmatpush1.msra.mxu0 0.0
    %3323 = vmatprep.subr.mxu0 0.0
    %3324 = vmatpush1.msra.mxu0 0.0
    %3325 = vmatprep.subr.mxu0 0.0
    %3326 = vmatpush1.msra.mxu0 0.0
    %3327 = vmatprep.subr.mxu0 0.0
    %3328 = vmatpush1.msra.mxu0 0.0
    %3329 = vmatprep.subr.mxu0 0.0
    %3330 = vmatpush1.msra.mxu0 0.0
    %3331 = vmatprep.subr.mxu0 0.0
    %3332 = vmatpush1.msra.mxu0 0.0
    %3333 = vmatprep.subr.mxu0 0.0
    %3334 = vmatpush1.msra.mxu0 0.0
    %3335 = vmatprep.subr.mxu0 0.0
    %3336 = vmatpush1.msra.mxu0 0.0
    %3337 = vmatprep.subr.mxu0 0.0
    %3338 = vmatpush1.msra.mxu0 0.0
    %3339 = vmatprep.subr.mxu0 0.0
    %3340 = vmatpush1.msra.mxu0 0.0
    %3341 = vmatprep.subr.mxu0 0.0
    %3342 = vmatpush1.msra.mxu0 0.0
    %3343 = vmatprep.subr.mxu0 0.0
    %3344 = vmatpush1.msra.mxu0 0.0
    %3345 = vmatprep.subr.mxu0 0.0
    %3346 = vmatpush1.msra.mxu0 0.0
    %3347 = vmatprep.subr.mxu0 0.0
    %3348 = vmatpush1.msra.mxu0 0.0
    %3349 = vmatprep.subr.mxu0 0.0
    %3350 = vmatpush1.msra.mxu0 0.0
    %3351 = vmatprep.subr.mxu0 0.0
    %3352 = vmatpush1.msra.mxu0 0.0
    %3353 = vmatprep.subr.mxu0 0.0
    %3354 = vmatpush1.msra.mxu0 0.0
    %3355 = vmatprep.subr.mxu0 0.0
    %3356 = vmatpush1.msra.mxu0 0.0
    %3357 = vmatprep.subr.mxu0 0.0
    %3358 = vmatpush1.msra.mxu0 0.0
    %3359 = vmatprep.subr.mxu0 0.0
    %3360 = vmatpush1.msra.mxu0 0.0
    %3361 = vmatprep.subr.mxu0 0.0
    %3362 = vmatpush1.msra.mxu0 0.0
    %3363 = vmatprep.subr.mxu0 0.0
    %3364 = vmatpush1.msra.mxu0 0.0
    %3365 = vmatprep.subr.mxu0 0.0
    %3366 = vmatpush1.msra.mxu0 0.0
    %3367 = vmatprep.mubr.f32.mxu0 0.0
    %3368 = vmatmul.mubr.f32.gmra.mrb[0].mxu0 %v3301
    %v3369 = vpop.f32.mrb[0].mxu0
    %v3370 = vadd.f32 %v3295, %v3369
    %v3371 = vpop.f32.mrb[0].mxu0
    %3372 = vdwg.mxu0
    %vm3373 = vcmask 9216
    %v3374 = vsel %vm3373, %v3370, -inf
    %3375 = vmax.xlane.f32.xlu0 %v3374
    %v3376 = vpop.xlane.xlu0 %3375
    %v3377 = vsub.f32 %v3370, %v3376
    %v3378 = vmul.f32 %v3377, 1.442695
    %v3379 = vpow.pop %v3378
    %v3380 = vsel %vm3373, %v3379, 0.0
    %3381 = vadd.xlane.f32.xlu0 %v3380
    %v3382 = vpop.xlane.xlu0 %3381
    %v3383 = vrcp.pop %v3382
    %v3384 = vmul.f32 %v3379, %v3383
    %3385 = vst.msk [vmem:[#allocation2] sm:$0x3] %vm3373, %v3384
    // Predicated region
    $region58: #{conv_lstm_forward.1} parent=1 // pred_check
      _
    $region59: #{conv_lstm_forward.1} parent=1 // pred_check_branch
      %3387 = sbr.rel (0) target = $region61
    $region60: #{conv_lstm_forward.1} parent=1 // pred_region
      %s3389 = ssub.s32 32, 32
      %3390 = vsyncadd [#allocation3], %s3389
      %s3392 = sshll.u32 [#allocation2], 4
      %s3393 = int_to_ptr.vmem [resolvable:$true] %s3392
      %3395 = dma.vmem_to_hbm [thread:$0]  %s3393, 32, %s14, [#allocation3]
    $region61: #{conv_lstm_forward.1} parent=1 // pred_fallthru
      _
    // Predicated region
    $region62: #{conv_lstm_forward.1} parent=1 // pred_check
      _
    $region63: #{conv_lstm_forward.1} parent=1 // pred_check_branch
      %3397 = sbr.rel (0) target = $region65
    $region64: #{conv_lstm_forward.1} parent=1 // pred_region
      %3398 = dma.done [#allocation3], 32
    $region65: #{conv_lstm_forward.1} parent=1 // pred_fallthru
      _
    %3399 = vsyncpa [#allocation3], 1

</llo_original>
